<compile_context>
chip_gen: v5e
topology: v5e:2x2
jax: 0.10.0
libtpu: 0.0.40
codegen_flags: <defaults>
</compile_context>

<pallas_src>
import jax
import jax.numpy as jnp
from jax.experimental import pallas as pl
from jax.experimental.pallas import tpu as pltpu


# ---------------------------------------------------------------------------
# Fused kernel: conv3x3(pad=1, no bias) + BN affine + tanh + 1x1 conv + bias
#               + log_softmax over the (unpadded) class axis
# ---------------------------------------------------------------------------
def _c1_fused_kernel(body_ref, top_ref, bot_ref, w3_ref, scale_ref, bias_ref,
                     w1_ref, b1_ref, o_ref, xp_ref):
    # body_ref : (1, TH, W, Cin)     bf16  rows [i*TH, i*TH+TH) of image n
    # top_ref  : (1, 1,  W, Cin)     bf16  row i*TH-1 (clamped; zeroed at edge)
    # bot_ref  : (1, 1,  W, Cin)     bf16  row i*TH+TH (clamped; zeroed at edge)
    # w3_ref   : (3*Cin, 3*Chid_p)   bf16  3x3 weights as (dy,ci) x (dx,co)
    # scale_ref: (1, Chid_p) f32     gamma/sqrt(var+eps), 0 in padded channels
    # bias_ref : (1, Chid_p) f32     beta - mean*scale,   0 in padded channels
    # w1_ref   : (Chid_p, K) bf16    1x1 conv weights, 0 rows in padded channels
    # b1_ref   : (1, K) f32          1x1 conv bias
    # o_ref    : (1, TH, W, K) f32   log-probs (unpadded class axis)
    # xp_ref   : (TH+2, W+2, Cin) bf16 scratch: zero-padded input window
    _, TH, W, Cin = body_ref.shape
    K = o_ref.shape[-1]
    Cp = scale_ref.shape[-1]                    # padded hidden channel count
    bf = xp_ref.dtype

    i = pl.program_id(1)
    nrt = pl.num_programs(1)

    # ---- assemble the zero-padded (TH+2, W+2, Cin) bf16 window --------------
    # The zero border columns are rewritten every step (cheap, idempotent):
    # under megacore-parallel grids each core has a private scratch and may
    # never execute grid step (0, 0), so a "write once" guard would be unsafe.
    zero_col = jnp.zeros((TH + 2, 1, Cin), bf)
    xp_ref[:, 0:1, :] = zero_col                            # left border
    xp_ref[:, W + 1:W + 2, :] = zero_col                    # right border
    xp_ref[1:TH + 1, 1:W + 1, :] = body_ref[0]              # body rows

    @pl.when(i == 0)
    def _():
        xp_ref[0:1, 1:W + 1, :] = jnp.zeros((1, W, Cin), bf)

    @pl.when(i > 0)
    def _():
        xp_ref[0:1, 1:W + 1, :] = top_ref[0]

    @pl.when(i == nrt - 1)
    def _():
        xp_ref[TH + 1:TH + 2, 1:W + 1, :] = jnp.zeros((1, W, Cin), bf)

    @pl.when(i < nrt - 1)
    def _():
        xp_ref[TH + 1:TH + 2, 1:W + 1, :] = bot_ref[0]

    # ---- whole 3x3 conv as ONE MXU dot (contraction 3*Cin, output 3*Chid_p) --
    # patch[h, v, dy*Cin + ci] = xp[h + dy, v, ci]
    patch = jnp.concatenate(
        [xp_ref[0:TH, :, :], xp_ref[1:TH + 1, :, :], xp_ref[2:TH + 2, :, :]],
        axis=-1)                                            # (TH, W+2, 3*Cin) bf16
    dot_out = jnp.dot(patch.reshape(TH * (W + 2), 3 * Cin), w3_ref[...],
                      preferred_element_type=jnp.float32)   # (TH*(W+2), 3*Chid_p)
    d3 = dot_out.reshape(TH, W + 2, 3 * Cp)
    # y[h, w, co] = sum_dx d3[h, w + dx, dx*Cp + co]   (dx shift-and-add combine)
    acc = (d3[:, 0:W, 0:Cp]
           + d3[:, 1:W + 1, Cp:2 * Cp]
           + d3[:, 2:W + 2, 2 * Cp:3 * Cp]).reshape(TH * W, Cp)

    # ---- BN affine + tanh (f32 epilogue: VPU/EUP, v5e-safe) ------------------
    h = jnp.tanh(acc * scale_ref[...] + bias_ref[...])      # (TH*W, Chid_p) f32

    # ---- 1x1 conv + bias + log_softmax over the unpadded class axis ---------
    logits = jnp.dot(h.astype(jnp.bfloat16), w1_ref[...],
                     preferred_element_type=jnp.float32) + b1_ref[...]
    z = logits - jnp.max(logits, axis=-1, keepdims=True)
    lse = jnp.log(jnp.sum(jnp.exp(z), axis=-1, keepdims=True))
    o_ref[...] = (z - lse).reshape(1, TH, W, K)


# ---------------------------------------------------------------------------
# Tiling helpers
# ---------------------------------------------------------------------------
def _vmem_limit_bytes():
    # ~3/4 of physical VMEM per generation (~96 MiB v5e/v6e, ~48 MiB v7x).
    try:
        cap = pltpu.get_tpu_info().vmem_capacity_bytes
    except Exception:
        cap = 64 * 1024 * 1024
    return int(cap * 3 // 4)


def _pick_row_tile(N, H, W, Cin, Chid_p, K, budget):
    """Largest row tile TH (divisor of H, multiple of 8 when possible) whose
    per-step working set fits `budget`, preferring grids with >=4 parallel
    units so both v7x TensorCores get work."""
    cands = sorted({t for t in range(8, H + 1, 8) if H % t == 0} or {H},
                   reverse=True)
    fixed = (3 * Cin) * (3 * Chid_p) * 2 + Chid_p * K * 2 + 2 * Chid_p * 4 + K * 4

    def vmem_need(t):
        body = 2 * t * W * Cin * 2               # body block, bf16, double-buffered
        halo = 2 * 2 * W * Cin * 2               # two 1-row halos, double-buffered
        xp = (t + 2) * (W + 2) * Cin * 2         # padded window scratch (bf16)
        patch = t * (W + 2) * 3 * Cin * 2        # dy-concat dot operand (bf16)
        dout = t * (W + 2) * 3 * Chid_p * 4      # conv dot result (f32)
        epi = t * W * (Chid_p * 10 + K * 12)     # acc/h/logits/log-prob temps
        outb = 2 * t * W * K * 4                 # output block, f32, double-buffered
        return fixed + body + halo + xp + patch + dout + epi + outb

    fitting = [t for t in cands if vmem_need(t) <= budget] or [cands[-1]]
    for t in fitting:                            # largest tile with >=4 grid units
        if N * (H // t) >= 4:
            return t
    return fitting[0]                            # parallelism unattainable: go big


# ---------------------------------------------------------------------------
# Wrapper: NCHW<->NHWC, BN folding, channel padding, BlockSpecs
# ---------------------------------------------------------------------------
def c1_forward(x_nchw, params, *, eps=1e-5):
    w3, gamma, beta, run_mean, run_var, w1, b1 = params
    N, Cin, H, W = x_nchw.shape
    Chid = w3.shape[-1]
    K = w1.shape[-1]
    Chid_p = ((Chid + 127) // 128) * 128          # full MXU output lanes

    vmem_limit = _vmem_limit_bytes()
    TH = _pick_row_tile(N, H, W, Cin, Chid_p, K, int(vmem_limit * 0.6))
    n_row_tiles = H // TH

    # ---- fold BN into an affine; pad hidden channels with exact zeros -------
    scale = (gamma / jnp.sqrt(run_var + eps)).astype(jnp.float32)
    bias = (beta - run_mean * scale).astype(jnp.float32)
    scale_p = jnp.zeros((1, Chid_p), jnp.float32).at[0, :Chid].set(scale)
    bias_p = jnp.zeros((1, Chid_p), jnp.float32).at[0, :Chid].set(bias)

    # 3x3 weights: (dy, dx, ci, co) -> [(dy, ci), (dx, co_padded)] in bf16
    w3_p = jnp.zeros((3, 3, Cin, Chid_p), jnp.float32).at[..., :Chid].set(w3)
    wall = jnp.transpose(w3_p, (0, 2, 1, 3)).reshape(3 * Cin, 3 * Chid_p)
    wall = wall.astype(jnp.bfloat16)

    # 1x1 weights: zero rows for padded hidden channels (they contribute 0)
    w1_p = jnp.zeros((Chid_p, K), jnp.bfloat16).at[:Chid, :].set(
        w1.astype(jnp.bfloat16))
    b1_p = b1.astype(jnp.float32).reshape(1, K)

    x = jnp.transpose(x_nchw, (0, 2, 3, 1)).astype(jnp.bfloat16)   # NHWC bf16

    out = pl.pallas_call(
        _c1_fused_kernel,
        out_shape=jax.ShapeDtypeStruct((N, H, W, K), jnp.float32),
        grid_spec=pltpu.PrefetchScalarGridSpec(
            num_scalar_prefetch=0,
            grid=(N, n_row_tiles),
            in_specs=[
                # body rows of this tile
                pl.BlockSpec((1, TH, W, Cin), lambda n, i: (n, i, 0, 0)),
                # top halo row (clamped at the image edge, zeroed in-kernel)
                pl.BlockSpec((1, 1, W, Cin),
                             lambda n, i: (n, jnp.maximum(i * TH - 1, 0), 0, 0)),
                # bottom halo row (clamped at the image edge, zeroed in-kernel)
                pl.BlockSpec((1, 1, W, Cin),
                             lambda n, i: (n, jnp.minimum(i * TH + TH, H - 1), 0, 0)),
                # grid-invariant operands: single-buffered (saves VMEM, esp. v7x)
                pl.BlockSpec((3 * Cin, 3 * Chid_p), lambda n, i: (0, 0),
                             pipeline_mode=pl.Buffered(1)),
                pl.BlockSpec((1, Chid_p), lambda n, i: (0, 0),
                             pipeline_mode=pl.Buffered(1)),
                pl.BlockSpec((1, Chid_p), lambda n, i: (0, 0),
                             pipeline_mode=pl.Buffered(1)),
                pl.BlockSpec((Chid_p, K), lambda n, i: (0, 0),
                             pipeline_mode=pl.Buffered(1)),
                pl.BlockSpec((1, K), lambda n, i: (0, 0),
                             pipeline_mode=pl.Buffered(1)),
            ],
            out_specs=pl.BlockSpec((1, TH, W, K), lambda n, i: (n, i, 0, 0)),
            scratch_shapes=[pltpu.VMEM((TH + 2, W + 2, Cin), jnp.bfloat16)],
        ),
        compiler_params=pltpu.CompilerParams(
            dimension_semantics=("parallel", "parallel"),
            vmem_limit_bytes=vmem_limit),
    )(x, x, x, wall, scale_p, bias_p, w1_p, b1_p)

    # unpadded NHWC -> NCHW (no padded-class slice pass needed anymore)
    return jnp.transpose(out, (0, 3, 1, 2))


# ---------------------------------------------------------------------------
# Pure-JAX f32 reference for correctness checking
# ---------------------------------------------------------------------------
def _reference_forward(x_nchw, params, *, eps=1e-5):
    w3, gamma, beta, run_mean, run_var, w1, b1 = params
    x = jnp.transpose(x_nchw, (0, 2, 3, 1))
    y = jax.lax.conv_general_dilated(
        x, w3, window_strides=(1, 1), padding=((1, 1), (1, 1)),
        dimension_numbers=("NHWC", "HWIO", "NHWC"),
        precision=jax.lax.Precision.HIGHEST)
    scale = gamma / jnp.sqrt(run_var + eps)
    y = jnp.tanh(y * scale + (beta - run_mean * scale))
    logits = jnp.einsum("nhwc,ck->nhwk", y, w1,
                        precision=jax.lax.Precision.HIGHEST) + b1
    logp = jax.nn.log_softmax(logits, axis=-1)
    return jnp.transpose(logp, (0, 3, 1, 2))


if __name__ == "__main__":
    # Small shapes consistent with the module: fc_dim=32 -> hidden=8, classes=8
    N, FC_DIM, H, W = 2, 32, 16, 16
    CHID = FC_DIM // 4
    NUM_CLASS = 8

    key = jax.random.PRNGKey(0)
    k = jax.random.split(key, 8)
    w3 = jax.random.normal(k[0], (3, 3, FC_DIM, CHID), jnp.float32) * 0.1
    gamma = jax.random.uniform(k[1], (CHID,), jnp.float32, 0.5, 1.5)
    beta = jax.random.normal(k[2], (CHID,), jnp.float32) * 0.1
    run_mean = jax.random.normal(k[3], (CHID,), jnp.float32) * 0.1
    run_var = jax.random.uniform(k[4], (CHID,), jnp.float32, 0.5, 1.5)
    w1 = jax.random.normal(k[5], (CHID, NUM_CLASS), jnp.float32) * 0.1
    b1 = jax.random.normal(k[6], (NUM_CLASS,), jnp.float32) * 0.1
    params = (w3, gamma, beta, run_mean, run_var, w1, b1)

    # conv_out is a list in PyTorch; only its last element feeds the head
    conv5 = jax.random.normal(k[7], (N, FC_DIM, H, W), jnp.float32)

    out = jax.block_until_ready(jax.jit(c1_forward)(conv5, params))

    assert out.shape == (N, NUM_CLASS, H, W)
    # log_softmax sanity: exp(out) sums to 1 over the channel dim
    probs_sum = jnp.exp(out).sum(axis=1)
    assert jnp.allclose(probs_sum, 1.0, atol=1e-4)

    # compare against f32 reference (kernel uses bf16 MXU operands -> loose tol)
    ref = _reference_forward(conv5, params)
    max_err = float(jnp.max(jnp.abs(out - ref)))
    assert max_err < 0.2, f"max abs err vs f32 reference: {max_err}"

    print("KERNEL_OK")
</pallas_src>

<mosaic_0001>
module attributes {stable_mosaic.version = 11 : i64} {
  func.func @_c1_fused_kernel(%arg0: i32, %arg1: i32, %arg2: memref<1x8x16x32xbf16, #tpu.memory_space<vmem>>, %arg3: memref<1x1x16x32xbf16, #tpu.memory_space<vmem>>, %arg4: memref<1x1x16x32xbf16, #tpu.memory_space<vmem>>, %arg5: memref<96x384xbf16, #tpu.memory_space<vmem>>, %arg6: memref<1x128xf32, #tpu.memory_space<vmem>>, %arg7: memref<1x128xf32, #tpu.memory_space<vmem>>, %arg8: memref<128x8xbf16, #tpu.memory_space<vmem>>, %arg9: memref<1x8xf32, #tpu.memory_space<vmem>>, %arg10: memref<1x8x16x8xf32, #tpu.memory_space<vmem>>, %arg11: memref<10x18x32xbf16, #tpu.memory_space<vmem>>) attributes {dimension_semantics = [#tpu.dimension_semantics<parallel>, #tpu.dimension_semantics<parallel>], iteration_bounds = array<i64: 2, 2>, scalar_prefetch = 0 : i64, scratch_operands = 1 : i64, tpu.core_type = #tpu.core_type<tc>, window_params = [{transform_indices = @transform_0, window_bounds = array<i64: 1, 8, 16, 32>}, {transform_indices = @transform_1, window_bounds = array<i64: 1, 1, 16, 32>}, {transform_indices = @transform_2, window_bounds = array<i64: 1, 1, 16, 32>}, {pipeline_mode = #tpu.pipeline_mode<synchronous>, transform_indices = @transform_3, window_bounds = array<i64: 96, 384>}, {pipeline_mode = #tpu.pipeline_mode<synchronous>, transform_indices = @transform_4, window_bounds = array<i64: 1, 128>}, {pipeline_mode = #tpu.pipeline_mode<synchronous>, transform_indices = @transform_5, window_bounds = array<i64: 1, 128>}, {pipeline_mode = #tpu.pipeline_mode<synchronous>, transform_indices = @transform_6, window_bounds = array<i64: 128, 8>}, {pipeline_mode = #tpu.pipeline_mode<synchronous>, transform_indices = @transform_7, window_bounds = array<i64: 1, 8>}, {transform_indices = @transform_8, window_bounds = array<i64: 1, 8, 16, 8>}]} {
    %cst = arith.constant 0.000000e+00 : bf16
    %0 = vector.broadcast %cst : bf16 to vector<10x1x32xbf16>
    %c0 = arith.constant 0 : index
    %c0_0 = arith.constant 0 : index
    %c0_1 = arith.constant 0 : index
    %1 = vector.load %arg11[%c0, %c0_0, %c0_1] : memref<10x18x32xbf16, #tpu.memory_space<vmem>>, vector<10x1x32xbf16>
    tpu.vector_store %arg11[%c0, %c0_0, %c0_1], %0 {strides = array<i32>} : memref<10x18x32xbf16, #tpu.memory_space<vmem>>, vector<10x1x32xbf16>,
    %c0_2 = arith.constant 0 : index
    %c17 = arith.constant 17 : index
    %c0_3 = arith.constant 0 : index
    %2 = vector.load %arg11[%c0_2, %c17, %c0_3] : memref<10x18x32xbf16, #tpu.memory_space<vmem>>, vector<10x1x32xbf16>
    tpu.vector_store %arg11[%c0_2, %c17, %c0_3], %0 {strides = array<i32>} : memref<10x18x32xbf16, #tpu.memory_space<vmem>>, vector<10x1x32xbf16>,
    %c0_4 = arith.constant 0 : index
    %c0_5 = arith.constant 0 : index
    %c0_6 = arith.constant 0 : index
    %c0_7 = arith.constant 0 : index
    %3 = vector.load %arg2[%c0_4, %c0_5, %c0_6, %c0_7] : memref<1x8x16x32xbf16, #tpu.memory_space<vmem>>, vector<1x8x16x32xbf16>
    %4 = vector.shape_cast %3 : vector<1x8x16x32xbf16> to vector<8x16x32xbf16>
    %c1 = arith.constant 1 : index
    %c1_8 = arith.constant 1 : index
    %c0_9 = arith.constant 0 : index
    %5 = vector.load %arg11[%c1, %c1_8, %c0_9] : memref<10x18x32xbf16, #tpu.memory_space<vmem>>, vector<8x16x32xbf16>
    tpu.vector_store %arg11[%c1, %c1_8, %c0_9], %4 {strides = array<i32>} : memref<10x18x32xbf16, #tpu.memory_space<vmem>>, vector<8x16x32xbf16>,
    %c0_i32 = arith.constant 0 : i32
    %6 = arith.cmpi eq, %arg1, %c0_i32 : i32
    %7 = arith.extui %6 : i1 to i32
    %c0_i32_10 = arith.constant 0 : i32
    %8 = arith.cmpi ne, %7, %c0_i32_10 : i32
    scf.if %8 {
      %cst_42 = arith.constant 0.000000e+00 : bf16
      %57 = vector.broadcast %cst_42 : bf16 to vector<1x16x32xbf16>
      %c0_43 = arith.constant 0 : index
      %c1_44 = arith.constant 1 : index
      %c0_45 = arith.constant 0 : index
      %58 = vector.load %arg11[%c0_43, %c1_44, %c0_45] : memref<10x18x32xbf16, #tpu.memory_space<vmem>>, vector<1x16x32xbf16>
      tpu.vector_store %arg11[%c0_43, %c1_44, %c0_45], %57 {strides = array<i32>} : memref<10x18x32xbf16, #tpu.memory_space<vmem>>, vector<1x16x32xbf16>,
    } else {
    }
    %c0_i32_11 = arith.constant 0 : i32
    %9 = arith.cmpi sgt, %arg1, %c0_i32_11 : i32
    %10 = arith.extui %9 : i1 to i32
    %c0_i32_12 = arith.constant 0 : i32
    %11 = arith.cmpi ne, %10, %c0_i32_12 : i32
    scf.if %11 {
      %c0_42 = arith.constant 0 : index
      %c0_43 = arith.constant 0 : index
      %c0_44 = arith.constant 0 : index
      %c0_45 = arith.constant 0 : index
      %57 = vector.load %arg3[%c0_42, %c0_43, %c0_44, %c0_45] : memref<1x1x16x32xbf16, #tpu.memory_space<vmem>>, vector<1x1x16x32xbf16>
      %58 = vector.shape_cast %57 : vector<1x1x16x32xbf16> to vector<1x16x32xbf16>
      %c0_46 = arith.constant 0 : index
      %c1_47 = arith.constant 1 : index
      %c0_48 = arith.constant 0 : index
      %59 = vector.load %arg11[%c0_46, %c1_47, %c0_48] : memref<10x18x32xbf16, #tpu.memory_space<vmem>>, vector<1x16x32xbf16>
      tpu.vector_store %arg11[%c0_46, %c1_47, %c0_48], %58 {strides = array<i32>} : memref<10x18x32xbf16, #tpu.memory_space<vmem>>, vector<1x16x32xbf16>,
    } else {
    }
    %c1_i32 = arith.constant 1 : i32
    %12 = arith.cmpi eq, %arg1, %c1_i32 : i32
    %13 = arith.extui %12 : i1 to i32
    %c0_i32_13 = arith.constant 0 : i32
    %14 = arith.cmpi ne, %13, %c0_i32_13 : i32
    scf.if %14 {
      %cst_42 = arith.constant 0.000000e+00 : bf16
      %57 = vector.broadcast %cst_42 : bf16 to vector<1x16x32xbf16>
      %c9 = arith.constant 9 : index
      %c1_43 = arith.constant 1 : index
      %c0_44 = arith.constant 0 : index
      %58 = vector.load %arg11[%c9, %c1_43, %c0_44] : memref<10x18x32xbf16, #tpu.memory_space<vmem>>, vector<1x16x32xbf16>
      tpu.vector_store %arg11[%c9, %c1_43, %c0_44], %57 {strides = array<i32>} : memref<10x18x32xbf16, #tpu.memory_space<vmem>>, vector<1x16x32xbf16>,
    } else {
    }
    %c1_i32_14 = arith.constant 1 : i32
    %15 = arith.cmpi slt, %arg1, %c1_i32_14 : i32
    %16 = arith.extui %15 : i1 to i32
    %c0_i32_15 = arith.constant 0 : i32
    %17 = arith.cmpi ne, %16, %c0_i32_15 : i32
    scf.if %17 {
      %c0_42 = arith.constant 0 : index
      %c0_43 = arith.constant 0 : index
      %c0_44 = arith.constant 0 : index
      %c0_45 = arith.constant 0 : index
      %57 = vector.load %arg4[%c0_42, %c0_43, %c0_44, %c0_45] : memref<1x1x16x32xbf16, #tpu.memory_space<vmem>>, vector<1x1x16x32xbf16>
      %58 = vector.shape_cast %57 : vector<1x1x16x32xbf16> to vector<1x16x32xbf16>
      %c9 = arith.constant 9 : index
      %c1_46 = arith.constant 1 : index
      %c0_47 = arith.constant 0 : index
      %59 = vector.load %arg11[%c9, %c1_46, %c0_47] : memref<10x18x32xbf16, #tpu.memory_space<vmem>>, vector<1x16x32xbf16>
      tpu.vector_store %arg11[%c9, %c1_46, %c0_47], %58 {strides = array<i32>} : memref<10x18x32xbf16, #tpu.memory_space<vmem>>, vector<1x16x32xbf16>,
    } else {
    }
    %c0_16 = arith.constant 0 : index
    %c0_17 = arith.constant 0 : index
    %c0_18 = arith.constant 0 : index
    %18 = vector.load %arg11[%c0_16, %c0_17, %c0_18] : memref<10x18x32xbf16, #tpu.memory_space<vmem>>, vector<8x18x32xbf16>
    %c1_19 = arith.constant 1 : index
    %c0_20 = arith.constant 0 : index
    %c0_21 = arith.constant 0 : index
    %19 = vector.load %arg11[%c1_19, %c0_20, %c0_21] : memref<10x18x32xbf16, #tpu.memory_space<vmem>>, vector<8x18x32xbf16>
    %c2 = arith.constant 2 : index
    %c0_22 = arith.constant 0 : index
    %c0_23 = arith.constant 0 : index
    %20 = vector.load %arg11[%c2, %c0_22, %c0_23] : memref<10x18x32xbf16, #tpu.memory_space<vmem>>, vector<8x18x32xbf16>
    %21 = tpu.concatenate %18, %19, %20 in 2 : vector<8x18x32xbf16>, vector<8x18x32xbf16>, vector<8x18x32xbf16> -> vector<8x18x96xbf16>
    %22 = vector.shape_cast %21 : vector<8x18x96xbf16> to vector<144x96xbf16>
    %c0_24 = arith.constant 0 : index
    %c0_25 = arith.constant 0 : index
    %23 = vector.load %arg5[%c0_24, %c0_25] : memref<96x384xbf16, #tpu.memory_space<vmem>>, vector<96x384xbf16>
    %cst_26 = arith.constant dense<0.000000e+00> : vector<144x384xf32>
    %24 = tpu.matmul %22, %23, %cst_26 {dimension_numbers = #tpu.dot_dimension_numbers<[1], [0], [0], [1], [0, 0, 1, 1], [], []>} : vector<144x96xbf16>, vector<96x384xbf16>, vector<144x384xf32> -> vector<144x384xf32>
    %25 = vector.shape_cast %24 : vector<144x384xf32> to vector<8x18x384xf32>
    %26 = vector.extract_strided_slice %25 {offsets = [0, 0, 0], sizes = [8, 16, 128], strides = [1, 1, 1]} : vector<8x18x384xf32> to vector<8x16x128xf32>
    %27 = vector.extract_strided_slice %25 {offsets = [0, 1, 128], sizes = [8, 16, 128], strides = [1, 1, 1]} : vector<8x18x384xf32> to vector<8x16x128xf32>
    %28 = arith.addf %26, %27 : vector<8x16x128xf32>
    %29 = vector.extract_strided_slice %25 {offsets = [0, 2, 256], sizes = [8, 16, 128], strides = [1, 1, 1]} : vector<8x18x384xf32> to vector<8x16x128xf32>
    %30 = arith.addf %28, %29 : vector<8x16x128xf32>
    %31 = vector.shape_cast %30 : vector<8x16x128xf32> to vector<128x128xf32>
    %c0_27 = arith.constant 0 : index
    %c0_28 = arith.constant 0 : index
    %32 = vector.load %arg6[%c0_27, %c0_28] : memref<1x128xf32, #tpu.memory_space<vmem>>, vector<1x128xf32>
    %33 = vector.broadcast %32 : vector<1x128xf32> to vector<128x128xf32>
    %34 = arith.mulf %31, %33 : vector<128x128xf32>
    %c0_29 = arith.constant 0 : index
    %c0_30 = arith.constant 0 : index
    %35 = vector.load %arg7[%c0_29, %c0_30] : memref<1x128xf32, #tpu.memory_space<vmem>>, vector<1x128xf32>
    %36 = vector.broadcast %35 : vector<1x128xf32> to vector<128x128xf32>
    %37 = arith.addf %34, %36 : vector<128x128xf32>
    %38 = math.tanh %37 : vector<128x128xf32>
    %39 = arith.truncf %38 : vector<128x128xf32> to vector<128x128xbf16>
    %c0_31 = arith.constant 0 : index
    %c0_32 = arith.constant 0 : index
    %40 = vector.load %arg8[%c0_31, %c0_32] : memref<128x8xbf16, #tpu.memory_space<vmem>>, vector<128x8xbf16>
    %cst_33 = arith.constant dense<0.000000e+00> : vector<128x8xf32>
    %41 = tpu.matmul %39, %40, %cst_33 {dimension_numbers = #tpu.dot_dimension_numbers<[1], [0], [0], [1], [0, 0, 1, 1], [], []>} : vector<128x128xbf16>, vector<128x8xbf16>, vector<128x8xf32> -> vector<128x8xf32>
    %c0_34 = arith.constant 0 : index
    %c0_35 = arith.constant 0 : index
    %42 = vector.load %arg9[%c0_34, %c0_35] : memref<1x8xf32, #tpu.memory_space<vmem>>, vector<1x8xf32>
    %43 = vector.broadcast %42 : vector<1x8xf32> to vector<128x8xf32>
    %44 = arith.addf %41, %43 : vector<128x8xf32>
    %cst_36 = arith.constant dense<0xFF800000> : vector<128xf32>
    %45 = vector.multi_reduction <maximumf>, %44, %cst_36 [1] : vector<128x8xf32> to vector<128xf32>
    %46 = vector.shape_cast %45 : vector<128xf32> to vector<128x1xf32>
    %47 = vector.broadcast %46 : vector<128x1xf32> to vector<128x8xf32>
    %48 = arith.subf %44, %47 : vector<128x8xf32>
    %49 = math.exp %48 : vector<128x8xf32>
    %cst_37 = arith.constant dense<0.000000e+00> : vector<128xf32>
    %50 = vector.multi_reduction <add>, %49, %cst_37 [1] : vector<128x8xf32> to vector<128xf32>
    %51 = vector.shape_cast %50 : vector<128xf32> to vector<128x1xf32>
    %52 = math.log %51 : vector<128x1xf32>
    %53 = vector.broadcast %52 : vector<128x1xf32> to vector<128x8xf32>
    %54 = arith.subf %48, %53 : vector<128x8xf32>
    %55 = vector.shape_cast %54 : vector<128x8xf32> to vector<1x8x16x8xf32>
    %c0_38 = arith.constant 0 : index
    %c0_39 = arith.constant 0 : index
    %c0_40 = arith.constant 0 : index
    %c0_41 = arith.constant 0 : index
    %56 = vector.load %arg10[%c0_38, %c0_39, %c0_40, %c0_41] : memref<1x8x16x8xf32, #tpu.memory_space<vmem>>, vector<1x8x16x8xf32>
    tpu.vector_store %arg10[%c0_38, %c0_39, %c0_40, %c0_41], %55 {strides = array<i32>} : memref<1x8x16x8xf32, #tpu.memory_space<vmem>>, vector<1x8x16x8xf32>,
    return
  }
  func.func @transform_0(%arg0: i32, %arg1: i32) -> (i32, i32, i32, i32) {
    %c0_i32 = arith.constant 0 : i32
    %c0_i32_0 = arith.constant 0 : i32
    %c0_i32_1 = arith.constant 0 : i32
    return %arg0, %arg1, %c0_i32, %c0_i32_0 : i32, i32, i32, i32
  }
  func.func @transform_1(%arg0: i32, %arg1: i32) -> (i32, i32, i32, i32) {
    %c8_i32 = arith.constant 8 : i32
    %0 = arith.muli %arg1, %c8_i32 : i32
    %c1_i32 = arith.constant 1 : i32
    %1 = arith.subi %0, %c1_i32 : i32
    %c0_i32 = arith.constant 0 : i32
    %2 = arith.maxsi %1, %c0_i32 : i32
    %c0_i32_0 = arith.constant 0 : i32
    %c0_i32_1 = arith.constant 0 : i32
    %c0_i32_2 = arith.constant 0 : i32
    return %arg0, %2, %c0_i32_0, %c0_i32_1 : i32, i32, i32, i32
  }
  func.func @transform_2(%arg0: i32, %arg1: i32) -> (i32, i32, i32, i32) {
    %c8_i32 = arith.constant 8 : i32
    %0 = arith.muli %arg1, %c8_i32 : i32
    %c8_i32_0 = arith.constant 8 : i32
    %1 = arith.addi %0, %c8_i32_0 : i32
    %c15_i32 = arith.constant 15 : i32
    %2 = arith.minsi %1, %c15_i32 : i32
    %c0_i32 = arith.constant 0 : i32
    %c0_i32_1 = arith.constant 0 : i32
    %c0_i32_2 = arith.constant 0 : i32
    return %arg0, %2, %c0_i32, %c0_i32_1 : i32, i32, i32, i32
  }
  func.func @transform_3(%arg0: i32, %arg1: i32) -> (i32, i32) {
    %c0_i32 = arith.constant 0 : i32
    %c0_i32_0 = arith.constant 0 : i32
    %c0_i32_1 = arith.constant 0 : i32
    return %c0_i32, %c0_i32_0 : i32, i32
  }
  func.func @transform_4(%arg0: i32, %arg1: i32) -> (i32, i32) {
    %c0_i32 = arith.constant 0 : i32
    %c0_i32_0 = arith.constant 0 : i32
    %c0_i32_1 = arith.constant 0 : i32
    return %c0_i32, %c0_i32_0 : i32, i32
  }
  func.func @transform_5(%arg0: i32, %arg1: i32) -> (i32, i32) {
    %c0_i32 = arith.constant 0 : i32
    %c0_i32_0 = arith.constant 0 : i32
    %c0_i32_1 = arith.constant 0 : i32
    return %c0_i32, %c0_i32_0 : i32, i32
  }
  func.func @transform_6(%arg0: i32, %arg1: i32) -> (i32, i32) {
    %c0_i32 = arith.constant 0 : i32
    %c0_i32_0 = arith.constant 0 : i32
    %c0_i32_1 = arith.constant 0 : i32
    return %c0_i32, %c0_i32_0 : i32, i32
  }
  func.func @transform_7(%arg0: i32, %arg1: i32) -> (i32, i32) {
    %c0_i32 = arith.constant 0 : i32
    %c0_i32_0 = arith.constant 0 : i32
    %c0_i32_1 = arith.constant 0 : i32
    return %c0_i32, %c0_i32_0 : i32, i32
  }
  func.func @transform_8(%arg0: i32, %arg1: i32) -> (i32, i32, i32, i32) {
    %c0_i32 = arith.constant 0 : i32
    %c0_i32_0 = arith.constant 0 : i32
    %c0_i32_1 = arith.constant 0 : i32
    return %arg0, %arg1, %c0_i32, %c0_i32_0 : i32, i32, i32, i32
  }
}

</mosaic_0001>

<llo_original>
// kernel: c1_forward.1
$region0: #{c1_forward.1}
  #allocation0 [shape = 'u32[]', space=smem, size = 0x4, offset = 0x4, fixed_abs, tag = 'smem constant byte address 0x4 - core index']
  #allocation1 [shape = 'u32[72,128]{1,0:T(1,128)}', space=vmem, size = 0x9000, scoped, tag = 'internal scratch']
  #allocation2 [shape = 'bf16[10,18,32]{2,1,0:T(8,128)(2,1)}', space=vmem, size = 0xf000, scoped, tag = 'scratch operand']
  %s0 = inlined_call_operand.vmem [shape: bf16[2,16,16,32], index: 0, kind: input, shape index: {}, may-alias: {0,1,2}]
  %s1 = inlined_call_operand.vmem [shape: bf16[2,16,16,32], index: 1, kind: input, shape index: {}, may-alias: {0,1,2}]
  %s2 = inlined_call_operand.vmem [shape: bf16[2,16,16,32], index: 2, kind: input, shape index: {}, may-alias: {0,1,2}]
  %s3 = inlined_call_operand.vmem [shape: bf16[96,384], index: 3, kind: input, shape index: {}]
  %s4 = inlined_call_operand.vmem [shape: f32[1,128], index: 4, kind: input, shape index: {}]
  %s5 = inlined_call_operand.vmem [shape: f32[1,128], index: 5, kind: input, shape index: {}]
  %s6 = inlined_call_operand.vmem [shape: bf16[128,8], index: 6, kind: input, shape index: {}]
  %s7 = inlined_call_operand.vmem [shape: f32[1,8], index: 7, kind: input, shape index: {}]
  %s8 = inlined_call_operand.vmem [shape: f32[2,16,16,8], index: 8, kind: output, shape index: {}]
  %s9 = sld [smem:[#allocation0]]
  $region81: #{c1_forward.1} parent=0
    _
  %s11 = ssub.s32 1, %s9
  %s12 = scalar_select 0, %s11, %s9
  loop: start=0, step=1, limit=6
  $region2: #{c1_forward.1} parent=0 // loop_pre_header
    _
  $region3: #{c1_forward.1} parent=0 // loop_header
    %s14 = sphi 0, %s18
    %p15 = scmp.ge.s32.totalorder %s14, 6
    %s21 = sphi 0, %s33
    %s22 = sphi 0, %s29
    %s23 = sphi 0, %s21
    %s24 = sphi 0, %s22
    %s25 = sphi 0, %s23
    %s26 = sphi 0, %s24
    %s38 = sphi 0, %s40
    %s41 = sphi 0, %s38
    %s42 = sphi 0, %s41
    %s58 = sphi 0, %s42
    %s74 = sphi 0, %s76
    %s77 = sphi 0, %s74
    %s78 = sphi 0, %s77
    %s94 = sphi 0, %s78
    %s110 = sphi 0, %s112
    %s113 = sphi 0, %s110
    %s114 = sphi 0, %s113
    %s130 = sphi 0, %s114
    %s134 = sphi 0, %s134
    %s136 = sphi 0, %s134
    %s137 = sphi 0, %s136
    %s151 = sphi 0, %s137
    %s155 = sphi 0, %s155
    %s157 = sphi 0, %s155
    %s158 = sphi 0, %s157
    %s172 = sphi 0, %s158
    %s176 = sphi 0, %s176
    %s178 = sphi 0, %s176
    %s179 = sphi 0, %s178
    %s193 = sphi 0, %s179
    %s197 = sphi 0, %s197
    %s199 = sphi 0, %s197
    %s200 = sphi 0, %s199
    %s214 = sphi 0, %s200
    %s218 = sphi 0, %s218
    %s220 = sphi 0, %s218
    %s221 = sphi 0, %s220
    %s235 = sphi 0, %s221
    %s243 = sphi 0, %s245
    %s246 = sphi 0, %s243
    %s247 = sphi 0, %s246
    %s263 = sphi 0, %s247
  $region4: #{c1_forward.1} parent=0 // loop_header_branch
    %17 = sbr.rel (%p15) target = $region8
  $region5: #{c1_forward.1} parent=0 // loop_body
    %s19 = ssub.s32 %s14, 1
    %s20 = ssub.s32 %s14, 2
    %s27 = sadd.s32 1, %s22
    %p28 = scmp.ge.s32.totalorder %s27, 2
    %s29 = scalar_select %p28, 0, %s27
    %s30 = sadd.s32 1, %s21
    %s31 = scalar_select %p28, %s30, %s21
    %p32 = scmp.ge.s32.totalorder %s31, 2
    %s33 = scalar_select %p32, 0, %s31
    %s34 = ssub.s32 %s21, %s33
    %s35 = ssub.s32 %s22, %s29
    %s36 = sor.u32 %s34, %s35
    %p37 = scmp.eq.s32.totalorder %s36, 0
    %s39 = sadd.s32 %s38, 1
    %s40 = scalar_select %p37, %s38, %s39
    %p43 = pneg %p37
    %p44 = scmp.eq.s32.totalorder %s14, 3
    %p45 = por %p43, %p44
    %p46 = scmp.ne.s32.totalorder %s38, %s41
    %p47 = scmp.eq.s32.totalorder %s14, 0
    %p48 = por %p46, %p47
    %p49 = scmp.ne.s32.totalorder %s38, %s41
    %p50 = scmp.eq.s32.totalorder %s19, 3
    %p51 = por %p49, %p50
    %p52 = scmp.ne.s32.totalorder %s41, %s42
    %p53 = scmp.eq.s32.totalorder %s19, 0
    %p54 = por %p52, %p53
    %p55 = scmp.ne.s32.totalorder %s41, %s42
    %p56 = scmp.eq.s32.totalorder %s20, 3
    %p57 = por %p55, %p56
    %p59 = scmp.ne.s32.totalorder %s42, %s58
    %p60 = scmp.eq.s32.totalorder %s20, 0
    %p61 = por %p59, %p60
    %s62 = smul.u32 %s22, 8
    %s63 = ssub.s32 %s62, 1
    %p64 = scmp.gt.s32.totalorder %s63, 0
    %s65 = scalar_select %p64, %s63, 0
    %s66 = smul.u32 %s29, 8
    %s67 = ssub.s32 %s66, 1
    %p68 = scmp.gt.s32.totalorder %s67, 0
    %s69 = scalar_select %p68, %s67, 0
    %s70 = ssub.s32 %s21, %s33
    %s71 = ssub.s32 %s65, %s69
    %s72 = sor.u32 %s70, %s71
    %p73 = scmp.eq.s32.totalorder %s72, 0
    %s75 = sadd.s32 %s74, 1
    %s76 = scalar_select %p73, %s74, %s75
    %p79 = pneg %p73
    %p80 = scmp.eq.s32.totalorder %s14, 3
    %p81 = por %p79, %p80
    %p82 = scmp.ne.s32.totalorder %s74, %s77
    %p83 = scmp.eq.s32.totalorder %s14, 0
    %p84 = por %p82, %p83
    %p85 = scmp.ne.s32.totalorder %s74, %s77
    %p86 = scmp.eq.s32.totalorder %s19, 3
    %p87 = por %p85, %p86
    %p88 = scmp.ne.s32.totalorder %s77, %s78
    %p89 = scmp.eq.s32.totalorder %s19, 0
    %p90 = por %p88, %p89
    %p91 = scmp.ne.s32.totalorder %s77, %s78
    %p92 = scmp.eq.s32.totalorder %s20, 3
    %p93 = por %p91, %p92
    %p95 = scmp.ne.s32.totalorder %s78, %s94
    %p96 = scmp.eq.s32.totalorder %s20, 0
    %p97 = por %p95, %p96
    %s98 = smul.u32 %s22, 8
    %s99 = sadd.s32 %s98, 8
    %p100 = scmp.lt.s32.totalorder %s99, 15
    %s101 = scalar_select %p100, %s99, 15
    %s102 = smul.u32 %s29, 8
    %s103 = sadd.s32 %s102, 8
    %p104 = scmp.lt.s32.totalorder %s103, 15
    %s105 = scalar_select %p104, %s103, 15
    %s106 = ssub.s32 %s21, %s33
    %s107 = ssub.s32 %s101, %s105
    %s108 = sor.u32 %s106, %s107
    %p109 = scmp.eq.s32.totalorder %s108, 0
    %s111 = sadd.s32 %s110, 1
    %s112 = scalar_select %p109, %s110, %s111
    %p115 = pneg %p109
    %p116 = scmp.eq.s32.totalorder %s14, 3
    %p117 = por %p115, %p116
    %p118 = scmp.ne.s32.totalorder %s110, %s113
    %p119 = scmp.eq.s32.totalorder %s14, 0
    %p120 = por %p118, %p119
    %p121 = scmp.ne.s32.totalorder %s110, %s113
    %p122 = scmp.eq.s32.totalorder %s19, 3
    %p123 = por %p121, %p122
    %p124 = scmp.ne.s32.totalorder %s113, %s114
    %p125 = scmp.eq.s32.totalorder %s19, 0
    %p126 = por %p124, %p125
    %p127 = scmp.ne.s32.totalorder %s113, %s114
    %p128 = scmp.eq.s32.totalorder %s20, 3
    %p129 = por %p127, %p128
    %p131 = scmp.ne.s32.totalorder %s114, %s130
    %p132 = scmp.eq.s32.totalorder %s20, 0
    %p133 = por %p131, %p132
    %s135 = sadd.s32 %s134, 1
    %p138 = scmp.eq.s32.totalorder %s14, 3
    %p139 = scmp.ne.s32.totalorder %s134, %s136
    %p140 = scmp.eq.s32.totalorder %s14, 0
    %p141 = por %p139, %p140
    %p142 = scmp.ne.s32.totalorder %s134, %s136
    %p143 = scmp.eq.s32.totalorder %s19, 3
    %p144 = por %p142, %p143
    %p145 = scmp.ne.s32.totalorder %s136, %s137
    %p146 = scmp.eq.s32.totalorder %s19, 0
    %p147 = por %p145, %p146
    %p148 = scmp.ne.s32.totalorder %s136, %s137
    %p149 = scmp.eq.s32.totalorder %s20, 3
    %p150 = por %p148, %p149
    %p152 = scmp.ne.s32.totalorder %s137, %s151
    %p153 = scmp.eq.s32.totalorder %s20, 0
    %p154 = por %p152, %p153
    %s156 = sadd.s32 %s155, 1
    %p159 = scmp.eq.s32.totalorder %s14, 3
    %p160 = scmp.ne.s32.totalorder %s155, %s157
    %p161 = scmp.eq.s32.totalorder %s14, 0
    %p162 = por %p160, %p161
    %p163 = scmp.ne.s32.totalorder %s155, %s157
    %p164 = scmp.eq.s32.totalorder %s19, 3
    %p165 = por %p163, %p164
    %p166 = scmp.ne.s32.totalorder %s157, %s158
    %p167 = scmp.eq.s32.totalorder %s19, 0
    %p168 = por %p166, %p167
    %p169 = scmp.ne.s32.totalorder %s157, %s158
    %p170 = scmp.eq.s32.totalorder %s20, 3
    %p171 = por %p169, %p170
    %p173 = scmp.ne.s32.totalorder %s158, %s172
    %p174 = scmp.eq.s32.totalorder %s20, 0
    %p175 = por %p173, %p174
    %s177 = sadd.s32 %s176, 1
    %p180 = scmp.eq.s32.totalorder %s14, 3
    %p181 = scmp.ne.s32.totalorder %s176, %s178
    %p182 = scmp.eq.s32.totalorder %s14, 0
    %p183 = por %p181, %p182
    %p184 = scmp.ne.s32.totalorder %s176, %s178
    %p185 = scmp.eq.s32.totalorder %s19, 3
    %p186 = por %p184, %p185
    %p187 = scmp.ne.s32.totalorder %s178, %s179
    %p188 = scmp.eq.s32.totalorder %s19, 0
    %p189 = por %p187, %p188
    %p190 = scmp.ne.s32.totalorder %s178, %s179
    %p191 = scmp.eq.s32.totalorder %s20, 3
    %p192 = por %p190, %p191
    %p194 = scmp.ne.s32.totalorder %s179, %s193
    %p195 = scmp.eq.s32.totalorder %s20, 0
    %p196 = por %p194, %p195
    %s198 = sadd.s32 %s197, 1
    %p201 = scmp.eq.s32.totalorder %s14, 3
    %p202 = scmp.ne.s32.totalorder %s197, %s199
    %p203 = scmp.eq.s32.totalorder %s14, 0
    %p204 = por %p202, %p203
    %p205 = scmp.ne.s32.totalorder %s197, %s199
    %p206 = scmp.eq.s32.totalorder %s19, 3
    %p207 = por %p205, %p206
    %p208 = scmp.ne.s32.totalorder %s199, %s200
    %p209 = scmp.eq.s32.totalorder %s19, 0
    %p210 = por %p208, %p209
    %p211 = scmp.ne.s32.totalorder %s199, %s200
    %p212 = scmp.eq.s32.totalorder %s20, 3
    %p213 = por %p211, %p212
    %p215 = scmp.ne.s32.totalorder %s200, %s214
    %p216 = scmp.eq.s32.totalorder %s20, 0
    %p217 = por %p215, %p216
    %s219 = sadd.s32 %s218, 1
    %p222 = scmp.eq.s32.totalorder %s14, 3
    %p223 = scmp.ne.s32.totalorder %s218, %s220
    %p224 = scmp.eq.s32.totalorder %s14, 0
    %p225 = por %p223, %p224
    %p226 = scmp.ne.s32.totalorder %s218, %s220
    %p227 = scmp.eq.s32.totalorder %s19, 3
    %p228 = por %p226, %p227
    %p229 = scmp.ne.s32.totalorder %s220, %s221
    %p230 = scmp.eq.s32.totalorder %s19, 0
    %p231 = por %p229, %p230
    %p232 = scmp.ne.s32.totalorder %s220, %s221
    %p233 = scmp.eq.s32.totalorder %s20, 3
    %p234 = por %p232, %p233
    %p236 = scmp.ne.s32.totalorder %s221, %s235
    %p237 = scmp.eq.s32.totalorder %s20, 0
    %p238 = por %p236, %p237
    %s239 = ssub.s32 %s21, %s33
    %s240 = ssub.s32 %s22, %s29
    %s241 = sor.u32 %s239, %s240
    %p242 = scmp.eq.s32.totalorder %s241, 0
    %s244 = sadd.s32 %s243, 1
    %s245 = scalar_select %p242, %s243, %s244
    %p248 = pneg %p242
    %p249 = scmp.eq.s32.totalorder %s14, 3
    %p250 = por %p248, %p249
    %p251 = scmp.ne.s32.totalorder %s243, %s246
    %p252 = scmp.eq.s32.totalorder %s14, 0
    %p253 = por %p251, %p252
    %p254 = scmp.ne.s32.totalorder %s243, %s246
    %p255 = scmp.eq.s32.totalorder %s19, 3
    %p256 = por %p254, %p255
    %p257 = scmp.ne.s32.totalorder %s246, %s247
    %p258 = scmp.eq.s32.totalorder %s19, 0
    %p259 = por %p257, %p258
    %p260 = scmp.ne.s32.totalorder %s246, %s247
    %p261 = scmp.eq.s32.totalorder %s20, 3
    %p262 = por %p260, %p261
    %p264 = scmp.ne.s32.totalorder %s247, %s263
    %p265 = scmp.eq.s32.totalorder %s20, 0
    %p266 = por %p264, %p265
    %p267 = scmp.le.s32.totalorder 1, %s14
    %p268 = scmp.lt.s32.totalorder %s14, 5
    %p269 = pnand %p267, %p268
    %p270 = pneg %p269
    // Predicated region
    $region9: #{c1_forward.1} parent=5 // pred_check
      _
    $region10: #{c1_forward.1} parent=5 // pred_check_branch
      %272 = sbr.rel (%p269) target = $region12
    $region11: #{c1_forward.1} parent=5 // pred_region
      %s273 = ssub.s32 %s14, 1
      // Predicated region
      $region13: #{c1_forward.1} parent=11 // pred_check
        %p274 = pneg %p147
      $region14: #{c1_forward.1} parent=11 // pred_check_branch
        %276 = sbr.rel (%p274) target = $region16
      $region15: #{c1_forward.1} parent=11 // pred_region
        _
      $region16: #{c1_forward.1} parent=11 // pred_fallthru
        _
      // Predicated region
      $region17: #{c1_forward.1} parent=11 // pred_check
        %p277 = pneg %p168
      $region18: #{c1_forward.1} parent=11 // pred_check_branch
        %279 = sbr.rel (%p277) target = $region20
      $region19: #{c1_forward.1} parent=11 // pred_region
        _
      $region20: #{c1_forward.1} parent=11 // pred_fallthru
        _
      // Predicated region
      $region21: #{c1_forward.1} parent=11 // pred_check
        %p280 = pneg %p189
      $region22: #{c1_forward.1} parent=11 // pred_check_branch
        %282 = sbr.rel (%p280) target = $region24
      $region23: #{c1_forward.1} parent=11 // pred_region
        _
      $region24: #{c1_forward.1} parent=11 // pred_fallthru
        _
      // Predicated region
      $region25: #{c1_forward.1} parent=11 // pred_check
        %p283 = pneg %p210
      $region26: #{c1_forward.1} parent=11 // pred_check_branch
        %285 = sbr.rel (%p283) target = $region28
      $region27: #{c1_forward.1} parent=11 // pred_region
        _
      $region28: #{c1_forward.1} parent=11 // pred_fallthru
        _
      // Predicated region
      $region29: #{c1_forward.1} parent=11 // pred_check
        %p286 = pneg %p231
      $region30: #{c1_forward.1} parent=11 // pred_check_branch
        %288 = sbr.rel (%p286) target = $region32
      $region31: #{c1_forward.1} parent=11 // pred_region
        _
      $region32: #{c1_forward.1} parent=11 // pred_fallthru
        _
    $region12: #{c1_forward.1} parent=5 // pred_fallthru
      _
    %p289 = scmp.lt.s32.totalorder %s14, 4
    // Predicated region
    $region33: #{c1_forward.1} parent=5 // pred_check
      %p290 = pneg %p289
    $region34: #{c1_forward.1} parent=5 // pred_check_branch
      %292 = sbr.rel (%p290) target = $region36
    $region35: #{c1_forward.1} parent=5 // pred_region
      // Predicated region
      $region37: #{c1_forward.1} parent=35 // pred_check
        %p293 = pneg %p48
      $region38: #{c1_forward.1} parent=35 // pred_check_branch
        %295 = sbr.rel (%p293) target = $region40
      $region39: #{c1_forward.1} parent=35 // pred_region
        %s296 = smul.u32 8, %s22
        %p297 = scmp.lt.s32.totalorder %s21, 1
        %s298 = scalar_select %p297, %s21, 1
        %p299 = scmp.lt.s32.totalorder %s296, 15
        %s300 = scalar_select %p299, %s296, 15
        %s301 = smul.addr %s300, 2
        %s302 = smul.addr %s298, 32
        %s303 = sadd.s32 %s301, %s302
        %s304 = smul.addr %s303, 4
        %s305 = scalar_lea.vmem %s0, %s304
        %s306 = smul.u32 8, %s22
      $region40: #{c1_forward.1} parent=35 // pred_fallthru
        _
      // Predicated region
      $region41: #{c1_forward.1} parent=35 // pred_check
        %p307 = pneg %p84
      $region42: #{c1_forward.1} parent=35 // pred_check_branch
        %309 = sbr.rel (%p307) target = $region44
      $region43: #{c1_forward.1} parent=35 // pred_region
        %s310 = smul.u32 %s22, 8
        %s311 = ssub.s32 %s310, 1
        %p312 = scmp.gt.s32.totalorder %s311, 0
        %s313 = scalar_select %p312, %s311, 0
        %p314 = scmp.lt.s32.totalorder %s21, 1
        %s315 = scalar_select %p314, %s21, 1
        %p316 = scmp.lt.s32.totalorder %s313, 15
        %s317 = scalar_select %p316, %s313, 15
        %s318 = smul.addr %s317, 2
        %s319 = smul.addr %s315, 32
        %s320 = sadd.s32 %s318, %s319
        %s321 = smul.addr %s320, 4
        %s322 = scalar_lea.vmem %s1, %s321
        %s323 = smul.u32 %s22, 8
        %s324 = ssub.s32 %s323, 1
        %p325 = scmp.gt.s32.totalorder %s324, 0
        %s326 = scalar_select %p325, %s324, 0
      $region44: #{c1_forward.1} parent=35 // pred_fallthru
        _
      // Predicated region
      $region45: #{c1_forward.1} parent=35 // pred_check
        %p327 = pneg %p120
      $region46: #{c1_forward.1} parent=35 // pred_check_branch
        %329 = sbr.rel (%p327) target = $region48
      $region47: #{c1_forward.1} parent=35 // pred_region
        %s330 = smul.u32 %s22, 8
        %s331 = sadd.s32 %s330, 8
        %p332 = scmp.lt.s32.totalorder %s331, 15
        %s333 = scalar_select %p332, %s331, 15
        %p334 = scmp.lt.s32.totalorder %s21, 1
        %s335 = scalar_select %p334, %s21, 1
        %p336 = scmp.lt.s32.totalorder %s333, 15
        %s337 = scalar_select %p336, %s333, 15
        %s338 = smul.addr %s337, 2
        %s339 = smul.addr %s335, 32
        %s340 = sadd.s32 %s338, %s339
        %s341 = smul.addr %s340, 4
        %s342 = scalar_lea.vmem %s2, %s341
        %s343 = smul.u32 %s22, 8
        %s344 = sadd.s32 %s343, 8
        %p345 = scmp.lt.s32.totalorder %s344, 15
        %s346 = scalar_select %p345, %s344, 15
      $region48: #{c1_forward.1} parent=35 // pred_fallthru
        _
    $region36: #{c1_forward.1} parent=5 // pred_fallthru
      _
    %p347 = scmp.le.s32.totalorder 1, %s14
    %p348 = scmp.lt.s32.totalorder %s14, 5
    %p349 = pnand %p347, %p348
    %p350 = pneg %p349
    // Predicated region
    $region49: #{c1_forward.1} parent=5 // pred_check
      _
    $region50: #{c1_forward.1} parent=5 // pred_check_branch
      %352 = sbr.rel (%p349) target = $region52
    $region51: #{c1_forward.1} parent=5 // pred_region
      %s353 = ssub.s32 %s14, 1
      %s354 = smul.u32 8, %s24
      %p355 = scmp.lt.s32.totalorder %s23, 1
      %s356 = scalar_select %p355, %s23, 1
      %p357 = scmp.lt.s32.totalorder %s354, 15
      %s358 = scalar_select %p357, %s354, 15
      %s359 = smul.addr %s358, 2
      %s360 = smul.addr %s356, 32
      %s361 = sadd.s32 %s359, %s360
      %s362 = smul.addr %s361, 4
      %s363 = scalar_lea.vmem %s0, %s362
      %p364 = pneg %p54
      %p365 = pneg %p51
      %s366 = smul.u32 %s24, 8
      %s367 = ssub.s32 %s366, 1
      %p368 = scmp.gt.s32.totalorder %s367, 0
      %s369 = scalar_select %p368, %s367, 0
      %p370 = scmp.lt.s32.totalorder %s23, 1
      %s371 = scalar_select %p370, %s23, 1
      %p372 = scmp.lt.s32.totalorder %s369, 15
      %s373 = scalar_select %p372, %s369, 15
      %s374 = smul.addr %s373, 2
      %s375 = smul.addr %s371, 32
      %s376 = sadd.s32 %s374, %s375
      %s377 = smul.addr %s376, 4
      %s378 = scalar_lea.vmem %s1, %s377
      %p379 = pneg %p90
      %p380 = pneg %p87
      %s381 = smul.u32 %s24, 8
      %s382 = sadd.s32 %s381, 8
      %p383 = scmp.lt.s32.totalorder %s382, 15
      %s384 = scalar_select %p383, %s382, 15
      %p385 = scmp.lt.s32.totalorder %s23, 1
      %s386 = scalar_select %p385, %s23, 1
      %p387 = scmp.lt.s32.totalorder %s384, 15
      %s388 = scalar_select %p387, %s384, 15
      %s389 = smul.addr %s388, 2
      %s390 = smul.addr %s386, 32
      %s391 = sadd.s32 %s389, %s390
      %s392 = smul.addr %s391, 4
      %s393 = scalar_lea.vmem %s2, %s392
      %p394 = pneg %p126
      %p395 = pneg %p123
      %p396 = pneg %p147
      %p397 = pneg %p144
      %p398 = pneg %p168
      %p399 = pneg %p165
      %p400 = pneg %p189
      %p401 = pneg %p186
      %p402 = pneg %p210
      %p403 = pneg %p207
      %p404 = pneg %p231
      %p405 = pneg %p228
      %p406 = pneg %p259
      %p407 = pneg %p256
      %s408 = smul.u32 8, %s24
      %p409 = scmp.lt.s32.totalorder %s23, 1
      %s410 = scalar_select %p409, %s23, 1
      %p411 = scmp.lt.s32.totalorder %s408, 15
      %s412 = scalar_select %p411, %s408, 15
      %s413 = smul.addr %s412, 2
      %s414 = smul.addr %s410, 32
      %s415 = sadd.s32 %s413, %s414
      %s416 = smul.addr %s415, 8
      %s417 = scalar_lea.vmem %s8, %s416
      %s418 = smul.u32 8, %s24
      %p419 = scmp.lt.s32.totalorder %s23, 1
      %s420 = scalar_select %p419, %s23, 1
      %p421 = scmp.lt.s32.totalorder %s418, 15
      %s422 = scalar_select %p421, %s418, 15
      %s423 = smul.addr %s422, 2
      %s424 = smul.addr %s420, 32
      %s425 = sadd.s32 %s423, %s424
      %s426 = smul.addr %s425, 4
      %s427 = scalar_lea.vmem %s0, %s426
      %s428 = smul.u32 8, %s24
      %s429 = smul.u32 %s24, 8
      %s430 = ssub.s32 %s429, 1
      %p431 = scmp.gt.s32.totalorder %s430, 0
      %s432 = scalar_select %p431, %s430, 0
      %p433 = scmp.lt.s32.totalorder %s23, 1
      %s434 = scalar_select %p433, %s23, 1
      %p435 = scmp.lt.s32.totalorder %s432, 15
      %s436 = scalar_select %p435, %s432, 15
      %s437 = smul.addr %s436, 2
      %s438 = smul.addr %s434, 32
      %s439 = sadd.s32 %s437, %s438
      %s440 = smul.addr %s439, 4
      %s441 = scalar_lea.vmem %s1, %s440
      %s442 = smul.u32 %s24, 8
      %s443 = ssub.s32 %s442, 1
      %p444 = scmp.gt.s32.totalorder %s443, 0
      %s445 = scalar_select %p444, %s443, 0
      %s446 = smul.u32 %s24, 8
      %s447 = sadd.s32 %s446, 8
      %p448 = scmp.lt.s32.totalorder %s447, 15
      %s449 = scalar_select %p448, %s447, 15
      %p450 = scmp.lt.s32.totalorder %s23, 1
      %s451 = scalar_select %p450, %s23, 1
      %p452 = scmp.lt.s32.totalorder %s449, 15
      %s453 = scalar_select %p452, %s449, 15
      %s454 = smul.addr %s453, 2
      %s455 = smul.addr %s451, 32
      %s456 = sadd.s32 %s454, %s455
      %s457 = smul.addr %s456, 4
      %s458 = scalar_lea.vmem %s2, %s457
      %s459 = smul.u32 %s24, 8
      %s460 = sadd.s32 %s459, 8
      %p461 = scmp.lt.s32.totalorder %s460, 15
      %s462 = scalar_select %p461, %s460, 15
      %s463 = smul.u32 8, %s24
      %p464 = scmp.lt.s32.totalorder %s23, 1
      %s465 = scalar_select %p464, %s23, 1
      %p466 = scmp.lt.s32.totalorder %s463, 15
      %s467 = scalar_select %p466, %s463, 15
      %s468 = smul.addr %s467, 2
      %s469 = smul.addr %s465, 32
      %s470 = sadd.s32 %s468, %s469
      %s471 = smul.addr %s470, 8
      %s472 = scalar_lea.vmem %s8, %s471
      %s473 = smul.u32 8, %s24
      %vm475 = vcmask 253952
      %vm476 = vsmask.f32 256
      %vm477 = vmand %vm475, %vm476
      %v478 = vld [vmem:[#allocation2] sm:$0x1]
      %v479 = vsel %vm477, 0, %v478
      %480 = vst [vmem:[#allocation2] sm:$0x1] %v479
      %v481 = vld [vmem:[#allocation2 + $0xc] sm:$0x1]
      %v482 = vsel %vm477, 0, %v481
      %483 = vst [vmem:[#allocation2 + $0xc] sm:$0x1] %v482
      %v484 = vld [vmem:[#allocation2 + $0x18] sm:$0x1]
      %v485 = vsel %vm477, 0, %v484
      %486 = vst [vmem:[#allocation2 + $0x18] sm:$0x1] %v485
      %v487 = vld [vmem:[#allocation2 + $0x24] sm:$0x1]
      %v488 = vsel %vm477, 0, %v487
      %489 = vst [vmem:[#allocation2 + $0x24] sm:$0x1] %v488
      %v490 = vld [vmem:[#allocation2 + $0x30] sm:$0x1]
      %v491 = vsel %vm477, 0, %v490
      %492 = vst [vmem:[#allocation2 + $0x30] sm:$0x1] %v491
      %v493 = vld [vmem:[#allocation2 + $0x3c] sm:$0x1]
      %v494 = vsel %vm477, 0, %v493
      %495 = vst [vmem:[#allocation2 + $0x3c] sm:$0x1] %v494
      %v496 = vld [vmem:[#allocation2 + $0x48] sm:$0x1]
      %v497 = vsel %vm477, 0, %v496
      %498 = vst [vmem:[#allocation2 + $0x48] sm:$0x1] %v497
      %v499 = vld [vmem:[#allocation2 + $0x54] sm:$0x1]
      %v500 = vsel %vm477, 0, %v499
      %501 = vst [vmem:[#allocation2 + $0x54] sm:$0x1] %v500
      %v502 = vld [vmem:[#allocation2 + $0x60] sm:$0x1]
      %v503 = vsel %vm477, 0, %v502
      %504 = vst [vmem:[#allocation2 + $0x60] sm:$0x1] %v503
      %v505 = vld [vmem:[#allocation2 + $0x6c] sm:$0x1]
      %v506 = vsel %vm477, 0, %v505
      %507 = vst [vmem:[#allocation2 + $0x6c] sm:$0x1] %v506
      %vm508 = vsmask.f32 7938
      %vm509 = vmand %vm475, %vm508
      %v510 = vld [vmem:[#allocation2 + $0x8] sm:$0x1]
      %v511 = vsel %vm509, 0, %v510
      %512 = vst [vmem:[#allocation2 + $0x8] sm:$0x1] %v511
      %v513 = vld [vmem:[#allocation2 + $0x14] sm:$0x1]
      %v514 = vsel %vm509, 0, %v513
      %515 = vst [vmem:[#allocation2 + $0x14] sm:$0x1] %v514
      %v516 = vld [vmem:[#allocation2 + $0x20] sm:$0x1]
      %v517 = vsel %vm509, 0, %v516
      %518 = vst [vmem:[#allocation2 + $0x20] sm:$0x1] %v517
      %v519 = vld [vmem:[#allocation2 + $0x2c] sm:$0x1]
      %v520 = vsel %vm509, 0, %v519
      %521 = vst [vmem:[#allocation2 + $0x2c] sm:$0x1] %v520
      %v522 = vld [vmem:[#allocation2 + $0x38] sm:$0x1]
      %v523 = vsel %vm509, 0, %v522
      %524 = vst [vmem:[#allocation2 + $0x38] sm:$0x1] %v523
      %v525 = vld [vmem:[#allocation2 + $0x44] sm:$0x1]
      %v526 = vsel %vm509, 0, %v525
      %527 = vst [vmem:[#allocation2 + $0x44] sm:$0x1] %v526
      %v528 = vld [vmem:[#allocation2 + $0x50] sm:$0x1]
      %v529 = vsel %vm509, 0, %v528
      %530 = vst [vmem:[#allocation2 + $0x50] sm:$0x1] %v529
      %v531 = vld [vmem:[#allocation2 + $0x5c] sm:$0x1]
      %v532 = vsel %vm509, 0, %v531
      %533 = vst [vmem:[#allocation2 + $0x5c] sm:$0x1] %v532
      %v534 = vld [vmem:[#allocation2 + $0x68] sm:$0x1]
      %v535 = vsel %vm509, 0, %v534
      %536 = vst [vmem:[#allocation2 + $0x68] sm:$0x1] %v535
      %v537 = vld [vmem:[#allocation2 + $0x74] sm:$0x1]
      %v538 = vsel %vm509, 0, %v537
      %539 = vst [vmem:[#allocation2 + $0x74] sm:$0x1] %v538
      %v540 = vld [vmem:[%s427] sm:$0xf]
      %v541 = vld [vmem:[%s427 + $0x4] sm:$0xf]
      %v542 = vld [vmem:[%s427 + $0x8] sm:$0xf]
      %v543 = vld [vmem:[%s427 + $0xc] sm:$0xf]
      %v544 = vld [vmem:[%s427 + $0x10] sm:$0xf]
      %v545 = vld [vmem:[%s427 + $0x14] sm:$0xf]
      %v546 = vld [vmem:[%s427 + $0x18] sm:$0xf]
      %v547 = vld [vmem:[%s427 + $0x1c] sm:$0xf]
      %v548 = vld [vmem:[%s427 + $0x20] sm:$0xf]
      %v549 = vld [vmem:[%s427 + $0x24] sm:$0xf]
      %v550 = vld [vmem:[%s427 + $0x28] sm:$0xf]
      %v551 = vld [vmem:[%s427 + $0x2c] sm:$0xf]
      %v552 = vld [vmem:[%s427 + $0x30] sm:$0xf]
      %v553 = vld [vmem:[%s427 + $0x34] sm:$0xf]
      %v554 = vld [vmem:[%s427 + $0x38] sm:$0xf]
      %v555 = vld [vmem:[%s427 + $0x3c] sm:$0xf]
      %vm556 = vsmask.f32 4368
      %vm557 = vmor %vm476, %vm556
      %v559 = vshrl.u32 %v540, 16
      %v561 = vrot.slane %v559, 7
      %v562 = vshll.u32 %v540, 16
      %v564 = vor.u32 %v561, %v562
      %v565 = vrot.slane %v561, 4
      %v567 = vshrl.u32 %v541, 16
      %v569 = vrot.slane %v567, 7
      %v570 = vshll.u32 %v541, 16
      %v572 = vor.u32 %v569, %v570
      %v573 = vsel %vm557, %v565, %v572
      %v574 = vrot.slane %v569, 4
      %v576 = vshrl.u32 %v542, 16
      %v578 = vrot.slane %v576, 7
      %v579 = vshll.u32 %v542, 16
      %v581 = vor.u32 %v578, %v579
      %v582 = vrot.slane %v578, 4
      %v584 = vshrl.u32 %v543, 16
      %v586 = vrot.slane %v584, 7
      %v587 = vshll.u32 %v543, 16
      %v589 = vor.u32 %v586, %v587
      %v590 = vsel %vm557, %v582, %v589
      %v591 = vrot.slane %v586, 4
      %v593 = vshrl.u32 %v544, 16
      %v595 = vrot.slane %v593, 7
      %v596 = vshll.u32 %v544, 16
      %v598 = vor.u32 %v595, %v596
      %v599 = vrot.slane %v595, 4
      %v601 = vshrl.u32 %v545, 16
      %v603 = vrot.slane %v601, 7
      %v604 = vshll.u32 %v545, 16
      %v606 = vor.u32 %v603, %v604
      %v607 = vsel %vm557, %v599, %v606
      %v608 = vrot.slane %v603, 4
      %v610 = vshrl.u32 %v546, 16
      %v612 = vrot.slane %v610, 7
      %v613 = vshll.u32 %v546, 16
      %v615 = vor.u32 %v612, %v613
      %v616 = vrot.slane %v612, 4
      %v618 = vshrl.u32 %v547, 16
      %v620 = vrot.slane %v618, 7
      %v621 = vshll.u32 %v547, 16
      %v623 = vor.u32 %v620, %v621
      %v624 = vsel %vm557, %v616, %v623
      %v625 = vrot.slane %v620, 4
      %v627 = vshrl.u32 %v548, 16
      %v629 = vrot.slane %v627, 7
      %v630 = vshll.u32 %v548, 16
      %v632 = vor.u32 %v629, %v630
      %v633 = vrot.slane %v629, 4
      %v635 = vshrl.u32 %v549, 16
      %v637 = vrot.slane %v635, 7
      %v638 = vshll.u32 %v549, 16
      %v640 = vor.u32 %v637, %v638
      %v641 = vsel %vm557, %v633, %v640
      %v642 = vrot.slane %v637, 4
      %v644 = vshrl.u32 %v550, 16
      %v646 = vrot.slane %v644, 7
      %v647 = vshll.u32 %v550, 16
      %v649 = vor.u32 %v646, %v647
      %v650 = vrot.slane %v646, 4
      %v652 = vshrl.u32 %v551, 16
      %v654 = vrot.slane %v652, 7
      %v655 = vshll.u32 %v551, 16
      %v657 = vor.u32 %v654, %v655
      %v658 = vsel %vm557, %v650, %v657
      %v659 = vrot.slane %v654, 4
      %v661 = vshrl.u32 %v552, 16
      %v663 = vrot.slane %v661, 7
      %v664 = vshll.u32 %v552, 16
      %v666 = vor.u32 %v663, %v664
      %v667 = vrot.slane %v663, 4
      %v669 = vshrl.u32 %v553, 16
      %v671 = vrot.slane %v669, 7
      %v672 = vshll.u32 %v553, 16
      %v674 = vor.u32 %v671, %v672
      %v675 = vsel %vm557, %v667, %v674
      %v676 = vrot.slane %v671, 4
      %v678 = vshrl.u32 %v554, 16
      %v680 = vrot.slane %v678, 7
      %v681 = vshll.u32 %v554, 16
      %v683 = vor.u32 %v680, %v681
      %v684 = vrot.slane %v680, 4
      %v686 = vshrl.u32 %v555, 16
      %v688 = vrot.slane %v686, 7
      %v689 = vshll.u32 %v555, 16
      %v691 = vor.u32 %v688, %v689
      %v692 = vsel %vm557, %v684, %v691
      %v693 = vrot.slane %v688, 4
      %s718 = scalar_lea.vmem [#allocation2], 12
      %vm719 = vcmask 257024
      %vm720 = vmand %vm719, %vm508
      %v721 = vld [vmem:[%s718] sm:$0xf]
      %v722 = vsel %vm720, %v564, %v721
      %723 = vst [vmem:[%s718] sm:$0xf] %v722
      %vm724 = vcmask 257024
      %725 = vst.msk [vmem:[%s718 + $0x4] sm:$0xf] %vm724, %v573
      %v726 = vld [vmem:[%s718 + $0x8] sm:$0x1]
      %v727 = vsel %vm477, %v574, %v726
      %728 = vst [vmem:[%s718 + $0x8] sm:$0x1] %v727
      %v729 = vld [vmem:[%s718 + $0xc] sm:$0xf]
      %v730 = vsel %vm720, %v581, %v729
      %731 = vst [vmem:[%s718 + $0xc] sm:$0xf] %v730
      %732 = vst.msk [vmem:[%s718 + $0x10] sm:$0xf] %vm724, %v590
      %v733 = vld [vmem:[%s718 + $0x14] sm:$0x1]
      %v734 = vsel %vm477, %v591, %v733
      %735 = vst [vmem:[%s718 + $0x14] sm:$0x1] %v734
      %v736 = vld [vmem:[%s718 + $0x18] sm:$0xf]
      %v737 = vsel %vm720, %v598, %v736
      %738 = vst [vmem:[%s718 + $0x18] sm:$0xf] %v737
      %739 = vst.msk [vmem:[%s718 + $0x1c] sm:$0xf] %vm724, %v607
      %v740 = vld [vmem:[%s718 + $0x20] sm:$0x1]
      %v741 = vsel %vm477, %v608, %v740
      %742 = vst [vmem:[%s718 + $0x20] sm:$0x1] %v741
      %v743 = vld [vmem:[%s718 + $0x24] sm:$0xf]
      %v744 = vsel %vm720, %v615, %v743
      %745 = vst [vmem:[%s718 + $0x24] sm:$0xf] %v744
      %746 = vst.msk [vmem:[%s718 + $0x28] sm:$0xf] %vm724, %v624
      %v747 = vld [vmem:[%s718 + $0x2c] sm:$0x1]
      %v748 = vsel %vm477, %v625, %v747
      %749 = vst [vmem:[%s718 + $0x2c] sm:$0x1] %v748
      %v750 = vld [vmem:[%s718 + $0x30] sm:$0xf]
      %v751 = vsel %vm720, %v632, %v750
      %752 = vst [vmem:[%s718 + $0x30] sm:$0xf] %v751
      %753 = vst.msk [vmem:[%s718 + $0x34] sm:$0xf] %vm724, %v641
      %v754 = vld [vmem:[%s718 + $0x38] sm:$0x1]
      %v755 = vsel %vm477, %v642, %v754
      %756 = vst [vmem:[%s718 + $0x38] sm:$0x1] %v755
      %v757 = vld [vmem:[%s718 + $0x3c] sm:$0xf]
      %v758 = vsel %vm720, %v649, %v757
      %759 = vst [vmem:[%s718 + $0x3c] sm:$0xf] %v758
      %760 = vst.msk [vmem:[%s718 + $0x40] sm:$0xf] %vm724, %v658
      %v761 = vld [vmem:[%s718 + $0x44] sm:$0x1]
      %v762 = vsel %vm477, %v659, %v761
      %763 = vst [vmem:[%s718 + $0x44] sm:$0x1] %v762
      %v764 = vld [vmem:[%s718 + $0x48] sm:$0xf]
      %v765 = vsel %vm720, %v666, %v764
      %766 = vst [vmem:[%s718 + $0x48] sm:$0xf] %v765
      %767 = vst.msk [vmem:[%s718 + $0x4c] sm:$0xf] %vm724, %v675
      %v768 = vld [vmem:[%s718 + $0x50] sm:$0x1]
      %v769 = vsel %vm477, %v676, %v768
      %770 = vst [vmem:[%s718 + $0x50] sm:$0x1] %v769
      %v771 = vld [vmem:[%s718 + $0x54] sm:$0xf]
      %v772 = vsel %vm720, %v683, %v771
      %773 = vst [vmem:[%s718 + $0x54] sm:$0xf] %v772
      %774 = vst.msk [vmem:[%s718 + $0x58] sm:$0xf] %vm724, %v692
      %v775 = vld [vmem:[%s718 + $0x5c] sm:$0x1]
      %v776 = vsel %vm477, %v693, %v775
      %777 = vst [vmem:[%s718 + $0x5c] sm:$0x1] %v776
      %p778 = scmp.eq.s32.totalorder %s24, 0
      // Predicated region
      $region53: #{c1_forward.1} parent=51 // pred_check
        %p779 = pneg %p778
      $region54: #{c1_forward.1} parent=51 // pred_check_branch
        %781 = sbr.rel (%p779) target = $region56
      $region55: #{c1_forward.1} parent=51 // pred_region
        %v782 = vld [vmem:[#allocation2] sm:$0xf]
        %v783 = vsel %vm720, 0, %v782
        %784 = vst [vmem:[#allocation2] sm:$0xf] %v783
        %785 = vst.msk [vmem:[#allocation2 + $0x4] sm:$0xf] %vm724, 0
        %v786 = vld [vmem:[#allocation2 + $0x8] sm:$0x1]
        %v787 = vsel %vm477, 0, %v786
        %788 = vst [vmem:[#allocation2 + $0x8] sm:$0x1] %v787
      $region56: #{c1_forward.1} parent=51 // pred_fallthru
        _
      %p789 = scmp.gt.s32.totalorder %s24, 0
      // Predicated region
      $region57: #{c1_forward.1} parent=51 // pred_check
        %p790 = pneg %p789
      $region58: #{c1_forward.1} parent=51 // pred_check_branch
        %792 = sbr.rel (%p790) target = $region60
      $region59: #{c1_forward.1} parent=51 // pred_region
        %v793 = vld [vmem:[%s441] sm:$0xf]
        %v794 = vld [vmem:[%s441 + $0x4] sm:$0xf]
        %v796 = vshrl.u32 %v793, 16
        %v798 = vrot.slane %v796, 7
        %v799 = vshll.u32 %v793, 16
        %v801 = vor.u32 %v798, %v799
        %v802 = vrot.slane %v798, 4
        %v804 = vshrl.u32 %v794, 16
        %v806 = vrot.slane %v804, 7
        %v807 = vshll.u32 %v794, 16
        %v809 = vor.u32 %v806, %v807
        %v810 = vsel %vm557, %v802, %v809
        %v811 = vrot.slane %v806, 4
        %v815 = vld [vmem:[#allocation2] sm:$0xf]
        %v816 = vsel %vm720, %v801, %v815
        %817 = vst [vmem:[#allocation2] sm:$0xf] %v816
        %818 = vst.msk [vmem:[#allocation2 + $0x4] sm:$0xf] %vm724, %v810
        %v819 = vld [vmem:[#allocation2 + $0x8] sm:$0x1]
        %v820 = vsel %vm477, %v811, %v819
        %821 = vst [vmem:[#allocation2 + $0x8] sm:$0x1] %v820
      $region60: #{c1_forward.1} parent=51 // pred_fallthru
        _
      %p822 = scmp.eq.s32.totalorder %s24, 1
      // Predicated region
      $region61: #{c1_forward.1} parent=51 // pred_check
        %p823 = pneg %p822
      $region62: #{c1_forward.1} parent=51 // pred_check_branch
        %825 = sbr.rel (%p823) target = $region64
      $region63: #{c1_forward.1} parent=51 // pred_region
        %s826 = scalar_lea.vmem [#allocation2], 108
        %v827 = vld [vmem:[%s826] sm:$0xf]
        %v828 = vsel %vm720, 0, %v827
        %829 = vst [vmem:[%s826] sm:$0xf] %v828
        %830 = vst.msk [vmem:[%s826 + $0x4] sm:$0xf] %vm724, 0
        %v831 = vld [vmem:[%s826 + $0x8] sm:$0x1]
        %v832 = vsel %vm477, 0, %v831
        %833 = vst [vmem:[%s826 + $0x8] sm:$0x1] %v832
      $region64: #{c1_forward.1} parent=51 // pred_fallthru
        _
      %p834 = scmp.lt.s32.totalorder %s24, 1
      // Predicated region
      $region65: #{c1_forward.1} parent=51 // pred_check
        %p835 = pneg %p834
      $region66: #{c1_forward.1} parent=51 // pred_check_branch
        %837 = sbr.rel (%p835) target = $region68
      $region67: #{c1_forward.1} parent=51 // pred_region
        %v838 = vld [vmem:[%s458] sm:$0xf]
        %v839 = vld [vmem:[%s458 + $0x4] sm:$0xf]
        %v841 = vshrl.u32 %v838, 16
        %v843 = vrot.slane %v841, 7
        %v844 = vshll.u32 %v838, 16
        %v846 = vor.u32 %v843, %v844
        %v847 = vrot.slane %v843, 4
        %v849 = vshrl.u32 %v839, 16
        %v851 = vrot.slane %v849, 7
        %v852 = vshll.u32 %v839, 16
        %v854 = vor.u32 %v851, %v852
        %v855 = vsel %vm557, %v847, %v854
        %v856 = vrot.slane %v851, 4
        %s860 = scalar_lea.vmem [#allocation2], 108
        %v861 = vld [vmem:[%s860] sm:$0xf]
        %v862 = vsel %vm720, %v846, %v861
        %863 = vst [vmem:[%s860] sm:$0xf] %v862
        %864 = vst.msk [vmem:[%s860 + $0x4] sm:$0xf] %vm724, %v855
        %v865 = vld [vmem:[%s860 + $0x8] sm:$0x1]
        %v866 = vsel %vm477, %v856, %v865
        %867 = vst [vmem:[%s860 + $0x8] sm:$0x1] %v866
      $region68: #{c1_forward.1} parent=51 // pred_fallthru
        _
      %v868 = vld [vmem:[#allocation2] sm:$0xf]
      %v869 = vld [vmem:[#allocation2 + $0x4] sm:$0xf]
      %v870 = vld [vmem:[#allocation2 + $0x8] sm:$0x1]
      %v871 = vld [vmem:[#allocation2 + $0xc] sm:$0xf]
      %v872 = vld [vmem:[#allocation2 + $0x10] sm:$0xf]
      %v873 = vld [vmem:[#allocation2 + $0x14] sm:$0x1]
      %v874 = vld [vmem:[#allocation2 + $0x18] sm:$0xf]
      %v875 = vld [vmem:[#allocation2 + $0x1c] sm:$0xf]
      %v876 = vld [vmem:[#allocation2 + $0x20] sm:$0x1]
      %v877 = vld [vmem:[#allocation2 + $0x24] sm:$0xf]
      %v878 = vld [vmem:[#allocation2 + $0x28] sm:$0xf]
      %v879 = vld [vmem:[#allocation2 + $0x2c] sm:$0x1]
      %v880 = vld [vmem:[#allocation2 + $0x30] sm:$0xf]
      %v881 = vld [vmem:[#allocation2 + $0x34] sm:$0xf]
      %v882 = vld [vmem:[#allocation2 + $0x38] sm:$0x1]
      %v883 = vld [vmem:[#allocation2 + $0x3c] sm:$0xf]
      %v884 = vld [vmem:[#allocation2 + $0x40] sm:$0xf]
      %v885 = vld [vmem:[#allocation2 + $0x44] sm:$0x1]
      %v886 = vld [vmem:[#allocation2 + $0x48] sm:$0xf]
      %v887 = vld [vmem:[#allocation2 + $0x4c] sm:$0xf]
      %v888 = vld [vmem:[#allocation2 + $0x50] sm:$0x1]
      %v889 = vld [vmem:[#allocation2 + $0x54] sm:$0xf]
      %v890 = vld [vmem:[#allocation2 + $0x58] sm:$0xf]
      %v891 = vld [vmem:[#allocation2 + $0x5c] sm:$0x1]
      %v892 = vld [vmem:[%s718] sm:$0xf]
      %v893 = vld [vmem:[%s718 + $0x4] sm:$0xf]
      %v894 = vld [vmem:[%s718 + $0x8] sm:$0x1]
      %v895 = vld [vmem:[%s718 + $0xc] sm:$0xf]
      %v896 = vld [vmem:[%s718 + $0x10] sm:$0xf]
      %v897 = vld [vmem:[%s718 + $0x14] sm:$0x1]
      %v898 = vld [vmem:[%s718 + $0x18] sm:$0xf]
      %v899 = vld [vmem:[%s718 + $0x1c] sm:$0xf]
      %v900 = vld [vmem:[%s718 + $0x20] sm:$0x1]
      %v901 = vld [vmem:[%s718 + $0x24] sm:$0xf]
      %v902 = vld [vmem:[%s718 + $0x28] sm:$0xf]
      %v903 = vld [vmem:[%s718 + $0x2c] sm:$0x1]
      %v904 = vld [vmem:[%s718 + $0x30] sm:$0xf]
      %v905 = vld [vmem:[%s718 + $0x34] sm:$0xf]
      %v906 = vld [vmem:[%s718 + $0x38] sm:$0x1]
      %v907 = vld [vmem:[%s718 + $0x3c] sm:$0xf]
      %v908 = vld [vmem:[%s718 + $0x40] sm:$0xf]
      %v909 = vld [vmem:[%s718 + $0x44] sm:$0x1]
      %v910 = vld [vmem:[%s718 + $0x48] sm:$0xf]
      %v911 = vld [vmem:[%s718 + $0x4c] sm:$0xf]
      %v912 = vld [vmem:[%s718 + $0x50] sm:$0x1]
      %v913 = vld [vmem:[%s718 + $0x54] sm:$0xf]
      %v914 = vld [vmem:[%s718 + $0x58] sm:$0xf]
      %v915 = vld [vmem:[%s718 + $0x5c] sm:$0x1]
      %s916 = scalar_lea.vmem [#allocation2], 24
      %v917 = vld [vmem:[%s916] sm:$0xf]
      %v918 = vld [vmem:[%s916 + $0x4] sm:$0xf]
      %v919 = vld [vmem:[%s916 + $0x8] sm:$0x1]
      %v920 = vld [vmem:[%s916 + $0xc] sm:$0xf]
      %v921 = vld [vmem:[%s916 + $0x10] sm:$0xf]
      %v922 = vld [vmem:[%s916 + $0x14] sm:$0x1]
      %v923 = vld [vmem:[%s916 + $0x18] sm:$0xf]
      %v924 = vld [vmem:[%s916 + $0x1c] sm:$0xf]
      %v925 = vld [vmem:[%s916 + $0x20] sm:$0x1]
      %v926 = vld [vmem:[%s916 + $0x24] sm:$0xf]
      %v927 = vld [vmem:[%s916 + $0x28] sm:$0xf]
      %v928 = vld [vmem:[%s916 + $0x2c] sm:$0x1]
      %v929 = vld [vmem:[%s916 + $0x30] sm:$0xf]
      %v930 = vld [vmem:[%s916 + $0x34] sm:$0xf]
      %v931 = vld [vmem:[%s916 + $0x38] sm:$0x1]
      %v932 = vld [vmem:[%s916 + $0x3c] sm:$0xf]
      %v933 = vld [vmem:[%s916 + $0x40] sm:$0xf]
      %v934 = vld [vmem:[%s916 + $0x44] sm:$0x1]
      %v935 = vld [vmem:[%s916 + $0x48] sm:$0xf]
      %v936 = vld [vmem:[%s916 + $0x4c] sm:$0xf]
      %v937 = vld [vmem:[%s916 + $0x50] sm:$0x1]
      %v938 = vld [vmem:[%s916 + $0x54] sm:$0xf]
      %v939 = vld [vmem:[%s916 + $0x58] sm:$0xf]
      %v940 = vld [vmem:[%s916 + $0x5c] sm:$0x1]
      %v965 = vunpack.c.l.b16 %v868
      %v966 = vunpack.c.l.b16 %v869
      %v967 = vunpack.c.l.b16 %v870
      %v968 = vunpack.c.l.b16 %v871
      %v969 = vunpack.c.l.b16 %v872
      %v970 = vunpack.c.l.b16 %v873
      %v971 = vunpack.c.l.b16 %v874
      %v972 = vunpack.c.l.b16 %v875
      %v973 = vunpack.c.l.b16 %v876
      %v974 = vunpack.c.l.b16 %v877
      %v975 = vunpack.c.l.b16 %v878
      %v976 = vunpack.c.l.b16 %v879
      %v977 = vunpack.c.l.b16 %v880
      %v978 = vunpack.c.l.b16 %v881
      %v979 = vunpack.c.l.b16 %v882
      %v980 = vunpack.c.l.b16 %v883
      %v981 = vunpack.c.l.b16 %v884
      %v982 = vunpack.c.l.b16 %v885
      %v983 = vunpack.c.l.b16 %v886
      %v984 = vunpack.c.l.b16 %v887
      %v985 = vunpack.c.l.b16 %v888
      %v986 = vunpack.c.l.b16 %v889
      %v987 = vunpack.c.l.b16 %v890
      %v988 = vunpack.c.l.b16 %v891
      %v989 = vpack.c.b16 %v966, %v965
      %v990 = vpack.c.b16 %v967, %v967
      %v991 = vpack.c.b16 %v969, %v968
      %v992 = vpack.c.b16 %v970, %v970
      %v993 = vpack.c.b16 %v972, %v971
      %v994 = vpack.c.b16 %v973, %v973
      %v995 = vpack.c.b16 %v975, %v974
      %v996 = vpack.c.b16 %v976, %v976
      %v997 = vpack.c.b16 %v978, %v977
      %v998 = vpack.c.b16 %v979, %v979
      %v999 = vpack.c.b16 %v981, %v980
      %v1000 = vpack.c.b16 %v982, %v982
      %v1001 = vpack.c.b16 %v984, %v983
      %v1002 = vpack.c.b16 %v985, %v985
      %v1003 = vpack.c.b16 %v987, %v986
      %v1004 = vpack.c.b16 %v988, %v988
      %v1029 = vunpack.c.l.b16 %v892
      %v1030 = vunpack.c.l.b16 %v893
      %v1031 = vunpack.c.l.b16 %v894
      %v1032 = vunpack.c.l.b16 %v895
      %v1033 = vunpack.c.l.b16 %v896
      %v1034 = vunpack.c.l.b16 %v897
      %v1035 = vunpack.c.l.b16 %v898
      %v1036 = vunpack.c.l.b16 %v899
      %v1037 = vunpack.c.l.b16 %v900
      %v1038 = vunpack.c.l.b16 %v901
      %v1039 = vunpack.c.l.b16 %v902
      %v1040 = vunpack.c.l.b16 %v903
      %v1041 = vunpack.c.l.b16 %v904
      %v1042 = vunpack.c.l.b16 %v905
      %v1043 = vunpack.c.l.b16 %v906
      %v1044 = vunpack.c.l.b16 %v907
      %v1045 = vunpack.c.l.b16 %v908
      %v1046 = vunpack.c.l.b16 %v909
      %v1047 = vunpack.c.l.b16 %v910
      %v1048 = vunpack.c.l.b16 %v911
      %v1049 = vunpack.c.l.b16 %v912
      %v1050 = vunpack.c.l.b16 %v913
      %v1051 = vunpack.c.l.b16 %v914
      %v1052 = vunpack.c.l.b16 %v915
      %v1053 = vpack.c.b16 %v1030, %v1029
      %v1054 = vpack.c.b16 %v1031, %v1031
      %v1055 = vpack.c.b16 %v1033, %v1032
      %v1056 = vpack.c.b16 %v1034, %v1034
      %v1057 = vpack.c.b16 %v1036, %v1035
      %v1058 = vpack.c.b16 %v1037, %v1037
      %v1059 = vpack.c.b16 %v1039, %v1038
      %v1060 = vpack.c.b16 %v1040, %v1040
      %v1061 = vpack.c.b16 %v1042, %v1041
      %v1062 = vpack.c.b16 %v1043, %v1043
      %v1063 = vpack.c.b16 %v1045, %v1044
      %v1064 = vpack.c.b16 %v1046, %v1046
      %v1065 = vpack.c.b16 %v1048, %v1047
      %v1066 = vpack.c.b16 %v1049, %v1049
      %v1067 = vpack.c.b16 %v1051, %v1050
      %v1068 = vpack.c.b16 %v1052, %v1052
      %1069 = vrot.lane.b32.xlu0 %v1053, 32
      %v1070 = vpop.permute.xlu0 %1069
      %1071 = vrot.lane.b32.xlu0 %v1054, 32
      %v1072 = vpop.permute.xlu0 %1071
      %1073 = vrot.lane.b32.xlu0 %v1055, 32
      %v1074 = vpop.permute.xlu0 %1073
      %1075 = vrot.lane.b32.xlu0 %v1056, 32
      %v1076 = vpop.permute.xlu0 %1075
      %1077 = vrot.lane.b32.xlu0 %v1057, 32
      %v1078 = vpop.permute.xlu0 %1077
      %1079 = vrot.lane.b32.xlu0 %v1058, 32
      %v1080 = vpop.permute.xlu0 %1079
      %1081 = vrot.lane.b32.xlu0 %v1059, 32
      %v1082 = vpop.permute.xlu0 %1081
      %1083 = vrot.lane.b32.xlu0 %v1060, 32
      %v1084 = vpop.permute.xlu0 %1083
      %1085 = vrot.lane.b32.xlu0 %v1061, 32
      %v1086 = vpop.permute.xlu0 %1085
      %1087 = vrot.lane.b32.xlu0 %v1062, 32
      %v1088 = vpop.permute.xlu0 %1087
      %1089 = vrot.lane.b32.xlu0 %v1063, 32
      %v1090 = vpop.permute.xlu0 %1089
      %1091 = vrot.lane.b32.xlu0 %v1064, 32
      %v1092 = vpop.permute.xlu0 %1091
      %1093 = vrot.lane.b32.xlu0 %v1065, 32
      %v1094 = vpop.permute.xlu0 %1093
      %1095 = vrot.lane.b32.xlu0 %v1066, 32
      %v1096 = vpop.permute.xlu0 %1095
      %1097 = vrot.lane.b32.xlu0 %v1067, 32
      %v1098 = vpop.permute.xlu0 %1097
      %1099 = vrot.lane.b32.xlu0 %v1068, 32
      %v1100 = vpop.permute.xlu0 %1099
      %v1125 = vunpack.c.l.b16 %v917
      %v1126 = vunpack.c.l.b16 %v918
      %v1127 = vunpack.c.l.b16 %v919
      %v1128 = vunpack.c.l.b16 %v920
      %v1129 = vunpack.c.l.b16 %v921
      %v1130 = vunpack.c.l.b16 %v922
      %v1131 = vunpack.c.l.b16 %v923
      %v1132 = vunpack.c.l.b16 %v924
      %v1133 = vunpack.c.l.b16 %v925
      %v1134 = vunpack.c.l.b16 %v926
      %v1135 = vunpack.c.l.b16 %v927
      %v1136 = vunpack.c.l.b16 %v928
      %v1137 = vunpack.c.l.b16 %v929
      %v1138 = vunpack.c.l.b16 %v930
      %v1139 = vunpack.c.l.b16 %v931
      %v1140 = vunpack.c.l.b16 %v932
      %v1141 = vunpack.c.l.b16 %v933
      %v1142 = vunpack.c.l.b16 %v934
      %v1143 = vunpack.c.l.b16 %v935
      %v1144 = vunpack.c.l.b16 %v936
      %v1145 = vunpack.c.l.b16 %v937
      %v1146 = vunpack.c.l.b16 %v938
      %v1147 = vunpack.c.l.b16 %v939
      %v1148 = vunpack.c.l.b16 %v940
      %v1149 = vpack.c.b16 %v1126, %v1125
      %v1150 = vpack.c.b16 %v1127, %v1127
      %v1151 = vpack.c.b16 %v1129, %v1128
      %v1152 = vpack.c.b16 %v1130, %v1130
      %v1153 = vpack.c.b16 %v1132, %v1131
      %v1154 = vpack.c.b16 %v1133, %v1133
      %v1155 = vpack.c.b16 %v1135, %v1134
      %v1156 = vpack.c.b16 %v1136, %v1136
      %v1157 = vpack.c.b16 %v1138, %v1137
      %v1158 = vpack.c.b16 %v1139, %v1139
      %v1159 = vpack.c.b16 %v1141, %v1140
      %v1160 = vpack.c.b16 %v1142, %v1142
      %v1161 = vpack.c.b16 %v1144, %v1143
      %v1162 = vpack.c.b16 %v1145, %v1145
      %v1163 = vpack.c.b16 %v1147, %v1146
      %v1164 = vpack.c.b16 %v1148, %v1148
      %1165 = vrot.lane.b32.xlu0 %v1149, 64
      %v1166 = vpop.permute.xlu0 %1165
      %1167 = vrot.lane.b32.xlu0 %v1150, 64
      %v1168 = vpop.permute.xlu0 %1167
      %1169 = vrot.lane.b32.xlu0 %v1151, 64
      %v1170 = vpop.permute.xlu0 %1169
      %1171 = vrot.lane.b32.xlu0 %v1152, 64
      %v1172 = vpop.permute.xlu0 %1171
      %1173 = vrot.lane.b32.xlu0 %v1153, 64
      %v1174 = vpop.permute.xlu0 %1173
      %1175 = vrot.lane.b32.xlu0 %v1154, 64
      %v1176 = vpop.permute.xlu0 %1175
      %1177 = vrot.lane.b32.xlu0 %v1155, 64
      %v1178 = vpop.permute.xlu0 %1177
      %1179 = vrot.lane.b32.xlu0 %v1156, 64
      %v1180 = vpop.permute.xlu0 %1179
      %1181 = vrot.lane.b32.xlu0 %v1157, 64
      %v1182 = vpop.permute.xlu0 %1181
      %1183 = vrot.lane.b32.xlu0 %v1158, 64
      %v1184 = vpop.permute.xlu0 %1183
      %1185 = vrot.lane.b32.xlu0 %v1159, 64
      %v1186 = vpop.permute.xlu0 %1185
      %1187 = vrot.lane.b32.xlu0 %v1160, 64
      %v1188 = vpop.permute.xlu0 %1187
      %1189 = vrot.lane.b32.xlu0 %v1161, 64
      %v1190 = vpop.permute.xlu0 %1189
      %1191 = vrot.lane.b32.xlu0 %v1162, 64
      %v1192 = vpop.permute.xlu0 %1191
      %1193 = vrot.lane.b32.xlu0 %v1163, 64
      %v1194 = vpop.permute.xlu0 %1193
      %1195 = vrot.lane.b32.xlu0 %v1164, 64
      %v1196 = vpop.permute.xlu0 %1195
      %vm1197 = vcmask 261120
      %v1200 = vsel %vm1197, %v989, %v1070
      %v1203 = vsel %vm1197, %v990, %v1072
      %v1206 = vsel %vm1197, %v991, %v1074
      %v1209 = vsel %vm1197, %v992, %v1076
      %v1212 = vsel %vm1197, %v993, %v1078
      %v1215 = vsel %vm1197, %v994, %v1080
      %v1218 = vsel %vm1197, %v995, %v1082
      %v1221 = vsel %vm1197, %v996, %v1084
      %v1224 = vsel %vm1197, %v997, %v1086
      %v1227 = vsel %vm1197, %v998, %v1088
      %v1230 = vsel %vm1197, %v999, %v1090
      %v1233 = vsel %vm1197, %v1000, %v1092
      %v1236 = vsel %vm1197, %v1001, %v1094
      %v1239 = vsel %vm1197, %v1002, %v1096
      %v1242 = vsel %vm1197, %v1003, %v1098
      %v1245 = vsel %vm1197, %v1004, %v1100
      %vm1246 = vcmask 523264
      %v1248 = vsel %vm1246, %v1200, %v1166
      %v1250 = vsel %vm1246, %v1203, %v1168
      %v1252 = vsel %vm1246, %v1206, %v1170
      %v1254 = vsel %vm1246, %v1209, %v1172
      %v1256 = vsel %vm1246, %v1212, %v1174
      %v1258 = vsel %vm1246, %v1215, %v1176
      %v1260 = vsel %vm1246, %v1218, %v1178
      %v1262 = vsel %vm1246, %v1221, %v1180
      %v1264 = vsel %vm1246, %v1224, %v1182
      %v1266 = vsel %vm1246, %v1227, %v1184
      %v1268 = vsel %vm1246, %v1230, %v1186
      %v1270 = vsel %vm1246, %v1233, %v1188
      %v1272 = vsel %vm1246, %v1236, %v1190
      %v1274 = vsel %vm1246, %v1239, %v1192
      %v1276 = vsel %vm1246, %v1242, %v1194
      %v1278 = vsel %vm1246, %v1245, %v1196
      %v1287 = vrot.slane %v1248, 1
      %v1288 = vrot.slane %v1248, 2
      %v1289 = vrot.slane %v1248, 3
      %v1290 = vrot.slane %v1248, 4
      %v1291 = vrot.slane %v1248, 5
      %v1292 = vrot.slane %v1248, 6
      %v1293 = vrot.slane %v1248, 7
      %v1294 = vrot.slane %v1252, 1
      %v1295 = vrot.slane %v1252, 2
      %v1296 = vrot.slane %v1252, 3
      %v1297 = vrot.slane %v1252, 4
      %v1298 = vrot.slane %v1252, 5
      %v1299 = vrot.slane %v1252, 6
      %v1300 = vrot.slane %v1252, 7
      %v1301 = vrot.slane %v1256, 1
      %v1302 = vrot.slane %v1256, 2
      %v1303 = vrot.slane %v1256, 3
      %v1304 = vrot.slane %v1256, 4
      %v1305 = vrot.slane %v1256, 5
      %v1306 = vrot.slane %v1256, 6
      %v1307 = vrot.slane %v1256, 7
      %v1308 = vrot.slane %v1260, 1
      %v1309 = vrot.slane %v1260, 2
      %v1310 = vrot.slane %v1260, 3
      %v1311 = vrot.slane %v1260, 4
      %v1312 = vrot.slane %v1260, 5
      %v1313 = vrot.slane %v1260, 6
      %v1314 = vrot.slane %v1260, 7
      %v1315 = vrot.slane %v1264, 1
      %v1316 = vrot.slane %v1264, 2
      %v1317 = vrot.slane %v1264, 3
      %v1318 = vrot.slane %v1264, 4
      %v1319 = vrot.slane %v1264, 5
      %v1320 = vrot.slane %v1264, 6
      %v1321 = vrot.slane %v1264, 7
      %v1322 = vrot.slane %v1268, 1
      %v1323 = vrot.slane %v1268, 2
      %v1324 = vrot.slane %v1268, 3
      %v1325 = vrot.slane %v1268, 4
      %v1326 = vrot.slane %v1268, 5
      %v1327 = vrot.slane %v1268, 6
      %v1328 = vrot.slane %v1268, 7
      %v1329 = vrot.slane %v1272, 1
      %v1330 = vrot.slane %v1272, 2
      %v1331 = vrot.slane %v1272, 3
      %v1332 = vrot.slane %v1272, 4
      %v1333 = vrot.slane %v1272, 5
      %v1334 = vrot.slane %v1272, 6
      %v1335 = vrot.slane %v1272, 7
      %v1336 = vrot.slane %v1276, 1
      %v1337 = vrot.slane %v1276, 2
      %v1338 = vrot.slane %v1276, 3
      %v1339 = vrot.slane %v1276, 4
      %v1340 = vrot.slane %v1276, 5
      %v1341 = vrot.slane %v1276, 6
      %v1342 = vrot.slane %v1276, 7
      %v1343 = vld [vmem:[%s3] sm:$0xff]
      %v1344 = vld [vmem:[%s3 + $0x8] sm:$0xf]
      %v1345 = vld [vmem:[%s3 + $0xc] sm:$0xff]
      %v1346 = vld [vmem:[%s3 + $0x14] sm:$0xf]
      %v1347 = vld [vmem:[%s3 + $0x18] sm:$0xff]
      %v1348 = vld [vmem:[%s3 + $0x20] sm:$0xf]
      %v1349 = vld [vmem:[%s3 + $0x24] sm:$0xff]
      %v1350 = vld [vmem:[%s3 + $0x2c] sm:$0xf]
      %v1351 = vld [vmem:[%s3 + $0x30] sm:$0xff]
      %v1352 = vld [vmem:[%s3 + $0x38] sm:$0xf]
      %v1353 = vld [vmem:[%s3 + $0x3c] sm:$0xff]
      %v1354 = vld [vmem:[%s3 + $0x44] sm:$0xf]
      %v1355 = vld [vmem:[%s3 + $0x48] sm:$0xff]
      %v1356 = vld [vmem:[%s3 + $0x50] sm:$0xf]
      %v1357 = vld [vmem:[%s3 + $0x54] sm:$0xff]
      %v1358 = vld [vmem:[%s3 + $0x5c] sm:$0xf]
      %v1359 = vld [vmem:[%s3 + $0x60] sm:$0xff]
      %v1360 = vld [vmem:[%s3 + $0x68] sm:$0xf]
      %v1361 = vld [vmem:[%s3 + $0x6c] sm:$0xff]
      %v1362 = vld [vmem:[%s3 + $0x74] sm:$0xf]
      %v1363 = vld [vmem:[%s3 + $0x78] sm:$0xff]
      %v1364 = vld [vmem:[%s3 + $0x80] sm:$0xf]
      %v1365 = vld [vmem:[%s3 + $0x84] sm:$0xff]
      %v1366 = vld [vmem:[%s3 + $0x8c] sm:$0xf]
      %1367 = vst [vmem:[#allocation1] ss:$9 sm:$0xff] %v1248
      %s1369 = scalar_lea.vmem [#allocation1], 1
      %1370 = vst [vmem:[%s1369] ss:$9 sm:$0xff] %v1287
      %s1372 = scalar_lea.vmem [#allocation1], 2
      %1373 = vst [vmem:[%s1372] ss:$9 sm:$0xff] %v1288
      %s1375 = scalar_lea.vmem [#allocation1], 3
      %1376 = vst [vmem:[%s1375] ss:$9 sm:$0xff] %v1289
      %s1378 = scalar_lea.vmem [#allocation1], 4
      %1379 = vst [vmem:[%s1378] ss:$9 sm:$0xff] %v1290
      %s1381 = scalar_lea.vmem [#allocation1], 5
      %1382 = vst [vmem:[%s1381] ss:$9 sm:$0xff] %v1291
      %s1384 = scalar_lea.vmem [#allocation1], 6
      %1385 = vst [vmem:[%s1384] ss:$9 sm:$0xff] %v1292
      %s1387 = scalar_lea.vmem [#allocation1], 7
      %1388 = vst [vmem:[%s1387] ss:$9 sm:$0xff] %v1293
      %v1389 = vld [vmem:[#allocation1] sm:$0xff]
      %1390 = vst [vmem:[#allocation1] ss:$9 sm:$0xff] %v1250
      %1391 = vst [vmem:[%s1369] ss:$9 sm:$0xff] %v1252
      %1393 = vst [vmem:[%s1372] ss:$9 sm:$0xff] %v1294
      %1395 = vst [vmem:[%s1375] ss:$9 sm:$0xff] %v1295
      %1397 = vst [vmem:[%s1378] ss:$9 sm:$0xff] %v1296
      %1399 = vst [vmem:[%s1381] ss:$9 sm:$0xff] %v1297
      %1401 = vst [vmem:[%s1384] ss:$9 sm:$0xff] %v1298
      %1403 = vst [vmem:[%s1387] ss:$9 sm:$0xff] %v1299
      %v1404 = vld [vmem:[#allocation1] sm:$0xff]
      %1406 = vst [vmem:[#allocation1] ss:$9 sm:$0xff] %v1300
      %1407 = vst [vmem:[%s1369] ss:$9 sm:$0xff] %v1254
      %1408 = vst [vmem:[%s1372] ss:$9 sm:$0xff] %v1256
      %1410 = vst [vmem:[%s1375] ss:$9 sm:$0xff] %v1301
      %1412 = vst [vmem:[%s1378] ss:$9 sm:$0xff] %v1302
      %1414 = vst [vmem:[%s1381] ss:$9 sm:$0xff] %v1303
      %1416 = vst [vmem:[%s1384] ss:$9 sm:$0xff] %v1304
      %1418 = vst [vmem:[%s1387] ss:$9 sm:$0xff] %v1305
      %v1419 = vld [vmem:[#allocation1] sm:$0xff]
      %1421 = vst [vmem:[#allocation1] ss:$9 sm:$0xff] %v1306
      %1423 = vst [vmem:[%s1369] ss:$9 sm:$0xff] %v1307
      %1424 = vst [vmem:[%s1372] ss:$9 sm:$0xff] %v1258
      %1425 = vst [vmem:[%s1375] ss:$9 sm:$0xff] %v1260
      %1427 = vst [vmem:[%s1378] ss:$9 sm:$0xff] %v1308
      %1429 = vst [vmem:[%s1381] ss:$9 sm:$0xff] %v1309
      %1431 = vst [vmem:[%s1384] ss:$9 sm:$0xff] %v1310
      %1433 = vst [vmem:[%s1387] ss:$9 sm:$0xff] %v1311
      %v1434 = vld [vmem:[#allocation1] sm:$0xff]
      %1436 = vst [vmem:[#allocation1] ss:$9 sm:$0xff] %v1312
      %1438 = vst [vmem:[%s1369] ss:$9 sm:$0xff] %v1313
      %1440 = vst [vmem:[%s1372] ss:$9 sm:$0xff] %v1314
      %1441 = vst [vmem:[%s1375] ss:$9 sm:$0xff] %v1262
      %1442 = vst [vmem:[%s1378] ss:$9 sm:$0xff] %v1264
      %1444 = vst [vmem:[%s1381] ss:$9 sm:$0xff] %v1315
      %1446 = vst [vmem:[%s1384] ss:$9 sm:$0xff] %v1316
      %1448 = vst [vmem:[%s1387] ss:$9 sm:$0xff] %v1317
      %v1449 = vld [vmem:[#allocation1] sm:$0xff]
      %1451 = vst [vmem:[#allocation1] ss:$9 sm:$0xff] %v1318
      %1453 = vst [vmem:[%s1369] ss:$9 sm:$0xff] %v1319
      %1455 = vst [vmem:[%s1372] ss:$9 sm:$0xff] %v1320
      %1457 = vst [vmem:[%s1375] ss:$9 sm:$0xff] %v1321
      %1458 = vst [vmem:[%s1378] ss:$9 sm:$0xff] %v1266
      %1459 = vst [vmem:[%s1381] ss:$9 sm:$0xff] %v1268
      %1461 = vst [vmem:[%s1384] ss:$9 sm:$0xff] %v1322
      %1463 = vst [vmem:[%s1387] ss:$9 sm:$0xff] %v1323
      %v1464 = vld [vmem:[#allocation1] sm:$0xff]
      %1466 = vst [vmem:[#allocation1] ss:$9 sm:$0xff] %v1324
      %1468 = vst [vmem:[%s1369] ss:$9 sm:$0xff] %v1325
      %1470 = vst [vmem:[%s1372] ss:$9 sm:$0xff] %v1326
      %1472 = vst [vmem:[%s1375] ss:$9 sm:$0xff] %v1327
      %1474 = vst [vmem:[%s1378] ss:$9 sm:$0xff] %v1328
      %1475 = vst [vmem:[%s1381] ss:$9 sm:$0xff] %v1270
      %1476 = vst [vmem:[%s1384] ss:$9 sm:$0xff] %v1272
      %1478 = vst [vmem:[%s1387] ss:$9 sm:$0xff] %v1329
      %v1479 = vld [vmem:[#allocation1] sm:$0xff]
      %1481 = vst [vmem:[#allocation1] ss:$9 sm:$0xff] %v1330
      %1483 = vst [vmem:[%s1369] ss:$9 sm:$0xff] %v1331
      %1485 = vst [vmem:[%s1372] ss:$9 sm:$0xff] %v1332
      %1487 = vst [vmem:[%s1375] ss:$9 sm:$0xff] %v1333
      %1489 = vst [vmem:[%s1378] ss:$9 sm:$0xff] %v1334
      %1491 = vst [vmem:[%s1381] ss:$9 sm:$0xff] %v1335
      %1492 = vst [vmem:[%s1384] ss:$9 sm:$0xff] %v1274
      %1493 = vst [vmem:[%s1387] ss:$9 sm:$0xff] %v1276
      %v1494 = vld [vmem:[#allocation1] sm:$0xff]
      %1496 = vst [vmem:[#allocation1] ss:$9 sm:$0xff] %v1336
      %1498 = vst [vmem:[%s1369] ss:$9 sm:$0xff] %v1337
      %1500 = vst [vmem:[%s1372] ss:$9 sm:$0xff] %v1338
      %1502 = vst [vmem:[%s1375] ss:$9 sm:$0xff] %v1339
      %1504 = vst [vmem:[%s1378] ss:$9 sm:$0xff] %v1340
      %1506 = vst [vmem:[%s1381] ss:$9 sm:$0xff] %v1341
      %1508 = vst [vmem:[%s1384] ss:$9 sm:$0xff] %v1342
      %1509 = vst [vmem:[%s1387] ss:$9 sm:$0xff] %v1278
      %v1510 = vld [vmem:[#allocation1] sm:$0xff]
      %v1535 = vunpack.c.l.b16 %v1343
      %v1536 = vunpack.c.h.b16 %v1343
      %v1537 = vunpack.c.l.b16 %v1344
      %v1538 = vunpack.c.l.b16 %v1345
      %v1539 = vunpack.c.h.b16 %v1345
      %v1540 = vunpack.c.l.b16 %v1346
      %v1541 = vunpack.c.l.b16 %v1347
      %v1542 = vunpack.c.h.b16 %v1347
      %v1543 = vunpack.c.l.b16 %v1348
      %v1544 = vunpack.c.l.b16 %v1349
      %v1545 = vunpack.c.h.b16 %v1349
      %v1546 = vunpack.c.l.b16 %v1350
      %v1547 = vunpack.c.l.b16 %v1351
      %v1548 = vunpack.c.h.b16 %v1351
      %v1549 = vunpack.c.l.b16 %v1352
      %v1550 = vunpack.c.l.b16 %v1353
      %v1551 = vunpack.c.h.b16 %v1353
      %v1552 = vunpack.c.l.b16 %v1354
      %v1553 = vunpack.c.l.b16 %v1355
      %v1554 = vunpack.c.h.b16 %v1355
      %v1555 = vunpack.c.l.b16 %v1356
      %v1556 = vunpack.c.l.b16 %v1357
      %v1557 = vunpack.c.h.b16 %v1357
      %v1558 = vunpack.c.l.b16 %v1358
      %v1559 = vunpack.c.l.b16 %v1359
      %v1560 = vunpack.c.h.b16 %v1359
      %v1561 = vunpack.c.l.b16 %v1360
      %v1562 = vunpack.c.l.b16 %v1361
      %v1563 = vunpack.c.h.b16 %v1361
      %v1564 = vunpack.c.l.b16 %v1362
      %v1565 = vunpack.c.l.b16 %v1363
      %v1566 = vunpack.c.h.b16 %v1363
      %v1567 = vunpack.c.l.b16 %v1364
      %v1568 = vunpack.c.l.b16 %v1365
      %v1569 = vunpack.c.h.b16 %v1365
      %v1570 = vunpack.c.l.b16 %v1366
      %v1571 = vpack.c.b16 %v1538, %v1535
      %v1572 = vpack.c.b16 %v1539, %v1536
      %v1573 = vpack.c.b16 %v1540, %v1537
      %v1574 = vpack.c.b16 %v1544, %v1541
      %v1575 = vpack.c.b16 %v1545, %v1542
      %v1576 = vpack.c.b16 %v1546, %v1543
      %v1577 = vpack.c.b16 %v1550, %v1547
      %v1578 = vpack.c.b16 %v1551, %v1548
      %v1579 = vpack.c.b16 %v1552, %v1549
      %v1580 = vpack.c.b16 %v1556, %v1553
      %v1581 = vpack.c.b16 %v1557, %v1554
      %v1582 = vpack.c.b16 %v1558, %v1555
      %v1583 = vpack.c.b16 %v1562, %v1559
      %v1584 = vpack.c.b16 %v1563, %v1560
      %v1585 = vpack.c.b16 %v1564, %v1561
      %v1586 = vpack.c.b16 %v1568, %v1565
      %v1587 = vpack.c.b16 %v1569, %v1566
      %v1588 = vpack.c.b16 %v1570, %v1567
      %vm1607 = vcmask 785408
      %v1608 = vsel %vm1607, %v1389, 0
      %v1610 = vsel %vm1607, %v1404, 0
      %v1612 = vsel %vm1607, %v1419, 0
      %v1614 = vsel %vm1607, %v1434, 0
      %v1616 = vsel %vm1607, %v1449, 0
      %v1618 = vsel %vm1607, %v1464, 0
      %v1620 = vsel %vm1607, %v1479, 0
      %v1622 = vsel %vm1607, %v1494, 0
      %v1624 = vsel %vm1607, %v1510, 0
      %1626 = vmatpush.bf16.msra.mxu0 0
      %1627 = vmatpush.bf16.msra.mxu0 0
      %1628 = vmatpush.bf16.msra.mxu0 %v1586
      %1629 = vmatpush.bf16.msra.mxu0 %v1583
      %1630 = vmatpush.bf16.msra.mxu0 %v1580
      %1631 = vmatpush.bf16.msra.mxu0 %v1577
      %1632 = vmatpush.bf16.msra.mxu0 %v1574
      %1633 = vmatpush.bf16.msra.mxu0 %v1571
      %1634 = vmatmul.bf16.gmra.mxu0 %v1608
      %v1635 = vpop.f32.mrf.mxu0
      %v1636 = vadd.f32 0.0, %v1635
      %v1637 = vpop.f32.mrf.mxu0
      %v1638 = vadd.f32 0.0, %v1637
      %1639 = vmatmul.bf16.gmra.mxu0 %v1610
      %v1640 = vpop.f32.mrf.mxu0
      %v1641 = vadd.f32 0.0, %v1640
      %v1642 = vpop.f32.mrf.mxu0
      %v1643 = vadd.f32 0.0, %v1642
      %1644 = vmatmul.bf16.gmra.mxu0 %v1612
      %v1645 = vpop.f32.mrf.mxu0
      %v1646 = vadd.f32 0.0, %v1645
      %v1647 = vpop.f32.mrf.mxu0
      %v1648 = vadd.f32 0.0, %v1647
      %1649 = vmatmul.bf16.gmra.mxu0 %v1614
      %v1650 = vpop.f32.mrf.mxu0
      %v1651 = vadd.f32 0.0, %v1650
      %v1652 = vpop.f32.mrf.mxu0
      %v1653 = vadd.f32 0.0, %v1652
      %1654 = vmatmul.bf16.gmra.mxu0 %v1616
      %v1655 = vpop.f32.mrf.mxu0
      %v1656 = vadd.f32 0.0, %v1655
      %v1657 = vpop.f32.mrf.mxu0
      %v1658 = vadd.f32 0.0, %v1657
      %1659 = vmatmul.bf16.gmra.mxu0 %v1618
      %v1660 = vpop.f32.mrf.mxu0
      %v1661 = vadd.f32 0.0, %v1660
      %v1662 = vpop.f32.mrf.mxu0
      %v1663 = vadd.f32 0.0, %v1662
      %1664 = vmatmul.bf16.gmra.mxu0 %v1620
      %v1665 = vpop.f32.mrf.mxu0
      %v1666 = vadd.f32 0.0, %v1665
      %v1667 = vpop.f32.mrf.mxu0
      %v1668 = vadd.f32 0.0, %v1667
      %1669 = vmatmul.bf16.gmra.mxu0 %v1622
      %v1670 = vpop.f32.mrf.mxu0
      %v1671 = vadd.f32 0.0, %v1670
      %v1672 = vpop.f32.mrf.mxu0
      %v1673 = vadd.f32 0.0, %v1672
      %1674 = vmatmul.bf16.gmra.mxu0 %v1624
      %v1675 = vpop.f32.mrf.mxu0
      %v1676 = vadd.f32 0.0, %v1675
      %v1677 = vpop.f32.mrf.mxu0
      %v1678 = vadd.f32 0.0, %v1677
      %1679 = vdwg.mxu0
      %1680 = vmatpush.bf16.msra.mxu0 0
      %1681 = vmatpush.bf16.msra.mxu0 0
      %1682 = vmatpush.bf16.msra.mxu0 %v1587
      %1683 = vmatpush.bf16.msra.mxu0 %v1584
      %1684 = vmatpush.bf16.msra.mxu0 %v1581
      %1685 = vmatpush.bf16.msra.mxu0 %v1578
      %1686 = vmatpush.bf16.msra.mxu0 %v1575
      %1687 = vmatpush.bf16.msra.mxu0 %v1572
      %1688 = vmatmul.bf16.gmra.mxu0 %v1608
      %v1689 = vpop.f32.mrf.mxu0
      %v1690 = vadd.f32 0.0, %v1689
      %v1691 = vpop.f32.mrf.mxu0
      %v1692 = vadd.f32 0.0, %v1691
      %1693 = vmatmul.bf16.gmra.mxu0 %v1610
      %v1694 = vpop.f32.mrf.mxu0
      %v1695 = vadd.f32 0.0, %v1694
      %v1696 = vpop.f32.mrf.mxu0
      %v1697 = vadd.f32 0.0, %v1696
      %1698 = vmatmul.bf16.gmra.mxu0 %v1612
      %v1699 = vpop.f32.mrf.mxu0
      %v1700 = vadd.f32 0.0, %v1699
      %v1701 = vpop.f32.mrf.mxu0
      %v1702 = vadd.f32 0.0, %v1701
      %1703 = vmatmul.bf16.gmra.mxu0 %v1614
      %v1704 = vpop.f32.mrf.mxu0
      %v1705 = vadd.f32 0.0, %v1704
      %v1706 = vpop.f32.mrf.mxu0
      %v1707 = vadd.f32 0.0, %v1706
      %1708 = vmatmul.bf16.gmra.mxu0 %v1616
      %v1709 = vpop.f32.mrf.mxu0
      %v1710 = vadd.f32 0.0, %v1709
      %v1711 = vpop.f32.mrf.mxu0
      %v1712 = vadd.f32 0.0, %v1711
      %1713 = vmatmul.bf16.gmra.mxu0 %v1618
      %v1714 = vpop.f32.mrf.mxu0
      %v1715 = vadd.f32 0.0, %v1714
      %v1716 = vpop.f32.mrf.mxu0
      %v1717 = vadd.f32 0.0, %v1716
      %1718 = vmatmul.bf16.gmra.mxu0 %v1620
      %v1719 = vpop.f32.mrf.mxu0
      %v1720 = vadd.f32 0.0, %v1719
      %v1721 = vpop.f32.mrf.mxu0
      %v1722 = vadd.f32 0.0, %v1721
      %1723 = vmatmul.bf16.gmra.mxu0 %v1622
      %v1724 = vpop.f32.mrf.mxu0
      %v1725 = vadd.f32 0.0, %v1724
      %v1726 = vpop.f32.mrf.mxu0
      %v1727 = vadd.f32 0.0, %v1726
      %1728 = vmatmul.bf16.gmra.mxu0 %v1624
      %v1729 = vpop.f32.mrf.mxu0
      %v1730 = vadd.f32 0.0, %v1729
      %v1731 = vpop.f32.mrf.mxu0
      %v1732 = vadd.f32 0.0, %v1731
      %1733 = vdwg.mxu0
      %1734 = vmatpush.bf16.msra.mxu0 0
      %1735 = vmatpush.bf16.msra.mxu0 0
      %1736 = vmatpush.bf16.msra.mxu0 %v1588
      %1737 = vmatpush.bf16.msra.mxu0 %v1585
      %1738 = vmatpush.bf16.msra.mxu0 %v1582
      %1739 = vmatpush.bf16.msra.mxu0 %v1579
      %1740 = vmatpush.bf16.msra.mxu0 %v1576
      %1741 = vmatpush.bf16.msra.mxu0 %v1573
      %1742 = vmatmul.bf16.gmra.mxu0 %v1608
      %v1743 = vpop.f32.mrf.mxu0
      %v1744 = vadd.f32 0.0, %v1743
      %v1745 = vpop.f32.mrf.mxu0
      %v1746 = vadd.f32 0.0, %v1745
      %1747 = vmatmul.bf16.gmra.mxu0 %v1610
      %v1748 = vpop.f32.mrf.mxu0
      %v1749 = vadd.f32 0.0, %v1748
      %v1750 = vpop.f32.mrf.mxu0
      %v1751 = vadd.f32 0.0, %v1750
      %1752 = vmatmul.bf16.gmra.mxu0 %v1612
      %v1753 = vpop.f32.mrf.mxu0
      %v1754 = vadd.f32 0.0, %v1753
      %v1755 = vpop.f32.mrf.mxu0
      %v1756 = vadd.f32 0.0, %v1755
      %1757 = vmatmul.bf16.gmra.mxu0 %v1614
      %v1758 = vpop.f32.mrf.mxu0
      %v1759 = vadd.f32 0.0, %v1758
      %v1760 = vpop.f32.mrf.mxu0
      %v1761 = vadd.f32 0.0, %v1760
      %1762 = vmatmul.bf16.gmra.mxu0 %v1616
      %v1763 = vpop.f32.mrf.mxu0
      %v1764 = vadd.f32 0.0, %v1763
      %v1765 = vpop.f32.mrf.mxu0
      %v1766 = vadd.f32 0.0, %v1765
      %1767 = vmatmul.bf16.gmra.mxu0 %v1618
      %v1768 = vpop.f32.mrf.mxu0
      %v1769 = vadd.f32 0.0, %v1768
      %v1770 = vpop.f32.mrf.mxu0
      %v1771 = vadd.f32 0.0, %v1770
      %1772 = vmatmul.bf16.gmra.mxu0 %v1620
      %v1773 = vpop.f32.mrf.mxu0
      %v1774 = vadd.f32 0.0, %v1773
      %v1775 = vpop.f32.mrf.mxu0
      %v1776 = vadd.f32 0.0, %v1775
      %1777 = vmatmul.bf16.gmra.mxu0 %v1622
      %v1778 = vpop.f32.mrf.mxu0
      %v1779 = vadd.f32 0.0, %v1778
      %v1780 = vpop.f32.mrf.mxu0
      %v1781 = vadd.f32 0.0, %v1780
      %1782 = vmatmul.bf16.gmra.mxu0 %v1624
      %v1783 = vpop.f32.mrf.mxu0
      %v1784 = vadd.f32 0.0, %v1783
      %v1785 = vpop.f32.mrf.mxu0
      %v1786 = vadd.f32 0.0, %v1785
      %1787 = vdwg.mxu0
      %v1842 = vrot.slane %v1690, 6
      %v1843 = vrot.slane %v1744, 4
      %v1844 = vrot.slane %v1692, 6
      %v1845 = vrot.slane %v1746, 4
      %v1846 = vrot.slane %v1695, 6
      %v1847 = vrot.slane %v1749, 4
      %v1848 = vrot.slane %v1697, 6
      %v1849 = vrot.slane %v1751, 4
      %v1850 = vrot.slane %v1700, 6
      %v1851 = vrot.slane %v1754, 4
      %v1852 = vrot.slane %v1702, 6
      %v1853 = vrot.slane %v1756, 4
      %v1854 = vrot.slane %v1705, 6
      %v1855 = vrot.slane %v1759, 4
      %v1856 = vrot.slane %v1707, 6
      %v1857 = vrot.slane %v1761, 4
      %v1858 = vrot.slane %v1710, 6
      %v1859 = vrot.slane %v1764, 4
      %v1860 = vrot.slane %v1712, 6
      %v1861 = vrot.slane %v1766, 4
      %v1862 = vrot.slane %v1715, 6
      %v1863 = vrot.slane %v1769, 4
      %v1864 = vrot.slane %v1717, 6
      %v1865 = vrot.slane %v1771, 4
      %v1866 = vrot.slane %v1720, 6
      %v1867 = vrot.slane %v1774, 4
      %v1868 = vrot.slane %v1722, 6
      %v1869 = vrot.slane %v1776, 4
      %v1870 = vrot.slane %v1725, 6
      %v1871 = vrot.slane %v1779, 4
      %v1872 = vrot.slane %v1727, 6
      %v1873 = vrot.slane %v1781, 4
      %v1874 = vrot.slane %v1730, 6
      %v1875 = vrot.slane %v1784, 4
      %v1876 = vrot.slane %v1732, 6
      %v1877 = vrot.slane %v1786, 4
      %vm1878 = vcmask 1041408
      %v1879 = vsel %vm1878, %v1636, %v1842
      %vm1880 = vcmask 1043456
      %v1881 = vsel %vm1880, %v1879, %v1843
      %vm1882 = vcmask 1043458
      %v1883 = vsel %vm1882, %v1636, %v1842
      %vm1884 = vcmask 1045506
      %v1885 = vsel %vm1884, %v1883, %v1843
      %v1886 = vrot.slane %v1885, 2
      %vm1887 = vcmask 1045508
      %v1888 = vsel %vm1887, %v1636, %v1842
      %v1889 = vsel %vm1880, %v1843, %v1888
      %v1890 = vrot.slane %v1889, 4
      %vm1891 = vcmask 1045504
      %v1892 = vsel %vm1891, %v1842, %v1636
      %v1893 = vsel %vm1884, %v1843, %v1892
      %v1894 = vrot.slane %v1893, 6
      %v1895 = vsel %vm1878, %v1638, %v1844
      %v1896 = vsel %vm1880, %v1895, %v1845
      %v1897 = vsel %vm1882, %v1638, %v1844
      %v1898 = vsel %vm1884, %v1897, %v1845
      %v1899 = vrot.slane %v1898, 2
      %v1900 = vsel %vm1887, %v1638, %v1844
      %v1901 = vsel %vm1880, %v1845, %v1900
      %v1902 = vrot.slane %v1901, 4
      %v1903 = vsel %vm1891, %v1844, %v1638
      %v1904 = vsel %vm1884, %v1845, %v1903
      %v1905 = vrot.slane %v1904, 6
      %v1906 = vsel %vm1878, %v1641, %v1846
      %v1907 = vsel %vm1880, %v1906, %v1847
      %v1908 = vsel %vm1882, %v1641, %v1846
      %v1909 = vsel %vm1884, %v1908, %v1847
      %v1910 = vrot.slane %v1909, 2
      %v1911 = vsel %vm1887, %v1641, %v1846
      %v1912 = vsel %vm1880, %v1847, %v1911
      %v1913 = vrot.slane %v1912, 4
      %v1914 = vsel %vm1891, %v1846, %v1641
      %v1915 = vsel %vm1884, %v1847, %v1914
      %v1916 = vrot.slane %v1915, 6
      %v1917 = vsel %vm1878, %v1643, %v1848
      %v1918 = vsel %vm1880, %v1917, %v1849
      %v1919 = vsel %vm1882, %v1643, %v1848
      %v1920 = vsel %vm1884, %v1919, %v1849
      %v1921 = vrot.slane %v1920, 2
      %v1922 = vsel %vm1887, %v1643, %v1848
      %v1923 = vsel %vm1880, %v1849, %v1922
      %v1924 = vrot.slane %v1923, 4
      %v1925 = vsel %vm1891, %v1848, %v1643
      %v1926 = vsel %vm1884, %v1849, %v1925
      %v1927 = vrot.slane %v1926, 6
      %v1928 = vsel %vm1878, %v1646, %v1850
      %v1929 = vsel %vm1880, %v1928, %v1851
      %v1930 = vsel %vm1882, %v1646, %v1850
      %v1931 = vsel %vm1884, %v1930, %v1851
      %v1932 = vrot.slane %v1931, 2
      %v1933 = vsel %vm1887, %v1646, %v1850
      %v1934 = vsel %vm1880, %v1851, %v1933
      %v1935 = vrot.slane %v1934, 4
      %v1936 = vsel %vm1891, %v1850, %v1646
      %v1937 = vsel %vm1884, %v1851, %v1936
      %v1938 = vrot.slane %v1937, 6
      %v1939 = vsel %vm1878, %v1648, %v1852
      %v1940 = vsel %vm1880, %v1939, %v1853
      %v1941 = vsel %vm1882, %v1648, %v1852
      %v1942 = vsel %vm1884, %v1941, %v1853
      %v1943 = vrot.slane %v1942, 2
      %v1944 = vsel %vm1887, %v1648, %v1852
      %v1945 = vsel %vm1880, %v1853, %v1944
      %v1946 = vrot.slane %v1945, 4
      %v1947 = vsel %vm1891, %v1852, %v1648
      %v1948 = vsel %vm1884, %v1853, %v1947
      %v1949 = vrot.slane %v1948, 6
      %v1950 = vsel %vm1878, %v1651, %v1854
      %v1951 = vsel %vm1880, %v1950, %v1855
      %v1952 = vsel %vm1882, %v1651, %v1854
      %v1953 = vsel %vm1884, %v1952, %v1855
      %v1954 = vrot.slane %v1953, 2
      %v1955 = vsel %vm1887, %v1651, %v1854
      %v1956 = vsel %vm1880, %v1855, %v1955
      %v1957 = vrot.slane %v1956, 4
      %v1958 = vsel %vm1891, %v1854, %v1651
      %v1959 = vsel %vm1884, %v1855, %v1958
      %v1960 = vrot.slane %v1959, 6
      %v1961 = vsel %vm1878, %v1653, %v1856
      %v1962 = vsel %vm1880, %v1961, %v1857
      %v1963 = vsel %vm1882, %v1653, %v1856
      %v1964 = vsel %vm1884, %v1963, %v1857
      %v1965 = vrot.slane %v1964, 2
      %v1966 = vsel %vm1887, %v1653, %v1856
      %v1967 = vsel %vm1880, %v1857, %v1966
      %v1968 = vrot.slane %v1967, 4
      %v1969 = vsel %vm1891, %v1856, %v1653
      %v1970 = vsel %vm1884, %v1857, %v1969
      %v1971 = vrot.slane %v1970, 6
      %v1972 = vsel %vm1878, %v1656, %v1858
      %v1973 = vsel %vm1880, %v1972, %v1859
      %v1974 = vsel %vm1882, %v1656, %v1858
      %v1975 = vsel %vm1884, %v1974, %v1859
      %v1976 = vrot.slane %v1975, 2
      %v1977 = vsel %vm1887, %v1656, %v1858
      %v1978 = vsel %vm1880, %v1859, %v1977
      %v1979 = vrot.slane %v1978, 4
      %v1980 = vsel %vm1891, %v1858, %v1656
      %v1981 = vsel %vm1884, %v1859, %v1980
      %v1982 = vrot.slane %v1981, 6
      %v1983 = vsel %vm1878, %v1658, %v1860
      %v1984 = vsel %vm1880, %v1983, %v1861
      %v1985 = vsel %vm1882, %v1658, %v1860
      %v1986 = vsel %vm1884, %v1985, %v1861
      %v1987 = vrot.slane %v1986, 2
      %v1988 = vsel %vm1887, %v1658, %v1860
      %v1989 = vsel %vm1880, %v1861, %v1988
      %v1990 = vrot.slane %v1989, 4
      %v1991 = vsel %vm1891, %v1860, %v1658
      %v1992 = vsel %vm1884, %v1861, %v1991
      %v1993 = vrot.slane %v1992, 6
      %v1994 = vsel %vm1878, %v1661, %v1862
      %v1995 = vsel %vm1880, %v1994, %v1863
      %v1996 = vsel %vm1882, %v1661, %v1862
      %v1997 = vsel %vm1884, %v1996, %v1863
      %v1998 = vrot.slane %v1997, 2
      %v1999 = vsel %vm1887, %v1661, %v1862
      %v2000 = vsel %vm1880, %v1863, %v1999
      %v2001 = vrot.slane %v2000, 4
      %v2002 = vsel %vm1891, %v1862, %v1661
      %v2003 = vsel %vm1884, %v1863, %v2002
      %v2004 = vrot.slane %v2003, 6
      %v2005 = vsel %vm1878, %v1663, %v1864
      %v2006 = vsel %vm1880, %v2005, %v1865
      %v2007 = vsel %vm1882, %v1663, %v1864
      %v2008 = vsel %vm1884, %v2007, %v1865
      %v2009 = vrot.slane %v2008, 2
      %v2010 = vsel %vm1887, %v1663, %v1864
      %v2011 = vsel %vm1880, %v1865, %v2010
      %v2012 = vrot.slane %v2011, 4
      %v2013 = vsel %vm1891, %v1864, %v1663
      %v2014 = vsel %vm1884, %v1865, %v2013
      %v2015 = vrot.slane %v2014, 6
      %v2016 = vsel %vm1878, %v1666, %v1866
      %v2017 = vsel %vm1880, %v2016, %v1867
      %v2018 = vsel %vm1882, %v1666, %v1866
      %v2019 = vsel %vm1884, %v2018, %v1867
      %v2020 = vrot.slane %v2019, 2
      %v2021 = vsel %vm1887, %v1666, %v1866
      %v2022 = vsel %vm1880, %v1867, %v2021
      %v2023 = vrot.slane %v2022, 4
      %v2024 = vsel %vm1891, %v1866, %v1666
      %v2025 = vsel %vm1884, %v1867, %v2024
      %v2026 = vrot.slane %v2025, 6
      %v2027 = vsel %vm1878, %v1668, %v1868
      %v2028 = vsel %vm1880, %v2027, %v1869
      %v2029 = vsel %vm1882, %v1668, %v1868
      %v2030 = vsel %vm1884, %v2029, %v1869
      %v2031 = vrot.slane %v2030, 2
      %v2032 = vsel %vm1887, %v1668, %v1868
      %v2033 = vsel %vm1880, %v1869, %v2032
      %v2034 = vrot.slane %v2033, 4
      %v2035 = vsel %vm1891, %v1868, %v1668
      %v2036 = vsel %vm1884, %v1869, %v2035
      %v2037 = vrot.slane %v2036, 6
      %v2038 = vsel %vm1878, %v1671, %v1870
      %v2039 = vsel %vm1880, %v2038, %v1871
      %v2040 = vsel %vm1882, %v1671, %v1870
      %v2041 = vsel %vm1884, %v2040, %v1871
      %v2042 = vrot.slane %v2041, 2
      %v2043 = vsel %vm1887, %v1671, %v1870
      %v2044 = vsel %vm1880, %v1871, %v2043
      %v2045 = vrot.slane %v2044, 4
      %v2046 = vsel %vm1891, %v1870, %v1671
      %v2047 = vsel %vm1884, %v1871, %v2046
      %v2048 = vrot.slane %v2047, 6
      %v2049 = vsel %vm1878, %v1673, %v1872
      %v2050 = vsel %vm1880, %v2049, %v1873
      %v2051 = vsel %vm1882, %v1673, %v1872
      %v2052 = vsel %vm1884, %v2051, %v1873
      %v2053 = vrot.slane %v2052, 2
      %v2054 = vsel %vm1887, %v1673, %v1872
      %v2055 = vsel %vm1880, %v1873, %v2054
      %v2056 = vrot.slane %v2055, 4
      %v2057 = vsel %vm1891, %v1872, %v1673
      %v2058 = vsel %vm1884, %v1873, %v2057
      %v2059 = vrot.slane %v2058, 6
      %v2060 = vsel %vm1878, %v1676, %v1874
      %v2061 = vsel %vm1880, %v2060, %v1875
      %v2062 = vsel %vm1882, %v1676, %v1874
      %v2063 = vsel %vm1884, %v2062, %v1875
      %v2064 = vrot.slane %v2063, 2
      %v2065 = vsel %vm1887, %v1676, %v1874
      %v2066 = vsel %vm1880, %v1875, %v2065
      %v2067 = vrot.slane %v2066, 4
      %v2068 = vsel %vm1891, %v1874, %v1676
      %v2069 = vsel %vm1884, %v1875, %v2068
      %v2070 = vrot.slane %v2069, 6
      %v2071 = vsel %vm1878, %v1678, %v1876
      %v2072 = vsel %vm1880, %v2071, %v1877
      %v2073 = vsel %vm1882, %v1678, %v1876
      %v2074 = vsel %vm1884, %v2073, %v1877
      %v2075 = vrot.slane %v2074, 2
      %v2076 = vsel %vm1887, %v1678, %v1876
      %v2077 = vsel %vm1880, %v1877, %v2076
      %v2078 = vrot.slane %v2077, 4
      %v2079 = vsel %vm1891, %v1876, %v1678
      %v2080 = vsel %vm1884, %v1877, %v2079
      %v2081 = vrot.slane %v2080, 6
      %vm2146 = vcmask 1040384
      %vm2147 = vcmask 1042434
      %vm2148 = vmor %vm2146, %vm2147
      %vm2149 = vcmask 1044484
      %vm2150 = vmor %vm2148, %vm2149
      %vm2151 = vcmask 1046534
      %vm2152 = vmor %vm2150, %vm2151
      %v2153 = vrot.slane %v1881, 7
      %v2154 = vrot.slane %v2153, 2
      %v2155 = vrot.slane %v1886, 7
      %v2156 = vsel %vm2152, %v2154, %v2155
      %v2157 = vrot.slane %v2155, 2
      %v2158 = vrot.slane %v1890, 7
      %v2159 = vsel %vm2152, %v2157, %v2158
      %v2160 = vrot.slane %v2158, 2
      %v2161 = vrot.slane %v1894, 7
      %v2162 = vsel %vm2152, %v2160, %v2161
      %v2163 = vrot.slane %v2161, 2
      %v2164 = vrot.slane %v1896, 7
      %v2165 = vsel %vm2152, %v2163, %v2164
      %v2166 = vrot.slane %v2164, 2
      %v2167 = vrot.slane %v1899, 7
      %v2168 = vsel %vm2152, %v2166, %v2167
      %v2169 = vrot.slane %v2167, 2
      %v2170 = vrot.slane %v1902, 7
      %v2171 = vsel %vm2152, %v2169, %v2170
      %v2172 = vrot.slane %v2170, 2
      %v2173 = vrot.slane %v1905, 7
      %v2174 = vsel %vm2152, %v2172, %v2173
      %v2175 = vrot.slane %v2173, 2
      %v2176 = vrot.slane %v1907, 7
      %v2177 = vsel %vm2152, %v2175, %v2176
      %v2178 = vrot.slane %v1910, 7
      %v2179 = vrot.slane %v2178, 2
      %v2180 = vrot.slane %v1913, 7
      %v2181 = vsel %vm2152, %v2179, %v2180
      %v2182 = vrot.slane %v2180, 2
      %v2183 = vrot.slane %v1916, 7
      %v2184 = vsel %vm2152, %v2182, %v2183
      %v2185 = vrot.slane %v2183, 2
      %v2186 = vrot.slane %v1918, 7
      %v2187 = vsel %vm2152, %v2185, %v2186
      %v2188 = vrot.slane %v2186, 2
      %v2189 = vrot.slane %v1921, 7
      %v2190 = vsel %vm2152, %v2188, %v2189
      %v2191 = vrot.slane %v2189, 2
      %v2192 = vrot.slane %v1924, 7
      %v2193 = vsel %vm2152, %v2191, %v2192
      %v2194 = vrot.slane %v2192, 2
      %v2195 = vrot.slane %v1927, 7
      %v2196 = vsel %vm2152, %v2194, %v2195
      %v2197 = vrot.slane %v2195, 2
      %v2198 = vrot.slane %v1929, 7
      %v2199 = vsel %vm2152, %v2197, %v2198
      %v2200 = vrot.slane %v2198, 2
      %v2201 = vrot.slane %v1932, 7
      %v2202 = vsel %vm2152, %v2200, %v2201
      %v2203 = vrot.slane %v1935, 7
      %v2204 = vrot.slane %v2203, 2
      %v2205 = vrot.slane %v1938, 7
      %v2206 = vsel %vm2152, %v2204, %v2205
      %v2207 = vrot.slane %v2205, 2
      %v2208 = vrot.slane %v1940, 7
      %v2209 = vsel %vm2152, %v2207, %v2208
      %v2210 = vrot.slane %v2208, 2
      %v2211 = vrot.slane %v1943, 7
      %v2212 = vsel %vm2152, %v2210, %v2211
      %v2213 = vrot.slane %v2211, 2
      %v2214 = vrot.slane %v1946, 7
      %v2215 = vsel %vm2152, %v2213, %v2214
      %v2216 = vrot.slane %v2214, 2
      %v2217 = vrot.slane %v1949, 7
      %v2218 = vsel %vm2152, %v2216, %v2217
      %v2219 = vrot.slane %v2217, 2
      %v2220 = vrot.slane %v1951, 7
      %v2221 = vsel %vm2152, %v2219, %v2220
      %v2222 = vrot.slane %v2220, 2
      %v2223 = vrot.slane %v1954, 7
      %v2224 = vsel %vm2152, %v2222, %v2223
      %v2225 = vrot.slane %v2223, 2
      %v2226 = vrot.slane %v1957, 7
      %v2227 = vsel %vm2152, %v2225, %v2226
      %v2228 = vrot.slane %v1960, 7
      %v2229 = vrot.slane %v2228, 2
      %v2230 = vrot.slane %v1962, 7
      %v2231 = vsel %vm2152, %v2229, %v2230
      %v2232 = vrot.slane %v2230, 2
      %v2233 = vrot.slane %v1965, 7
      %v2234 = vsel %vm2152, %v2232, %v2233
      %v2235 = vrot.slane %v2233, 2
      %v2236 = vrot.slane %v1968, 7
      %v2237 = vsel %vm2152, %v2235, %v2236
      %v2238 = vrot.slane %v2236, 2
      %v2239 = vrot.slane %v1971, 7
      %v2240 = vsel %vm2152, %v2238, %v2239
      %v2241 = vrot.slane %v2239, 2
      %v2242 = vrot.slane %v1973, 7
      %v2243 = vsel %vm2152, %v2241, %v2242
      %v2244 = vrot.slane %v2242, 2
      %v2245 = vrot.slane %v1976, 7
      %v2246 = vsel %vm2152, %v2244, %v2245
      %v2247 = vrot.slane %v2245, 2
      %v2248 = vrot.slane %v1979, 7
      %v2249 = vsel %vm2152, %v2247, %v2248
      %v2250 = vrot.slane %v2248, 2
      %v2251 = vrot.slane %v1982, 7
      %v2252 = vsel %vm2152, %v2250, %v2251
      %v2253 = vrot.slane %v1984, 7
      %v2254 = vrot.slane %v2253, 2
      %v2255 = vrot.slane %v1987, 7
      %v2256 = vsel %vm2152, %v2254, %v2255
      %v2257 = vrot.slane %v2255, 2
      %v2258 = vrot.slane %v1990, 7
      %v2259 = vsel %vm2152, %v2257, %v2258
      %v2260 = vrot.slane %v2258, 2
      %v2261 = vrot.slane %v1993, 7
      %v2262 = vsel %vm2152, %v2260, %v2261
      %v2263 = vrot.slane %v2261, 2
      %v2264 = vrot.slane %v1995, 7
      %v2265 = vsel %vm2152, %v2263, %v2264
      %v2266 = vrot.slane %v2264, 2
      %v2267 = vrot.slane %v1998, 7
      %v2268 = vsel %vm2152, %v2266, %v2267
      %v2269 = vrot.slane %v2267, 2
      %v2270 = vrot.slane %v2001, 7
      %v2271 = vsel %vm2152, %v2269, %v2270
      %v2272 = vrot.slane %v2270, 2
      %v2273 = vrot.slane %v2004, 7
      %v2274 = vsel %vm2152, %v2272, %v2273
      %v2275 = vrot.slane %v2273, 2
      %v2276 = vrot.slane %v2006, 7
      %v2277 = vsel %vm2152, %v2275, %v2276
      %v2278 = vrot.slane %v2009, 7
      %v2279 = vrot.slane %v2278, 2
      %v2280 = vrot.slane %v2012, 7
      %v2281 = vsel %vm2152, %v2279, %v2280
      %v2282 = vrot.slane %v2280, 2
      %v2283 = vrot.slane %v2015, 7
      %v2284 = vsel %vm2152, %v2282, %v2283
      %v2285 = vrot.slane %v2283, 2
      %v2286 = vrot.slane %v2017, 7
      %v2287 = vsel %vm2152, %v2285, %v2286
      %v2288 = vrot.slane %v2286, 2
      %v2289 = vrot.slane %v2020, 7
      %v2290 = vsel %vm2152, %v2288, %v2289
      %v2291 = vrot.slane %v2289, 2
      %v2292 = vrot.slane %v2023, 7
      %v2293 = vsel %vm2152, %v2291, %v2292
      %v2294 = vrot.slane %v2292, 2
      %v2295 = vrot.slane %v2026, 7
      %v2296 = vsel %vm2152, %v2294, %v2295
      %v2297 = vrot.slane %v2295, 2
      %v2298 = vrot.slane %v2028, 7
      %v2299 = vsel %vm2152, %v2297, %v2298
      %v2300 = vrot.slane %v2298, 2
      %v2301 = vrot.slane %v2031, 7
      %v2302 = vsel %vm2152, %v2300, %v2301
      %v2303 = vrot.slane %v2034, 7
      %v2304 = vrot.slane %v2303, 2
      %v2305 = vrot.slane %v2037, 7
      %v2306 = vsel %vm2152, %v2304, %v2305
      %v2307 = vrot.slane %v2305, 2
      %v2308 = vrot.slane %v2039, 7
      %v2309 = vsel %vm2152, %v2307, %v2308
      %v2310 = vrot.slane %v2308, 2
      %v2311 = vrot.slane %v2042, 7
      %v2312 = vsel %vm2152, %v2310, %v2311
      %v2313 = vrot.slane %v2311, 2
      %v2314 = vrot.slane %v2045, 7
      %v2315 = vsel %vm2152, %v2313, %v2314
      %v2316 = vrot.slane %v2314, 2
      %v2317 = vrot.slane %v2048, 7
      %v2318 = vsel %vm2152, %v2316, %v2317
      %v2319 = vrot.slane %v2317, 2
      %v2320 = vrot.slane %v2050, 7
      %v2321 = vsel %vm2152, %v2319, %v2320
      %v2322 = vrot.slane %v2320, 2
      %v2323 = vrot.slane %v2053, 7
      %v2324 = vsel %vm2152, %v2322, %v2323
      %v2325 = vrot.slane %v2323, 2
      %v2326 = vrot.slane %v2056, 7
      %v2327 = vsel %vm2152, %v2325, %v2326
      %v2328 = vrot.slane %v2059, 7
      %v2329 = vrot.slane %v2328, 2
      %v2330 = vrot.slane %v2061, 7
      %v2331 = vsel %vm2152, %v2329, %v2330
      %v2332 = vrot.slane %v2330, 2
      %v2333 = vrot.slane %v2064, 7
      %v2334 = vsel %vm2152, %v2332, %v2333
      %v2335 = vrot.slane %v2333, 2
      %v2336 = vrot.slane %v2067, 7
      %v2337 = vsel %vm2152, %v2335, %v2336
      %v2338 = vrot.slane %v2336, 2
      %v2339 = vrot.slane %v2070, 7
      %v2340 = vsel %vm2152, %v2338, %v2339
      %v2341 = vrot.slane %v2339, 2
      %v2342 = vrot.slane %v2072, 7
      %v2343 = vsel %vm2152, %v2341, %v2342
      %v2344 = vrot.slane %v2342, 2
      %v2345 = vrot.slane %v2075, 7
      %v2346 = vsel %vm2152, %v2344, %v2345
      %v2347 = vrot.slane %v2345, 2
      %v2348 = vrot.slane %v2078, 7
      %v2349 = vsel %vm2152, %v2347, %v2348
      %v2350 = vrot.slane %v2348, 2
      %v2351 = vrot.slane %v2081, 7
      %v2352 = vsel %vm2152, %v2350, %v2351
      %v2353 = vrot.slane %v2156, 2
      %v2354 = vrot.slane %v2159, 2
      %v2355 = vrot.slane %v2162, 2
      %v2356 = vrot.slane %v2165, 2
      %v2357 = vrot.slane %v2168, 2
      %v2358 = vrot.slane %v2171, 2
      %v2359 = vrot.slane %v2174, 2
      %v2360 = vrot.slane %v2177, 2
      %v2361 = vrot.slane %v2181, 2
      %v2362 = vrot.slane %v2184, 2
      %v2363 = vrot.slane %v2187, 2
      %v2364 = vrot.slane %v2190, 2
      %v2365 = vrot.slane %v2193, 2
      %v2366 = vrot.slane %v2196, 2
      %v2367 = vrot.slane %v2199, 2
      %v2368 = vrot.slane %v2202, 2
      %v2369 = vrot.slane %v2206, 2
      %v2370 = vrot.slane %v2209, 2
      %v2371 = vrot.slane %v2212, 2
      %v2372 = vrot.slane %v2215, 2
      %v2373 = vrot.slane %v2218, 2
      %v2374 = vrot.slane %v2221, 2
      %v2375 = vrot.slane %v2224, 2
      %v2376 = vrot.slane %v2227, 2
      %v2377 = vrot.slane %v2231, 2
      %v2378 = vrot.slane %v2234, 2
      %v2379 = vrot.slane %v2237, 2
      %v2380 = vrot.slane %v2240, 2
      %v2381 = vrot.slane %v2243, 2
      %v2382 = vrot.slane %v2246, 2
      %v2383 = vrot.slane %v2249, 2
      %v2384 = vrot.slane %v2252, 2
      %v2385 = vrot.slane %v2256, 2
      %v2386 = vrot.slane %v2259, 2
      %v2387 = vrot.slane %v2262, 2
      %v2388 = vrot.slane %v2265, 2
      %v2389 = vrot.slane %v2268, 2
      %v2390 = vrot.slane %v2271, 2
      %v2391 = vrot.slane %v2274, 2
      %v2392 = vrot.slane %v2277, 2
      %v2393 = vrot.slane %v2281, 2
      %v2394 = vrot.slane %v2284, 2
      %v2395 = vrot.slane %v2287, 2
      %v2396 = vrot.slane %v2290, 2
      %v2397 = vrot.slane %v2293, 2
      %v2398 = vrot.slane %v2296, 2
      %v2399 = vrot.slane %v2299, 2
      %v2400 = vrot.slane %v2302, 2
      %v2401 = vrot.slane %v2306, 2
      %v2402 = vrot.slane %v2309, 2
      %v2403 = vrot.slane %v2312, 2
      %v2404 = vrot.slane %v2315, 2
      %v2405 = vrot.slane %v2318, 2
      %v2406 = vrot.slane %v2321, 2
      %v2407 = vrot.slane %v2324, 2
      %v2408 = vrot.slane %v2327, 2
      %v2409 = vrot.slane %v2331, 2
      %v2410 = vrot.slane %v2334, 2
      %v2411 = vrot.slane %v2337, 2
      %v2412 = vrot.slane %v2340, 2
      %v2413 = vrot.slane %v2343, 2
      %v2414 = vrot.slane %v2346, 2
      %v2415 = vrot.slane %v2349, 2
      %v2416 = vrot.slane %v2352, 2
      %v2481 = vadd.f32 %v1881, %v2353
      %v2482 = vadd.f32 %v1886, %v2354
      %v2483 = vadd.f32 %v1890, %v2355
      %v2484 = vadd.f32 %v1894, %v2356
      %v2485 = vadd.f32 %v1896, %v2357
      %v2486 = vadd.f32 %v1899, %v2358
      %v2487 = vadd.f32 %v1902, %v2359
      %v2488 = vadd.f32 %v1905, %v2360
      %v2489 = vadd.f32 %v1910, %v2361
      %v2490 = vadd.f32 %v1913, %v2362
      %v2491 = vadd.f32 %v1916, %v2363
      %v2492 = vadd.f32 %v1918, %v2364
      %v2493 = vadd.f32 %v1921, %v2365
      %v2494 = vadd.f32 %v1924, %v2366
      %v2495 = vadd.f32 %v1927, %v2367
      %v2496 = vadd.f32 %v1929, %v2368
      %v2497 = vadd.f32 %v1935, %v2369
      %v2498 = vadd.f32 %v1938, %v2370
      %v2499 = vadd.f32 %v1940, %v2371
      %v2500 = vadd.f32 %v1943, %v2372
      %v2501 = vadd.f32 %v1946, %v2373
      %v2502 = vadd.f32 %v1949, %v2374
      %v2503 = vadd.f32 %v1951, %v2375
      %v2504 = vadd.f32 %v1954, %v2376
      %v2505 = vadd.f32 %v1960, %v2377
      %v2506 = vadd.f32 %v1962, %v2378
      %v2507 = vadd.f32 %v1965, %v2379
      %v2508 = vadd.f32 %v1968, %v2380
      %v2509 = vadd.f32 %v1971, %v2381
      %v2510 = vadd.f32 %v1973, %v2382
      %v2511 = vadd.f32 %v1976, %v2383
      %v2512 = vadd.f32 %v1979, %v2384
      %v2513 = vadd.f32 %v1984, %v2385
      %v2514 = vadd.f32 %v1987, %v2386
      %v2515 = vadd.f32 %v1990, %v2387
      %v2516 = vadd.f32 %v1993, %v2388
      %v2517 = vadd.f32 %v1995, %v2389
      %v2518 = vadd.f32 %v1998, %v2390
      %v2519 = vadd.f32 %v2001, %v2391
      %v2520 = vadd.f32 %v2004, %v2392
      %v2521 = vadd.f32 %v2009, %v2393
      %v2522 = vadd.f32 %v2012, %v2394
      %v2523 = vadd.f32 %v2015, %v2395
      %v2524 = vadd.f32 %v2017, %v2396
      %v2525 = vadd.f32 %v2020, %v2397
      %v2526 = vadd.f32 %v2023, %v2398
      %v2527 = vadd.f32 %v2026, %v2399
      %v2528 = vadd.f32 %v2028, %v2400
      %v2529 = vadd.f32 %v2034, %v2401
      %v2530 = vadd.f32 %v2037, %v2402
      %v2531 = vadd.f32 %v2039, %v2403
      %v2532 = vadd.f32 %v2042, %v2404
      %v2533 = vadd.f32 %v2045, %v2405
      %v2534 = vadd.f32 %v2048, %v2406
      %v2535 = vadd.f32 %v2050, %v2407
      %v2536 = vadd.f32 %v2053, %v2408
      %v2537 = vadd.f32 %v2059, %v2409
      %v2538 = vadd.f32 %v2061, %v2410
      %v2539 = vadd.f32 %v2064, %v2411
      %v2540 = vadd.f32 %v2067, %v2412
      %v2541 = vadd.f32 %v2070, %v2413
      %v2542 = vadd.f32 %v2072, %v2414
      %v2543 = vadd.f32 %v2075, %v2415
      %v2544 = vadd.f32 %v2078, %v2416
      %v2545 = vrot.slane %v1886, 4
      %v2546 = vrot.slane %v1890, 4
      %v2547 = vrot.slane %v1894, 4
      %v2548 = vrot.slane %v1896, 4
      %v2549 = vrot.slane %v1899, 4
      %v2550 = vrot.slane %v1902, 4
      %v2551 = vrot.slane %v1905, 4
      %v2552 = vrot.slane %v1907, 4
      %v2553 = vrot.slane %v1913, 4
      %v2554 = vrot.slane %v1916, 4
      %v2555 = vrot.slane %v1918, 4
      %v2556 = vrot.slane %v1921, 4
      %v2557 = vrot.slane %v1924, 4
      %v2558 = vrot.slane %v1927, 4
      %v2559 = vrot.slane %v1929, 4
      %v2560 = vrot.slane %v1932, 4
      %v2561 = vrot.slane %v1938, 4
      %v2562 = vrot.slane %v1940, 4
      %v2563 = vrot.slane %v1943, 4
      %v2564 = vrot.slane %v1946, 4
      %v2565 = vrot.slane %v1949, 4
      %v2566 = vrot.slane %v1951, 4
      %v2567 = vrot.slane %v1954, 4
      %v2568 = vrot.slane %v1957, 4
      %v2569 = vrot.slane %v1962, 4
      %v2570 = vrot.slane %v1965, 4
      %v2571 = vrot.slane %v1968, 4
      %v2572 = vrot.slane %v1971, 4
      %v2573 = vrot.slane %v1973, 4
      %v2574 = vrot.slane %v1976, 4
      %v2575 = vrot.slane %v1979, 4
      %v2576 = vrot.slane %v1982, 4
      %v2577 = vrot.slane %v1987, 4
      %v2578 = vrot.slane %v1990, 4
      %v2579 = vrot.slane %v1993, 4
      %v2580 = vrot.slane %v1995, 4
      %v2581 = vrot.slane %v1998, 4
      %v2582 = vrot.slane %v2001, 4
      %v2583 = vrot.slane %v2004, 4
      %v2584 = vrot.slane %v2006, 4
      %v2585 = vrot.slane %v2012, 4
      %v2586 = vrot.slane %v2015, 4
      %v2587 = vrot.slane %v2017, 4
      %v2588 = vrot.slane %v2020, 4
      %v2589 = vrot.slane %v2023, 4
      %v2590 = vrot.slane %v2026, 4
      %v2591 = vrot.slane %v2028, 4
      %v2592 = vrot.slane %v2031, 4
      %v2593 = vrot.slane %v2037, 4
      %v2594 = vrot.slane %v2039, 4
      %v2595 = vrot.slane %v2042, 4
      %v2596 = vrot.slane %v2045, 4
      %v2597 = vrot.slane %v2048, 4
      %v2598 = vrot.slane %v2050, 4
      %v2599 = vrot.slane %v2053, 4
      %v2600 = vrot.slane %v2056, 4
      %v2601 = vrot.slane %v2061, 4
      %v2602 = vrot.slane %v2064, 4
      %v2603 = vrot.slane %v2067, 4
      %v2604 = vrot.slane %v2070, 4
      %v2605 = vrot.slane %v2072, 4
      %v2606 = vrot.slane %v2075, 4
      %v2607 = vrot.slane %v2078, 4
      %v2608 = vrot.slane %v2081, 4
      %v2673 = vadd.f32 %v2481, %v2545
      %v2674 = vadd.f32 %v2482, %v2546
      %v2675 = vadd.f32 %v2483, %v2547
      %v2676 = vadd.f32 %v2484, %v2548
      %v2677 = vadd.f32 %v2485, %v2549
      %v2678 = vadd.f32 %v2486, %v2550
      %v2679 = vadd.f32 %v2487, %v2551
      %v2680 = vadd.f32 %v2488, %v2552
      %v2681 = vadd.f32 %v2489, %v2553
      %v2682 = vadd.f32 %v2490, %v2554
      %v2683 = vadd.f32 %v2491, %v2555
      %v2684 = vadd.f32 %v2492, %v2556
      %v2685 = vadd.f32 %v2493, %v2557
      %v2686 = vadd.f32 %v2494, %v2558
      %v2687 = vadd.f32 %v2495, %v2559
      %v2688 = vadd.f32 %v2496, %v2560
      %v2689 = vadd.f32 %v2497, %v2561
      %v2690 = vadd.f32 %v2498, %v2562
      %v2691 = vadd.f32 %v2499, %v2563
      %v2692 = vadd.f32 %v2500, %v2564
      %v2693 = vadd.f32 %v2501, %v2565
      %v2694 = vadd.f32 %v2502, %v2566
      %v2695 = vadd.f32 %v2503, %v2567
      %v2696 = vadd.f32 %v2504, %v2568
      %v2697 = vadd.f32 %v2505, %v2569
      %v2698 = vadd.f32 %v2506, %v2570
      %v2699 = vadd.f32 %v2507, %v2571
      %v2700 = vadd.f32 %v2508, %v2572
      %v2701 = vadd.f32 %v2509, %v2573
      %v2702 = vadd.f32 %v2510, %v2574
      %v2703 = vadd.f32 %v2511, %v2575
      %v2704 = vadd.f32 %v2512, %v2576
      %v2705 = vadd.f32 %v2513, %v2577
      %v2706 = vadd.f32 %v2514, %v2578
      %v2707 = vadd.f32 %v2515, %v2579
      %v2708 = vadd.f32 %v2516, %v2580
      %v2709 = vadd.f32 %v2517, %v2581
      %v2710 = vadd.f32 %v2518, %v2582
      %v2711 = vadd.f32 %v2519, %v2583
      %v2712 = vadd.f32 %v2520, %v2584
      %v2713 = vadd.f32 %v2521, %v2585
      %v2714 = vadd.f32 %v2522, %v2586
      %v2715 = vadd.f32 %v2523, %v2587
      %v2716 = vadd.f32 %v2524, %v2588
      %v2717 = vadd.f32 %v2525, %v2589
      %v2718 = vadd.f32 %v2526, %v2590
      %v2719 = vadd.f32 %v2527, %v2591
      %v2720 = vadd.f32 %v2528, %v2592
      %v2721 = vadd.f32 %v2529, %v2593
      %v2722 = vadd.f32 %v2530, %v2594
      %v2723 = vadd.f32 %v2531, %v2595
      %v2724 = vadd.f32 %v2532, %v2596
      %v2725 = vadd.f32 %v2533, %v2597
      %v2726 = vadd.f32 %v2534, %v2598
      %v2727 = vadd.f32 %v2535, %v2599
      %v2728 = vadd.f32 %v2536, %v2600
      %v2729 = vadd.f32 %v2537, %v2601
      %v2730 = vadd.f32 %v2538, %v2602
      %v2731 = vadd.f32 %v2539, %v2603
      %v2732 = vadd.f32 %v2540, %v2604
      %v2733 = vadd.f32 %v2541, %v2605
      %v2734 = vadd.f32 %v2542, %v2606
      %v2735 = vadd.f32 %v2543, %v2607
      %v2736 = vadd.f32 %v2544, %v2608
      %v2737 = vld [vmem:[%s4] sm:$0x1]
      %v2739 = vperm.slane %v2737, 0
      %v2741 = vrot.slane %v2739, 2
      %v2742 = vrot.slane %v2739, 4
      %v2743 = vrot.slane %v2739, 6
      %v2747 = vmul.f32 %v2673, %v2739
      %v2748 = vmul.f32 %v2674, %v2741
      %v2749 = vmul.f32 %v2675, %v2742
      %v2750 = vmul.f32 %v2676, %v2743
      %v2751 = vmul.f32 %v2677, %v2739
      %v2752 = vmul.f32 %v2678, %v2741
      %v2753 = vmul.f32 %v2679, %v2742
      %v2754 = vmul.f32 %v2680, %v2743
      %v2755 = vmul.f32 %v2681, %v2739
      %v2756 = vmul.f32 %v2682, %v2741
      %v2757 = vmul.f32 %v2683, %v2742
      %v2758 = vmul.f32 %v2684, %v2743
      %v2759 = vmul.f32 %v2685, %v2739
      %v2760 = vmul.f32 %v2686, %v2741
      %v2761 = vmul.f32 %v2687, %v2742
      %v2762 = vmul.f32 %v2688, %v2743
      %v2763 = vmul.f32 %v2689, %v2739
      %v2764 = vmul.f32 %v2690, %v2741
      %v2765 = vmul.f32 %v2691, %v2742
      %v2766 = vmul.f32 %v2692, %v2743
      %v2767 = vmul.f32 %v2693, %v2739
      %v2768 = vmul.f32 %v2694, %v2741
      %v2769 = vmul.f32 %v2695, %v2742
      %v2770 = vmul.f32 %v2696, %v2743
      %v2771 = vmul.f32 %v2697, %v2739
      %v2772 = vmul.f32 %v2698, %v2741
      %v2773 = vmul.f32 %v2699, %v2742
      %v2774 = vmul.f32 %v2700, %v2743
      %v2775 = vmul.f32 %v2701, %v2739
      %v2776 = vmul.f32 %v2702, %v2741
      %v2777 = vmul.f32 %v2703, %v2742
      %v2778 = vmul.f32 %v2704, %v2743
      %v2779 = vmul.f32 %v2705, %v2739
      %v2780 = vmul.f32 %v2706, %v2741
      %v2781 = vmul.f32 %v2707, %v2742
      %v2782 = vmul.f32 %v2708, %v2743
      %v2783 = vmul.f32 %v2709, %v2739
      %v2784 = vmul.f32 %v2710, %v2741
      %v2785 = vmul.f32 %v2711, %v2742
      %v2786 = vmul.f32 %v2712, %v2743
      %v2787 = vmul.f32 %v2713, %v2739
      %v2788 = vmul.f32 %v2714, %v2741
      %v2789 = vmul.f32 %v2715, %v2742
      %v2790 = vmul.f32 %v2716, %v2743
      %v2791 = vmul.f32 %v2717, %v2739
      %v2792 = vmul.f32 %v2718, %v2741
      %v2793 = vmul.f32 %v2719, %v2742
      %v2794 = vmul.f32 %v2720, %v2743
      %v2795 = vmul.f32 %v2721, %v2739
      %v2796 = vmul.f32 %v2722, %v2741
      %v2797 = vmul.f32 %v2723, %v2742
      %v2798 = vmul.f32 %v2724, %v2743
      %v2799 = vmul.f32 %v2725, %v2739
      %v2800 = vmul.f32 %v2726, %v2741
      %v2801 = vmul.f32 %v2727, %v2742
      %v2802 = vmul.f32 %v2728, %v2743
      %v2803 = vmul.f32 %v2729, %v2739
      %v2804 = vmul.f32 %v2730, %v2741
      %v2805 = vmul.f32 %v2731, %v2742
      %v2806 = vmul.f32 %v2732, %v2743
      %v2807 = vmul.f32 %v2733, %v2739
      %v2808 = vmul.f32 %v2734, %v2741
      %v2809 = vmul.f32 %v2735, %v2742
      %v2810 = vmul.f32 %v2736, %v2743
      %v2811 = vld [vmem:[%s5] sm:$0x1]
      %v2813 = vperm.slane %v2811, 0
      %v2815 = vrot.slane %v2813, 2
      %v2816 = vrot.slane %v2813, 4
      %v2817 = vrot.slane %v2813, 6
      %v2821 = vadd.f32 %v2747, %v2813
      %v2822 = vadd.f32 %v2748, %v2815
      %v2823 = vadd.f32 %v2749, %v2816
      %v2824 = vadd.f32 %v2750, %v2817
      %v2825 = vadd.f32 %v2751, %v2813
      %v2826 = vadd.f32 %v2752, %v2815
      %v2827 = vadd.f32 %v2753, %v2816
      %v2828 = vadd.f32 %v2754, %v2817
      %v2829 = vadd.f32 %v2755, %v2813
      %v2830 = vadd.f32 %v2756, %v2815
      %v2831 = vadd.f32 %v2757, %v2816
      %v2832 = vadd.f32 %v2758, %v2817
      %v2833 = vadd.f32 %v2759, %v2813
      %v2834 = vadd.f32 %v2760, %v2815
      %v2835 = vadd.f32 %v2761, %v2816
      %v2836 = vadd.f32 %v2762, %v2817
      %v2837 = vadd.f32 %v2763, %v2813
      %v2838 = vadd.f32 %v2764, %v2815
      %v2839 = vadd.f32 %v2765, %v2816
      %v2840 = vadd.f32 %v2766, %v2817
      %v2841 = vadd.f32 %v2767, %v2813
      %v2842 = vadd.f32 %v2768, %v2815
      %v2843 = vadd.f32 %v2769, %v2816
      %v2844 = vadd.f32 %v2770, %v2817
      %v2845 = vadd.f32 %v2771, %v2813
      %v2846 = vadd.f32 %v2772, %v2815
      %v2847 = vadd.f32 %v2773, %v2816
      %v2848 = vadd.f32 %v2774, %v2817
      %v2849 = vadd.f32 %v2775, %v2813
      %v2850 = vadd.f32 %v2776, %v2815
      %v2851 = vadd.f32 %v2777, %v2816
      %v2852 = vadd.f32 %v2778, %v2817
      %v2853 = vadd.f32 %v2779, %v2813
      %v2854 = vadd.f32 %v2780, %v2815
      %v2855 = vadd.f32 %v2781, %v2816
      %v2856 = vadd.f32 %v2782, %v2817
      %v2857 = vadd.f32 %v2783, %v2813
      %v2858 = vadd.f32 %v2784, %v2815
      %v2859 = vadd.f32 %v2785, %v2816
      %v2860 = vadd.f32 %v2786, %v2817
      %v2861 = vadd.f32 %v2787, %v2813
      %v2862 = vadd.f32 %v2788, %v2815
      %v2863 = vadd.f32 %v2789, %v2816
      %v2864 = vadd.f32 %v2790, %v2817
      %v2865 = vadd.f32 %v2791, %v2813
      %v2866 = vadd.f32 %v2792, %v2815
      %v2867 = vadd.f32 %v2793, %v2816
      %v2868 = vadd.f32 %v2794, %v2817
      %v2869 = vadd.f32 %v2795, %v2813
      %v2870 = vadd.f32 %v2796, %v2815
      %v2871 = vadd.f32 %v2797, %v2816
      %v2872 = vadd.f32 %v2798, %v2817
      %v2873 = vadd.f32 %v2799, %v2813
      %v2874 = vadd.f32 %v2800, %v2815
      %v2875 = vadd.f32 %v2801, %v2816
      %v2876 = vadd.f32 %v2802, %v2817
      %v2877 = vadd.f32 %v2803, %v2813
      %v2878 = vadd.f32 %v2804, %v2815
      %v2879 = vadd.f32 %v2805, %v2816
      %v2880 = vadd.f32 %v2806, %v2817
      %v2881 = vadd.f32 %v2807, %v2813
      %v2882 = vadd.f32 %v2808, %v2815
      %v2883 = vadd.f32 %v2809, %v2816
      %v2884 = vadd.f32 %v2810, %v2817
      %v2885 = vtanh.pop %v2821
      %v2886 = vtanh.pop %v2822
      %v2887 = vtanh.pop %v2823
      %v2888 = vtanh.pop %v2824
      %v2889 = vtanh.pop %v2825
      %v2890 = vtanh.pop %v2826
      %v2891 = vtanh.pop %v2827
      %v2892 = vtanh.pop %v2828
      %v2893 = vtanh.pop %v2829
      %v2894 = vtanh.pop %v2830
      %v2895 = vtanh.pop %v2831
      %v2896 = vtanh.pop %v2832
      %v2897 = vtanh.pop %v2833
      %v2898 = vtanh.pop %v2834
      %v2899 = vtanh.pop %v2835
      %v2900 = vtanh.pop %v2836
      %v2901 = vtanh.pop %v2837
      %v2902 = vtanh.pop %v2838
      %v2903 = vtanh.pop %v2839
      %v2904 = vtanh.pop %v2840
      %v2905 = vtanh.pop %v2841
      %v2906 = vtanh.pop %v2842
      %v2907 = vtanh.pop %v2843
      %v2908 = vtanh.pop %v2844
      %v2909 = vtanh.pop %v2845
      %v2910 = vtanh.pop %v2846
      %v2911 = vtanh.pop %v2847
      %v2912 = vtanh.pop %v2848
      %v2913 = vtanh.pop %v2849
      %v2914 = vtanh.pop %v2850
      %v2915 = vtanh.pop %v2851
      %v2916 = vtanh.pop %v2852
      %v2917 = vtanh.pop %v2853
      %v2918 = vtanh.pop %v2854
      %v2919 = vtanh.pop %v2855
      %v2920 = vtanh.pop %v2856
      %v2921 = vtanh.pop %v2857
      %v2922 = vtanh.pop %v2858
      %v2923 = vtanh.pop %v2859
      %v2924 = vtanh.pop %v2860
      %v2925 = vtanh.pop %v2861
      %v2926 = vtanh.pop %v2862
      %v2927 = vtanh.pop %v2863
      %v2928 = vtanh.pop %v2864
      %v2929 = vtanh.pop %v2865
      %v2930 = vtanh.pop %v2866
      %v2931 = vtanh.pop %v2867
      %v2932 = vtanh.pop %v2868
      %v2933 = vtanh.pop %v2869
      %v2934 = vtanh.pop %v2870
      %v2935 = vtanh.pop %v2871
      %v2936 = vtanh.pop %v2872
      %v2937 = vtanh.pop %v2873
      %v2938 = vtanh.pop %v2874
      %v2939 = vtanh.pop %v2875
      %v2940 = vtanh.pop %v2876
      %v2941 = vtanh.pop %v2877
      %v2942 = vtanh.pop %v2878
      %v2943 = vtanh.pop %v2879
      %v2944 = vtanh.pop %v2880
      %v2945 = vtanh.pop %v2881
      %v2946 = vtanh.pop %v2882
      %v2947 = vtanh.pop %v2883
      %v2948 = vtanh.pop %v2884
      %3013 = vst [vmem:[#allocation1] ss:$4 sm:$0xff] %v2885
      %s3014 = scalar_lea.vmem [#allocation1], 1
      %3015 = vst [vmem:[%s3014] ss:$4 sm:$0xff] %v2886
      %s3016 = scalar_lea.vmem [#allocation1], 2
      %3017 = vst [vmem:[%s3016] ss:$4 sm:$0xff] %v2887
      %s3018 = scalar_lea.vmem [#allocation1], 3
      %3019 = vst [vmem:[%s3018] ss:$4 sm:$0xff] %v2888
      %s3020 = scalar_lea.vmem [#allocation1], 32
      %3021 = vst [vmem:[%s3020] ss:$4 sm:$0xff] %v2889
      %s3022 = scalar_lea.vmem [#allocation1], 33
      %3023 = vst [vmem:[%s3022] ss:$4 sm:$0xff] %v2890
      %s3024 = scalar_lea.vmem [#allocation1], 34
      %3025 = vst [vmem:[%s3024] ss:$4 sm:$0xff] %v2891
      %s3026 = scalar_lea.vmem [#allocation1], 35
      %3027 = vst [vmem:[%s3026] ss:$4 sm:$0xff] %v2892
      %v3028 = vld.sshfl [vmem:[#allocation1] sm:$0xff pattern:$0x73625140]
      %v3029 = vld.sshfl [vmem:[#allocation1 + $0x20] sm:$0xff pattern:$0x73625140]
      %3030 = vst [vmem:[#allocation1] ss:$4 sm:$0xff] %v2893
      %3031 = vst [vmem:[%s3014] ss:$4 sm:$0xff] %v2894
      %3032 = vst [vmem:[%s3016] ss:$4 sm:$0xff] %v2895
      %3033 = vst [vmem:[%s3018] ss:$4 sm:$0xff] %v2896
      %3034 = vst [vmem:[%s3020] ss:$4 sm:$0xff] %v2897
      %3035 = vst [vmem:[%s3022] ss:$4 sm:$0xff] %v2898
      %3036 = vst [vmem:[%s3024] ss:$4 sm:$0xff] %v2899
      %3037 = vst [vmem:[%s3026] ss:$4 sm:$0xff] %v2900
      %v3038 = vld.sshfl [vmem:[#allocation1] sm:$0xff pattern:$0x73625140]
      %v3039 = vld.sshfl [vmem:[#allocation1 + $0x20] sm:$0xff pattern:$0x73625140]
      %3040 = vst [vmem:[#allocation1] ss:$4 sm:$0xff] %v2901
      %3041 = vst [vmem:[%s3014] ss:$4 sm:$0xff] %v2902
      %3042 = vst [vmem:[%s3016] ss:$4 sm:$0xff] %v2903
      %3043 = vst [vmem:[%s3018] ss:$4 sm:$0xff] %v2904
      %3044 = vst [vmem:[%s3020] ss:$4 sm:$0xff] %v2905
      %3045 = vst [vmem:[%s3022] ss:$4 sm:$0xff] %v2906
      %3046 = vst [vmem:[%s3024] ss:$4 sm:$0xff] %v2907
      %3047 = vst [vmem:[%s3026] ss:$4 sm:$0xff] %v2908
      %v3048 = vld.sshfl [vmem:[#allocation1] sm:$0xff pattern:$0x73625140]
      %v3049 = vld.sshfl [vmem:[#allocation1 + $0x20] sm:$0xff pattern:$0x73625140]
      %3050 = vst [vmem:[#allocation1] ss:$4 sm:$0xff] %v2909
      %3051 = vst [vmem:[%s3014] ss:$4 sm:$0xff] %v2910
      %3052 = vst [vmem:[%s3016] ss:$4 sm:$0xff] %v2911
      %3053 = vst [vmem:[%s3018] ss:$4 sm:$0xff] %v2912
      %3054 = vst [vmem:[%s3020] ss:$4 sm:$0xff] %v2913
      %3055 = vst [vmem:[%s3022] ss:$4 sm:$0xff] %v2914
      %3056 = vst [vmem:[%s3024] ss:$4 sm:$0xff] %v2915
      %3057 = vst [vmem:[%s3026] ss:$4 sm:$0xff] %v2916
      %v3058 = vld.sshfl [vmem:[#allocation1] sm:$0xff pattern:$0x73625140]
      %v3059 = vld.sshfl [vmem:[#allocation1 + $0x20] sm:$0xff pattern:$0x73625140]
      %3060 = vst [vmem:[#allocation1] ss:$4 sm:$0xff] %v2917
      %3061 = vst [vmem:[%s3014] ss:$4 sm:$0xff] %v2918
      %3062 = vst [vmem:[%s3016] ss:$4 sm:$0xff] %v2919
      %3063 = vst [vmem:[%s3018] ss:$4 sm:$0xff] %v2920
      %3064 = vst [vmem:[%s3020] ss:$4 sm:$0xff] %v2921
      %3065 = vst [vmem:[%s3022] ss:$4 sm:$0xff] %v2922
      %3066 = vst [vmem:[%s3024] ss:$4 sm:$0xff] %v2923
      %3067 = vst [vmem:[%s3026] ss:$4 sm:$0xff] %v2924
      %v3068 = vld.sshfl [vmem:[#allocation1] sm:$0xff pattern:$0x73625140]
      %v3069 = vld.sshfl [vmem:[#allocation1 + $0x20] sm:$0xff pattern:$0x73625140]
      %3070 = vst [vmem:[#allocation1] ss:$4 sm:$0xff] %v2925
      %3071 = vst [vmem:[%s3014] ss:$4 sm:$0xff] %v2926
      %3072 = vst [vmem:[%s3016] ss:$4 sm:$0xff] %v2927
      %3073 = vst [vmem:[%s3018] ss:$4 sm:$0xff] %v2928
      %3074 = vst [vmem:[%s3020] ss:$4 sm:$0xff] %v2929
      %3075 = vst [vmem:[%s3022] ss:$4 sm:$0xff] %v2930
      %3076 = vst [vmem:[%s3024] ss:$4 sm:$0xff] %v2931
      %3077 = vst [vmem:[%s3026] ss:$4 sm:$0xff] %v2932
      %v3078 = vld.sshfl [vmem:[#allocation1] sm:$0xff pattern:$0x73625140]
      %v3079 = vld.sshfl [vmem:[#allocation1 + $0x20] sm:$0xff pattern:$0x73625140]
      %3080 = vst [vmem:[#allocation1] ss:$4 sm:$0xff] %v2933
      %3081 = vst [vmem:[%s3014] ss:$4 sm:$0xff] %v2934
      %3082 = vst [vmem:[%s3016] ss:$4 sm:$0xff] %v2935
      %3083 = vst [vmem:[%s3018] ss:$4 sm:$0xff] %v2936
      %3084 = vst [vmem:[%s3020] ss:$4 sm:$0xff] %v2937
      %3085 = vst [vmem:[%s3022] ss:$4 sm:$0xff] %v2938
      %3086 = vst [vmem:[%s3024] ss:$4 sm:$0xff] %v2939
      %3087 = vst [vmem:[%s3026] ss:$4 sm:$0xff] %v2940
      %v3088 = vld.sshfl [vmem:[#allocation1] sm:$0xff pattern:$0x73625140]
      %v3089 = vld.sshfl [vmem:[#allocation1 + $0x20] sm:$0xff pattern:$0x73625140]
      %3090 = vst [vmem:[#allocation1] ss:$4 sm:$0xff] %v2941
      %3091 = vst [vmem:[%s3014] ss:$4 sm:$0xff] %v2942
      %3092 = vst [vmem:[%s3016] ss:$4 sm:$0xff] %v2943
      %3093 = vst [vmem:[%s3018] ss:$4 sm:$0xff] %v2944
      %3094 = vst [vmem:[%s3020] ss:$4 sm:$0xff] %v2945
      %3095 = vst [vmem:[%s3022] ss:$4 sm:$0xff] %v2946
      %3096 = vst [vmem:[%s3024] ss:$4 sm:$0xff] %v2947
      %3097 = vst [vmem:[%s3026] ss:$4 sm:$0xff] %v2948
      %v3098 = vld.sshfl [vmem:[#allocation1] sm:$0xff pattern:$0x73625140]
      %v3099 = vld.sshfl [vmem:[#allocation1 + $0x20] sm:$0xff pattern:$0x73625140]
      %v3116 = vpack.c.bf16 %v3029, %v3028
      %v3117 = vpack.c.bf16 %v3039, %v3038
      %v3118 = vpack.c.bf16 %v3049, %v3048
      %v3119 = vpack.c.bf16 %v3059, %v3058
      %v3120 = vpack.c.bf16 %v3069, %v3068
      %v3121 = vpack.c.bf16 %v3079, %v3078
      %v3122 = vpack.c.bf16 %v3089, %v3088
      %v3123 = vpack.c.bf16 %v3099, %v3098
      %v3124 = vld [vmem:[%s6] sm:$0xf]
      %v3125 = vld [vmem:[%s6 + $0x4] sm:$0xf]
      %v3126 = vld [vmem:[%s6 + $0x8] sm:$0xf]
      %v3127 = vld [vmem:[%s6 + $0xc] sm:$0xf]
      %v3128 = vld [vmem:[%s6 + $0x10] sm:$0xf]
      %v3129 = vld [vmem:[%s6 + $0x14] sm:$0xf]
      %v3130 = vld [vmem:[%s6 + $0x18] sm:$0xf]
      %v3131 = vld [vmem:[%s6 + $0x1c] sm:$0xf]
      %v3132 = vld [vmem:[%s6 + $0x20] sm:$0xf]
      %v3133 = vld [vmem:[%s6 + $0x24] sm:$0xf]
      %v3134 = vld [vmem:[%s6 + $0x28] sm:$0xf]
      %v3135 = vld [vmem:[%s6 + $0x2c] sm:$0xf]
      %v3136 = vld [vmem:[%s6 + $0x30] sm:$0xf]
      %v3137 = vld [vmem:[%s6 + $0x34] sm:$0xf]
      %v3138 = vld [vmem:[%s6 + $0x38] sm:$0xf]
      %v3139 = vld [vmem:[%s6 + $0x3c] sm:$0xf]
      %v3140 = vld [vmem:[%s7] sm:$0x1]
      %v3142 = vperm.slane %v3140, 0
      %v3160 = vunpack.c.l.b16 %v3124
      %v3161 = vunpack.c.l.b16 %v3125
      %v3162 = vunpack.c.l.b16 %v3126
      %v3163 = vunpack.c.l.b16 %v3127
      %v3164 = vunpack.c.l.b16 %v3128
      %v3165 = vunpack.c.l.b16 %v3129
      %v3166 = vunpack.c.l.b16 %v3130
      %v3167 = vunpack.c.l.b16 %v3131
      %v3168 = vunpack.c.l.b16 %v3132
      %v3169 = vunpack.c.l.b16 %v3133
      %v3170 = vunpack.c.l.b16 %v3134
      %v3171 = vunpack.c.l.b16 %v3135
      %v3172 = vunpack.c.l.b16 %v3136
      %v3173 = vunpack.c.l.b16 %v3137
      %v3174 = vunpack.c.l.b16 %v3138
      %v3175 = vunpack.c.l.b16 %v3139
      %v3176 = vpack.c.b16 %v3161, %v3160
      %v3177 = vpack.c.b16 %v3163, %v3162
      %v3178 = vpack.c.b16 %v3165, %v3164
      %v3179 = vpack.c.b16 %v3167, %v3166
      %v3180 = vpack.c.b16 %v3169, %v3168
      %v3181 = vpack.c.b16 %v3171, %v3170
      %v3182 = vpack.c.b16 %v3173, %v3172
      %v3183 = vpack.c.b16 %v3175, %v3174
      %3192 = vmatpush.bf16.msra.mxu0 %v3183
      %3193 = vmatpush.bf16.msra.mxu0 %v3182
      %3194 = vmatpush.bf16.msra.mxu0 %v3181
      %3195 = vmatpush.bf16.msra.mxu0 %v3180
      %3196 = vmatpush.bf16.msra.mxu0 %v3179
      %3197 = vmatpush.bf16.msra.mxu0 %v3178
      %3198 = vmatpush.bf16.msra.mxu0 %v3177
      %3199 = vmatpush.bf16.msra.mxu0 %v3176
      %3200 = vmatmul.bf16.gmra.mxu0 %v3116
      %v3201 = vpop.f32.mrf.mxu0
      %v3202 = vadd.f32 %v3142, %v3201
      %v3203 = vpop.f32.mrf.mxu0
      %v3204 = vadd.f32 %v3142, %v3203
      %3205 = vmatmul.bf16.gmra.mxu0 %v3117
      %v3206 = vpop.f32.mrf.mxu0
      %v3207 = vadd.f32 %v3142, %v3206
      %v3208 = vpop.f32.mrf.mxu0
      %v3209 = vadd.f32 %v3142, %v3208
      %3210 = vmatmul.bf16.gmra.mxu0 %v3118
      %v3211 = vpop.f32.mrf.mxu0
      %v3212 = vadd.f32 %v3142, %v3211
      %v3213 = vpop.f32.mrf.mxu0
      %v3214 = vadd.f32 %v3142, %v3213
      %3215 = vmatmul.bf16.gmra.mxu0 %v3119
      %v3216 = vpop.f32.mrf.mxu0
      %v3217 = vadd.f32 %v3142, %v3216
      %v3218 = vpop.f32.mrf.mxu0
      %v3219 = vadd.f32 %v3142, %v3218
      %3220 = vmatmul.bf16.gmra.mxu0 %v3120
      %v3221 = vpop.f32.mrf.mxu0
      %v3222 = vadd.f32 %v3142, %v3221
      %v3223 = vpop.f32.mrf.mxu0
      %v3224 = vadd.f32 %v3142, %v3223
      %3225 = vmatmul.bf16.gmra.mxu0 %v3121
      %v3226 = vpop.f32.mrf.mxu0
      %v3227 = vadd.f32 %v3142, %v3226
      %v3228 = vpop.f32.mrf.mxu0
      %v3229 = vadd.f32 %v3142, %v3228
      %3230 = vmatmul.bf16.gmra.mxu0 %v3122
      %v3231 = vpop.f32.mrf.mxu0
      %v3232 = vadd.f32 %v3142, %v3231
      %v3233 = vpop.f32.mrf.mxu0
      %v3234 = vadd.f32 %v3142, %v3233
      %3235 = vmatmul.bf16.gmra.mxu0 %v3123
      %v3236 = vpop.f32.mrf.mxu0
      %v3237 = vadd.f32 %v3142, %v3236
      %v3238 = vpop.f32.mrf.mxu0
      %v3239 = vadd.f32 %v3142, %v3238
      %3240 = vdwg.mxu0
      %vm3241 = vcmask 64512
      %v3242 = vsel %vm3241, %v3202, -inf
      %3243 = vmax.xlane.f32.xlu0 %v3242
      %v3244 = vpop.xlane.xlu0 %3243
      %v3245 = vsel %vm3241, %v3204, -inf
      %3246 = vmax.xlane.f32.xlu0 %v3245
      %v3247 = vpop.xlane.xlu0 %3246
      %v3248 = vsel %vm3241, %v3207, -inf
      %3249 = vmax.xlane.f32.xlu0 %v3248
      %v3250 = vpop.xlane.xlu0 %3249
      %v3251 = vsel %vm3241, %v3209, -inf
      %3252 = vmax.xlane.f32.xlu0 %v3251
      %v3253 = vpop.xlane.xlu0 %3252
      %v3254 = vsel %vm3241, %v3212, -inf
      %3255 = vmax.xlane.f32.xlu0 %v3254
      %v3256 = vpop.xlane.xlu0 %3255
      %v3257 = vsel %vm3241, %v3214, -inf
      %3258 = vmax.xlane.f32.xlu0 %v3257
      %v3259 = vpop.xlane.xlu0 %3258
      %v3260 = vsel %vm3241, %v3217, -inf
      %3261 = vmax.xlane.f32.xlu0 %v3260
      %v3262 = vpop.xlane.xlu0 %3261
      %v3263 = vsel %vm3241, %v3219, -inf
      %3264 = vmax.xlane.f32.xlu0 %v3263
      %v3265 = vpop.xlane.xlu0 %3264
      %v3266 = vsel %vm3241, %v3222, -inf
      %3267 = vmax.xlane.f32.xlu0 %v3266
      %v3268 = vpop.xlane.xlu0 %3267
      %v3269 = vsel %vm3241, %v3224, -inf
      %3270 = vmax.xlane.f32.xlu0 %v3269
      %v3271 = vpop.xlane.xlu0 %3270
      %v3272 = vsel %vm3241, %v3227, -inf
      %3273 = vmax.xlane.f32.xlu0 %v3272
      %v3274 = vpop.xlane.xlu0 %3273
      %v3275 = vsel %vm3241, %v3229, -inf
      %3276 = vmax.xlane.f32.xlu0 %v3275
      %v3277 = vpop.xlane.xlu0 %3276
      %v3278 = vsel %vm3241, %v3232, -inf
      %3279 = vmax.xlane.f32.xlu0 %v3278
      %v3280 = vpop.xlane.xlu0 %3279
      %v3281 = vsel %vm3241, %v3234, -inf
      %3282 = vmax.xlane.f32.xlu0 %v3281
      %v3283 = vpop.xlane.xlu0 %3282
      %v3284 = vsel %vm3241, %v3237, -inf
      %3285 = vmax.xlane.f32.xlu0 %v3284
      %v3286 = vpop.xlane.xlu0 %3285
      %v3287 = vsel %vm3241, %v3239, -inf
      %3288 = vmax.xlane.f32.xlu0 %v3287
      %v3289 = vpop.xlane.xlu0 %3288
      %v3290 = vsub.f32 %v3202, %v3244
      %v3291 = vsub.f32 %v3204, %v3247
      %v3292 = vsub.f32 %v3207, %v3250
      %v3293 = vsub.f32 %v3209, %v3253
      %v3294 = vsub.f32 %v3212, %v3256
      %v3295 = vsub.f32 %v3214, %v3259
      %v3296 = vsub.f32 %v3217, %v3262
      %v3297 = vsub.f32 %v3219, %v3265
      %v3298 = vsub.f32 %v3222, %v3268
      %v3299 = vsub.f32 %v3224, %v3271
      %v3300 = vsub.f32 %v3227, %v3274
      %v3301 = vsub.f32 %v3229, %v3277
      %v3302 = vsub.f32 %v3232, %v3280
      %v3303 = vsub.f32 %v3234, %v3283
      %v3304 = vsub.f32 %v3237, %v3286
      %v3305 = vsub.f32 %v3239, %v3289
      %v3306 = vmul.f32 %v3290, 1.442695
      %v3307 = vpow.pop %v3306
      %v3308 = vmul.f32 %v3291, 1.442695
      %v3309 = vpow.pop %v3308
      %v3310 = vmul.f32 %v3292, 1.442695
      %v3311 = vpow.pop %v3310
      %v3312 = vmul.f32 %v3293, 1.442695
      %v3313 = vpow.pop %v3312
      %v3314 = vmul.f32 %v3294, 1.442695
      %v3315 = vpow.pop %v3314
      %v3316 = vmul.f32 %v3295, 1.442695
      %v3317 = vpow.pop %v3316
      %v3318 = vmul.f32 %v3296, 1.442695
      %v3319 = vpow.pop %v3318
      %v3320 = vmul.f32 %v3297, 1.442695
      %v3321 = vpow.pop %v3320
      %v3322 = vmul.f32 %v3298, 1.442695
      %v3323 = vpow.pop %v3322
      %v3324 = vmul.f32 %v3299, 1.442695
      %v3325 = vpow.pop %v3324
      %v3326 = vmul.f32 %v3300, 1.442695
      %v3327 = vpow.pop %v3326
      %v3328 = vmul.f32 %v3301, 1.442695
      %v3329 = vpow.pop %v3328
      %v3330 = vmul.f32 %v3302, 1.442695
      %v3331 = vpow.pop %v3330
      %v3332 = vmul.f32 %v3303, 1.442695
      %v3333 = vpow.pop %v3332
      %v3334 = vmul.f32 %v3304, 1.442695
      %v3335 = vpow.pop %v3334
      %v3336 = vmul.f32 %v3305, 1.442695
      %v3337 = vpow.pop %v3336
      %v3338 = vsel %vm3241, %v3307, 0.0
      %3339 = vadd.xlane.f32.xlu0 %v3338
      %v3340 = vpop.xlane.xlu0 %3339
      %v3341 = vsel %vm3241, %v3309, 0.0
      %3342 = vadd.xlane.f32.xlu0 %v3341
      %v3343 = vpop.xlane.xlu0 %3342
      %v3344 = vsel %vm3241, %v3311, 0.0
      %3345 = vadd.xlane.f32.xlu0 %v3344
      %v3346 = vpop.xlane.xlu0 %3345
      %v3347 = vsel %vm3241, %v3313, 0.0
      %3348 = vadd.xlane.f32.xlu0 %v3347
      %v3349 = vpop.xlane.xlu0 %3348
      %v3350 = vsel %vm3241, %v3315, 0.0
      %3351 = vadd.xlane.f32.xlu0 %v3350
      %v3352 = vpop.xlane.xlu0 %3351
      %v3353 = vsel %vm3241, %v3317, 0.0
      %3354 = vadd.xlane.f32.xlu0 %v3353
      %v3355 = vpop.xlane.xlu0 %3354
      %v3356 = vsel %vm3241, %v3319, 0.0
      %3357 = vadd.xlane.f32.xlu0 %v3356
      %v3358 = vpop.xlane.xlu0 %3357
      %v3359 = vsel %vm3241, %v3321, 0.0
      %3360 = vadd.xlane.f32.xlu0 %v3359
      %v3361 = vpop.xlane.xlu0 %3360
      %v3362 = vsel %vm3241, %v3323, 0.0
      %3363 = vadd.xlane.f32.xlu0 %v3362
      %v3364 = vpop.xlane.xlu0 %3363
      %v3365 = vsel %vm3241, %v3325, 0.0
      %3366 = vadd.xlane.f32.xlu0 %v3365
      %v3367 = vpop.xlane.xlu0 %3366
      %v3368 = vsel %vm3241, %v3327, 0.0
      %3369 = vadd.xlane.f32.xlu0 %v3368
      %v3370 = vpop.xlane.xlu0 %3369
      %v3371 = vsel %vm3241, %v3329, 0.0
      %3372 = vadd.xlane.f32.xlu0 %v3371
      %v3373 = vpop.xlane.xlu0 %3372
      %v3374 = vsel %vm3241, %v3331, 0.0
      %3375 = vadd.xlane.f32.xlu0 %v3374
      %v3376 = vpop.xlane.xlu0 %3375
      %v3377 = vsel %vm3241, %v3333, 0.0
      %3378 = vadd.xlane.f32.xlu0 %v3377
      %v3379 = vpop.xlane.xlu0 %3378
      %v3380 = vsel %vm3241, %v3335, 0.0
      %3381 = vadd.xlane.f32.xlu0 %v3380
      %v3382 = vpop.xlane.xlu0 %3381
      %v3383 = vsel %vm3241, %v3337, 0.0
      %3384 = vadd.xlane.f32.xlu0 %v3383
      %v3385 = vpop.xlane.xlu0 %3384
      %v3386 = vlog2.pop %v3340
      %v3387 = vmul.f32 %v3386, 0.6931472
      %v3388 = vlog2.pop %v3343
      %v3389 = vmul.f32 %v3388, 0.6931472
      %v3390 = vlog2.pop %v3346
      %v3391 = vmul.f32 %v3390, 0.6931472
      %v3392 = vlog2.pop %v3349
      %v3393 = vmul.f32 %v3392, 0.6931472
      %v3394 = vlog2.pop %v3352
      %v3395 = vmul.f32 %v3394, 0.6931472
      %v3396 = vlog2.pop %v3355
      %v3397 = vmul.f32 %v3396, 0.6931472
      %v3398 = vlog2.pop %v3358
      %v3399 = vmul.f32 %v3398, 0.6931472
      %v3400 = vlog2.pop %v3361
      %v3401 = vmul.f32 %v3400, 0.6931472
      %v3402 = vlog2.pop %v3364
      %v3403 = vmul.f32 %v3402, 0.6931472
      %v3404 = vlog2.pop %v3367
      %v3405 = vmul.f32 %v3404, 0.6931472
      %v3406 = vlog2.pop %v3370
      %v3407 = vmul.f32 %v3406, 0.6931472
      %v3408 = vlog2.pop %v3373
      %v3409 = vmul.f32 %v3408, 0.6931472
      %v3410 = vlog2.pop %v3376
      %v3411 = vmul.f32 %v3410, 0.6931472
      %v3412 = vlog2.pop %v3379
      %v3413 = vmul.f32 %v3412, 0.6931472
      %v3414 = vlog2.pop %v3382
      %v3415 = vmul.f32 %v3414, 0.6931472
      %v3416 = vlog2.pop %v3385
      %v3417 = vmul.f32 %v3416, 0.6931472
      %v3418 = vsub.f32 %v3290, %v3387
      %v3419 = vsub.f32 %v3291, %v3389
      %v3420 = vsub.f32 %v3292, %v3391
      %v3421 = vsub.f32 %v3293, %v3393
      %v3422 = vsub.f32 %v3294, %v3395
      %v3423 = vsub.f32 %v3295, %v3397
      %v3424 = vsub.f32 %v3296, %v3399
      %v3425 = vsub.f32 %v3297, %v3401
      %v3426 = vsub.f32 %v3298, %v3403
      %v3427 = vsub.f32 %v3299, %v3405
      %v3428 = vsub.f32 %v3300, %v3407
      %v3429 = vsub.f32 %v3301, %v3409
      %v3430 = vsub.f32 %v3302, %v3411
      %v3431 = vsub.f32 %v3303, %v3413
      %v3432 = vsub.f32 %v3304, %v3415
      %v3433 = vsub.f32 %v3305, %v3417
      %3434 = vst.msk [vmem:[%s472] sm:$0xff] %vm3241, %v3418
      %3435 = vst.msk [vmem:[%s472 + $0x8] sm:$0xff] %vm3241, %v3419
      %3436 = vst.msk [vmem:[%s472 + $0x10] sm:$0xff] %vm3241, %v3420
      %3437 = vst.msk [vmem:[%s472 + $0x18] sm:$0xff] %vm3241, %v3421
      %3438 = vst.msk [vmem:[%s472 + $0x20] sm:$0xff] %vm3241, %v3422
      %3439 = vst.msk [vmem:[%s472 + $0x28] sm:$0xff] %vm3241, %v3423
      %3440 = vst.msk [vmem:[%s472 + $0x30] sm:$0xff] %vm3241, %v3424
      %3441 = vst.msk [vmem:[%s472 + $0x38] sm:$0xff] %vm3241, %v3425
      %3442 = vst.msk [vmem:[%s472 + $0x40] sm:$0xff] %vm3241, %v3426
      %3443 = vst.msk [vmem:[%s472 + $0x48] sm:$0xff] %vm3241, %v3427
      %3444 = vst.msk [vmem:[%s472 + $0x50] sm:$0xff] %vm3241, %v3428
      %3445 = vst.msk [vmem:[%s472 + $0x58] sm:$0xff] %vm3241, %v3429
      %3446 = vst.msk [vmem:[%s472 + $0x60] sm:$0xff] %vm3241, %v3430
      %3447 = vst.msk [vmem:[%s472 + $0x68] sm:$0xff] %vm3241, %v3431
      %3448 = vst.msk [vmem:[%s472 + $0x70] sm:$0xff] %vm3241, %v3432
      %3449 = vst.msk [vmem:[%s472 + $0x78] sm:$0xff] %vm3241, %v3433
      %s3450 = smul.u32 8, %s24
      %p3451 = scmp.lt.s32.totalorder %s23, 1
      %s3452 = scalar_select %p3451, %s23, 1
      %p3453 = scmp.lt.s32.totalorder %s3450, 15
      %s3454 = scalar_select %p3453, %s3450, 15
      %s3455 = smul.addr %s3454, 2
      %s3456 = smul.addr %s3452, 32
      %s3457 = sadd.s32 %s3455, %s3456
      %s3458 = smul.addr %s3457, 8
      %s3459 = scalar_lea.vmem %s8, %s3458
      // Predicated region
      $region69: #{c1_forward.1} parent=51 // pred_check
        %p3460 = pneg %p256
      $region70: #{c1_forward.1} parent=51 // pred_check_branch
        %3462 = sbr.rel (%p3460) target = $region72
      $region71: #{c1_forward.1} parent=51 // pred_region
        %s3463 = smul.u32 8, %s24
      $region72: #{c1_forward.1} parent=51 // pred_fallthru
        _
    $region52: #{c1_forward.1} parent=5 // pred_fallthru
      _
    %p3464 = scmp.le.s32.totalorder 2, %s14
    // Predicated region
    $region73: #{c1_forward.1} parent=5 // pred_check
      %p3465 = pneg %p3464
    $region74: #{c1_forward.1} parent=5 // pred_check_branch
      %3467 = sbr.rel (%p3465) target = $region76
    $region75: #{c1_forward.1} parent=5 // pred_region
      %s3468 = ssub.s32 %s14, 2
      // Predicated region
      $region77: #{c1_forward.1} parent=75 // pred_check
        %p3469 = pneg %p262
      $region78: #{c1_forward.1} parent=75 // pred_check_branch
        %3471 = sbr.rel (%p3469) target = $region80
      $region79: #{c1_forward.1} parent=75 // pred_region
        %s3472 = smul.u32 8, %s26
        %p3473 = scmp.lt.s32.totalorder %s25, 1
        %s3474 = scalar_select %p3473, %s25, 1
        %p3475 = scmp.lt.s32.totalorder %s3472, 15
        %s3476 = scalar_select %p3475, %s3472, 15
        %s3477 = smul.addr %s3476, 2
        %s3478 = smul.addr %s3474, 32
        %s3479 = sadd.s32 %s3477, %s3478
        %s3480 = smul.addr %s3479, 8
        %s3481 = scalar_lea.vmem %s8, %s3480
      $region80: #{c1_forward.1} parent=75 // pred_fallthru
        _
    $region76: #{c1_forward.1} parent=5 // pred_fallthru
      _
  $region6: #{c1_forward.1} parent=0 // loop_footer
    %s18 = sadd.s32 1, %s14
  $region7: #{c1_forward.1} parent=0 // loop_footer_branch
    %13 = sbr.rel target = $region3
  $region8: #{c1_forward.1} parent=0 // loop_exit
    _

</llo_original>
